<compile_context>
chip_gen: v7x
topology: tpu7x:2x2x1
jax: 0.10.0
libtpu: 0.0.40
codegen_flags: <defaults>
</compile_context>

<pallas_src>
import jax
import jax.numpy as jnp
import numpy as np
from jax import lax
from jax.experimental import pallas as pl
from jax.experimental.pallas import tpu as pltpu


# -----------------------------------------------------------------------------
# Fused kernel: 1x1 projections + split-weight 3x3 conv + gated hidden update
# -----------------------------------------------------------------------------
def _hidden_update_kernel(g16_ref, g8_ref, g4_ref, h_ref,
                          w16_ref, w8_ref, w4_ref, bmid_ref,
                          w3g_ref, w3h_ref, b3_ref,
                          o_ref,
                          gmid_ref, gpad_ref, hpad_ref, acc_ref):
    _, H, W, hd = h_ref.shape
    mid = w16_ref.shape[1]
    HW = H * W

    # --- Stage 1: fused 1x1 projections, f32 accumulation in a VMEM scratch ----
    x16 = g16_ref[0].reshape(HW, g16_ref.shape[-1])
    x8 = g8_ref[0].reshape(HW, g8_ref.shape[-1])
    x4 = g4_ref[0].reshape(HW, g4_ref.shape[-1])
    gmid_ref[...] = jnp.dot(x16, w16_ref[...], preferred_element_type=jnp.float32)
    gmid_ref[...] += jnp.dot(x8, w8_ref[...], preferred_element_type=jnp.float32)
    gmid_ref[...] += jnp.dot(x4, w4_ref[...], preferred_element_type=jnp.float32)

    # --- Stage 2: build zero-padded halo tiles in VMEM (g_mid never hits HBM) --
    gpad_ref[...] = jnp.zeros_like(gpad_ref)
    hpad_ref[...] = jnp.zeros_like(hpad_ref)
    g_mid = (gmid_ref[...] + bmid_ref[...]).reshape(H, W, mid)
    gpad_ref[1:H + 1, 1:W + 1, :] = g_mid.astype(gpad_ref.dtype)
    hpad_ref[1:H + 1, 1:W + 1, :] = h_ref[0].astype(hpad_ref.dtype)

    # --- Stage 3: 3x3 conv (padding=1) = 9 shifted matmuls; conv(cat(g,h), w3)
    #     is split as conv(g, w3g) + conv(h, w3h); f32 VMEM scratch accumulator --
    acc_ref[...] = jnp.zeros_like(acc_ref)
    for dy in range(3):                               # static unrolled taps
        for dx in range(3):
            gwin = gpad_ref[dy:dy + H, dx:dx + W, :].reshape(HW, mid)
            hwin = hpad_ref[dy:dy + H, dx:dx + W, :].reshape(HW, hd)
            acc_ref[...] += (
                jnp.dot(gwin, w3g_ref[dy, dx], preferred_element_type=jnp.float32)
                + jnp.dot(hwin, w3h_ref[dy, dx], preferred_element_type=jnp.float32))

    # --- Stage 4: gates + GRU-style update (all f32); lane-dense CHW store -----
    vals = acc_ref[...] + b3_ref[...]
    # sigmoid(x) = 0.5*(tanh(x/2)+1): numerically stable, runs on the EUP.
    forget_gate = 0.5 * (jnp.tanh(0.5 * vals[:, :hd]) + 1.0)
    update_gate = 0.5 * (jnp.tanh(0.5 * vals[:, hd:2 * hd]) + 1.0)
    new_value = jnp.tanh(vals[:, 2 * hd:])
    h_cur = h_ref[0].astype(jnp.float32).reshape(HW, hd)
    new_h = forget_gate * h_cur * (1.0 - update_gate) + update_gate * new_value
    # (HW, hd) -> (hd, HW): output lane axis is H*W (>=128 at real sizes) and the
    # wrapper's final [B, N, hd, H, W] view is a pure reshape (no HBM transpose).
    o_ref[0] = new_h.T.astype(o_ref.dtype)


# -----------------------------------------------------------------------------
# Wrapper: layout conversion, area downsampling, weight prep, pallas_call
# -----------------------------------------------------------------------------
def hidden_updater_forward(params, g16, g8, g4, h, *, compute_dtype=jnp.bfloat16):
    B, N, hd, H, W = h.shape
    BN = B * N
    C16, C8, C4 = g16.shape[2], g8.shape[2], g4.shape[2]
    mid = params["w16"].shape[1]

    def to_nhwc(t):                      # (BN, C, H, W) -> (BN, H, W, C)
        return jnp.transpose(t, (0, 2, 3, 1))

    def pool_nchw(t, f):                 # exact area pooling (== F.interpolate 'area')
        bn, c, hh, ww = t.shape
        return t.reshape(bn, c, hh // f, f, ww // f, f).mean(axis=(3, 5))

    # TODO(synk): the 2x/4x area pooling + NCHW->NHWC layout conversion still run as
    # XLA glue; they could be folded into the kernel by loading 2x/4x spatial tiles
    # and mean-reducing in VMEM before the 1x1 dot.
    g16n = to_nhwc(g16.reshape(BN, C16, H, W)).astype(compute_dtype)
    g8n = to_nhwc(pool_nchw(g8.reshape(BN, C8, 2 * H, 2 * W), 2)).astype(compute_dtype)
    g4n = to_nhwc(pool_nchw(g4.reshape(BN, C4, 4 * H, 4 * W), 4)).astype(compute_dtype)
    hn = to_nhwc(h.reshape(BN, hd, H, W))                 # stays f32 (exact gating)

    w16 = params["w16"].astype(compute_dtype)
    w8 = params["w8"].astype(compute_dtype)
    w4 = params["w4"].astype(compute_dtype)
    bmid = (params["b16"] + params["b8"] + params["b4"]).reshape(1, mid).astype(jnp.float32)
    w3g = params["w3"][:, :, :mid, :].astype(compute_dtype)   # split Cin: g part
    w3h = params["w3"][:, :, mid:, :].astype(compute_dtype)   # split Cin: h part
    b3 = params["b3"].reshape(1, 3 * hd).astype(jnp.float32)

    out = pl.pallas_call(
        _hidden_update_kernel,
        out_shape=jax.ShapeDtypeStruct((BN, hd, H * W), jnp.float32),
        grid=(BN,),
        in_specs=[
            pl.BlockSpec((1, H, W, C16), lambda b: (b, 0, 0, 0)),
            pl.BlockSpec((1, H, W, C8), lambda b: (b, 0, 0, 0)),
            pl.BlockSpec((1, H, W, C4), lambda b: (b, 0, 0, 0)),
            pl.BlockSpec((1, H, W, hd), lambda b: (b, 0, 0, 0)),
            pl.BlockSpec((C16, mid), lambda b: (0, 0)),
            pl.BlockSpec((C8, mid), lambda b: (0, 0)),
            pl.BlockSpec((C4, mid), lambda b: (0, 0)),
            pl.BlockSpec((1, mid), lambda b: (0, 0)),
            pl.BlockSpec((3, 3, mid, 3 * hd), lambda b: (0, 0, 0, 0)),
            pl.BlockSpec((3, 3, hd, 3 * hd), lambda b: (0, 0, 0, 0)),
            pl.BlockSpec((1, 3 * hd), lambda b: (0, 0)),
        ],
        out_specs=pl.BlockSpec((1, hd, H * W), lambda b: (b, 0, 0)),
        scratch_shapes=[
            pltpu.VMEM((H * W, mid), jnp.float32),            # g_mid f32 accumulator
            pltpu.VMEM((H + 2, W + 2, mid), compute_dtype),   # zero-padded g_mid
            pltpu.VMEM((H + 2, W + 2, hd), compute_dtype),    # zero-padded h
            pltpu.VMEM((H * W, 3 * hd), jnp.float32),         # 3x3 conv accumulator
        ],
        compiler_params=pltpu.CompilerParams(
            dimension_semantics=("parallel",),                # megacore over B*N
            vmem_limit_bytes=48 * 1024 * 1024),
    )(g16n, g8n, g4n, hn, w16, w8, w4, bmid, w3g, w3h, b3)

    # (BN, hd, H*W) -> [B, N, hd, H, W] is a pure reshape (no transpose pass).
    return out.reshape(B, N, hd, H, W)


# -----------------------------------------------------------------------------
# Pure-JAX reference (independent implementation) for verification
# -----------------------------------------------------------------------------
def _to_nhwc5(t, B, N):
    s = t.shape
    return t.reshape((B * N,) + s[2:]).transpose(0, 2, 3, 1)


def _downsample_area_nhwc(x, f):
    BN, H, W, C = x.shape
    return x.reshape(BN, H // f, f, W // f, f, C).mean(axis=(2, 4))


def reference_forward(params, g16, g8, g4, h):
    B, N = h.shape[:2]
    hd = h.shape[2]
    H, W = h.shape[3], h.shape[4]

    g16n = _to_nhwc5(g16, B, N)
    g8n = _downsample_area_nhwc(_to_nhwc5(g8, B, N), 2)
    g4n = _downsample_area_nhwc(_to_nhwc5(g4, B, N), 4)
    hn = _to_nhwc5(h, B, N)

    g_mid = (jnp.einsum("bhwc,cm->bhwm", g16n, params["w16"]) + params["b16"]
             + jnp.einsum("bhwc,cm->bhwm", g8n, params["w8"]) + params["b8"]
             + jnp.einsum("bhwc,cm->bhwm", g4n, params["w4"]) + params["b4"])
    x = jnp.concatenate([g_mid, hn], axis=-1)
    vals = lax.conv_general_dilated(
        x, params["w3"], window_strides=(1, 1), padding="SAME",
        dimension_numbers=("NHWC", "HWIO", "NHWC")) + params["b3"]

    forget_gate = jax.nn.sigmoid(vals[..., :hd])
    update_gate = jax.nn.sigmoid(vals[..., hd:2 * hd])
    new_value = jnp.tanh(vals[..., 2 * hd:])
    new_h = forget_gate * hn * (1.0 - update_gate) + update_gate * new_value
    return new_h.transpose(0, 3, 1, 2).reshape(B, N, hd, H, W)


# -----------------------------------------------------------------------------
# Deterministic parameter init (shapes follow the module's __init__)
# -----------------------------------------------------------------------------
def init_params(key, g_dims, mid_dim, hidden_dim):
    k = jax.random.split(key, 8)
    c_in3 = mid_dim + hidden_dim
    c_out3 = hidden_dim * 3

    def kaiming_like(key, cin, shape):
        return jax.random.normal(key, shape, jnp.float32) * (1.0 / np.sqrt(cin))

    # 1x1 conv weights stored as [C_in, C_out] (== PyTorch [C_out, C_in, 1, 1])
    params = {
        "w16": kaiming_like(k[0], g_dims[0], (g_dims[0], mid_dim)),
        "b16": jax.random.uniform(k[1], (mid_dim,), jnp.float32, -0.1, 0.1),
        "w8": kaiming_like(k[2], g_dims[1], (g_dims[1], mid_dim)),
        "b8": jax.random.uniform(k[3], (mid_dim,), jnp.float32, -0.1, 0.1),
        "w4": kaiming_like(k[4], g_dims[2], (g_dims[2], mid_dim)),
        "b4": jax.random.uniform(k[5], (mid_dim,), jnp.float32, -0.1, 0.1),
    }
    # transform: xavier_normal_, stored HWIO [3, 3, C_in, C_out]
    fan_in, fan_out = c_in3 * 9, c_out3 * 9
    std = float(np.sqrt(2.0 / (fan_in + fan_out)))
    params["w3"] = jax.random.normal(k[6], (3, 3, c_in3, c_out3), jnp.float32) * std
    params["b3"] = jax.random.uniform(k[7], (c_out3,), jnp.float32, -0.1, 0.1)
    return params


# -----------------------------------------------------------------------------
if __name__ == "__main__":
    # small shapes: B=2, num_objects=2, g_dims=(8,6,4), mid_dim=16, hidden_dim=8
    # spatial: 1/16 level = 8x8, 1/8 level = 16x16, 1/4 level = 32x32
    B, N = 2, 2
    g_dims = (8, 6, 4)
    mid_dim, hidden_dim = 16, 8
    H = W = 8

    key = jax.random.PRNGKey(0)
    kp, k0, k1, k2, kh = jax.random.split(key, 5)

    params = init_params(kp, g_dims, mid_dim, hidden_dim)
    g16 = jax.random.normal(k0, (B, N, g_dims[0], H, W), jnp.float32)
    g8 = jax.random.normal(k1, (B, N, g_dims[1], 2 * H, 2 * W), jnp.float32)
    g4 = jax.random.normal(k2, (B, N, g_dims[2], 4 * H, 4 * W), jnp.float32)
    h = jax.random.normal(kh, (B, N, hidden_dim, H, W), jnp.float32)

    fwd_bf16 = jax.jit(lambda p, a, b, c, d: hidden_updater_forward(
        p, a, b, c, d, compute_dtype=jnp.bfloat16))
    fwd_f32 = jax.jit(lambda p, a, b, c, d: hidden_updater_forward(
        p, a, b, c, d, compute_dtype=jnp.float32))

    out_bf16 = jax.block_until_ready(fwd_bf16(params, g16, g8, g4, h))
    out_f32 = jax.block_until_ready(fwd_f32(params, g16, g8, g4, h))
    ref = jax.block_until_ready(reference_forward(params, g16, g8, g4, h))

    # f32 path must match the reference tightly; bf16 path (the fast default)
    # within bf16 rounding of the matmul operands (accumulation/gating stay f32).
    np.testing.assert_allclose(np.asarray(out_f32), np.asarray(ref),
                               rtol=2e-4, atol=2e-4)
    np.testing.assert_allclose(np.asarray(out_bf16), np.asarray(ref),
                               rtol=5e-2, atol=5e-2)

    print("KERNEL_OK")
</pallas_src>

<mosaic_0001>
module attributes {stable_mosaic.version = 11 : i64} {
  func.func @_hidden_update_kernel(%arg0: i32, %arg1: memref<1x8x8x8xbf16, #tpu.memory_space<vmem>>, %arg2: memref<1x8x8x6xbf16, #tpu.memory_space<vmem>>, %arg3: memref<1x8x8x4xbf16, #tpu.memory_space<vmem>>, %arg4: memref<1x8x8x8xf32, #tpu.memory_space<vmem>>, %arg5: memref<8x16xbf16, #tpu.memory_space<vmem>>, %arg6: memref<6x16xbf16, #tpu.memory_space<vmem>>, %arg7: memref<4x16xbf16, #tpu.memory_space<vmem>>, %arg8: memref<1x16xf32, #tpu.memory_space<vmem>>, %arg9: memref<3x3x16x24xbf16, #tpu.memory_space<vmem>>, %arg10: memref<3x3x8x24xbf16, #tpu.memory_space<vmem>>, %arg11: memref<1x24xf32, #tpu.memory_space<vmem>>, %arg12: memref<1x8x64xf32, #tpu.memory_space<vmem>>, %arg13: memref<64x16xf32, #tpu.memory_space<vmem>>, %arg14: memref<10x10x16xbf16, #tpu.memory_space<vmem>>, %arg15: memref<10x10x8xbf16, #tpu.memory_space<vmem>>, %arg16: memref<64x24xf32, #tpu.memory_space<vmem>>) attributes {dimension_semantics = [#tpu.dimension_semantics<parallel>], iteration_bounds = array<i64: 4>, scalar_prefetch = 0 : i64, scratch_operands = 4 : i64, tpu.core_type = #tpu.core_type<tc>, window_params = [{transform_indices = @transform_0, window_bounds = array<i64: 1, 8, 8, 8>}, {transform_indices = @transform_1, window_bounds = array<i64: 1, 8, 8, 6>}, {transform_indices = @transform_2, window_bounds = array<i64: 1, 8, 8, 4>}, {transform_indices = @transform_3, window_bounds = array<i64: 1, 8, 8, 8>}, {pipeline_mode = #tpu.pipeline_mode<synchronous>, transform_indices = @transform_4, window_bounds = array<i64: 8, 16>}, {pipeline_mode = #tpu.pipeline_mode<synchronous>, transform_indices = @transform_5, window_bounds = array<i64: 6, 16>}, {pipeline_mode = #tpu.pipeline_mode<synchronous>, transform_indices = @transform_6, window_bounds = array<i64: 4, 16>}, {pipeline_mode = #tpu.pipeline_mode<synchronous>, transform_indices = @transform_7, window_bounds = array<i64: 1, 16>}, {pipeline_mode = #tpu.pipeline_mode<synchronous>, transform_indices = @transform_8, window_bounds = array<i64: 3, 3, 16, 24>}, {pipeline_mode = #tpu.pipeline_mode<synchronous>, transform_indices = @transform_9, window_bounds = array<i64: 3, 3, 8, 24>}, {pipeline_mode = #tpu.pipeline_mode<synchronous>, transform_indices = @transform_10, window_bounds = array<i64: 1, 24>}, {transform_indices = @transform_11, window_bounds = array<i64: 1, 8, 64>}]} {
    %c0 = arith.constant 0 : index
    %c0_0 = arith.constant 0 : index
    %c0_1 = arith.constant 0 : index
    %c0_2 = arith.constant 0 : index
    %0 = vector.load %arg1[%c0, %c0_0, %c0_1, %c0_2] : memref<1x8x8x8xbf16, #tpu.memory_space<vmem>>, vector<1x8x8x8xbf16>
    %1 = vector.shape_cast %0 : vector<1x8x8x8xbf16> to vector<8x8x8xbf16>
    %2 = vector.shape_cast %1 : vector<8x8x8xbf16> to vector<64x8xbf16>
    %c0_3 = arith.constant 0 : index
    %c0_4 = arith.constant 0 : index
    %c0_5 = arith.constant 0 : index
    %c0_6 = arith.constant 0 : index
    %3 = vector.load %arg2[%c0_3, %c0_4, %c0_5, %c0_6] : memref<1x8x8x6xbf16, #tpu.memory_space<vmem>>, vector<1x8x8x6xbf16>
    %4 = vector.shape_cast %3 : vector<1x8x8x6xbf16> to vector<8x8x6xbf16>
    %5 = vector.shape_cast %4 : vector<8x8x6xbf16> to vector<64x6xbf16>
    %c0_7 = arith.constant 0 : index
    %c0_8 = arith.constant 0 : index
    %c0_9 = arith.constant 0 : index
    %c0_10 = arith.constant 0 : index
    %6 = vector.load %arg3[%c0_7, %c0_8, %c0_9, %c0_10] : memref<1x8x8x4xbf16, #tpu.memory_space<vmem>>, vector<1x8x8x4xbf16>
    %7 = vector.shape_cast %6 : vector<1x8x8x4xbf16> to vector<8x8x4xbf16>
    %8 = vector.shape_cast %7 : vector<8x8x4xbf16> to vector<64x4xbf16>
    %c0_11 = arith.constant 0 : index
    %c0_12 = arith.constant 0 : index
    %9 = vector.load %arg5[%c0_11, %c0_12] : memref<8x16xbf16, #tpu.memory_space<vmem>>, vector<8x16xbf16>
    %cst = arith.constant dense<0.000000e+00> : vector<64x16xf32>
    %10 = tpu.matmul %2, %9, %cst {dimension_numbers = #tpu.dot_dimension_numbers<[1], [0], [0], [1], [0, 0, 1, 1], [], []>} : vector<64x8xbf16>, vector<8x16xbf16>, vector<64x16xf32> -> vector<64x16xf32>
    %c0_13 = arith.constant 0 : index
    %c0_14 = arith.constant 0 : index
    %11 = vector.load %arg13[%c0_13, %c0_14] : memref<64x16xf32, #tpu.memory_space<vmem>>, vector<64x16xf32>
    tpu.vector_store %arg13[%c0_13, %c0_14], %10 {strides = array<i32>} : memref<64x16xf32, #tpu.memory_space<vmem>>, vector<64x16xf32>,
    %c0_15 = arith.constant 0 : index
    %c0_16 = arith.constant 0 : index
    %12 = vector.load %arg13[%c0_15, %c0_16] : memref<64x16xf32, #tpu.memory_space<vmem>>, vector<64x16xf32>
    %c0_17 = arith.constant 0 : index
    %c0_18 = arith.constant 0 : index
    %13 = vector.load %arg6[%c0_17, %c0_18] : memref<6x16xbf16, #tpu.memory_space<vmem>>, vector<6x16xbf16>
    %cst_19 = arith.constant dense<0.000000e+00> : vector<64x16xf32>
    %14 = tpu.matmul %5, %13, %cst_19 {dimension_numbers = #tpu.dot_dimension_numbers<[1], [0], [0], [1], [0, 0, 1, 1], [], []>} : vector<64x6xbf16>, vector<6x16xbf16>, vector<64x16xf32> -> vector<64x16xf32>
    %15 = arith.addf %12, %14 : vector<64x16xf32>
    %c0_20 = arith.constant 0 : index
    %c0_21 = arith.constant 0 : index
    %16 = vector.load %arg13[%c0_20, %c0_21] : memref<64x16xf32, #tpu.memory_space<vmem>>, vector<64x16xf32>
    tpu.vector_store %arg13[%c0_20, %c0_21], %15 {strides = array<i32>} : memref<64x16xf32, #tpu.memory_space<vmem>>, vector<64x16xf32>,
    %c0_22 = arith.constant 0 : index
    %c0_23 = arith.constant 0 : index
    %17 = vector.load %arg13[%c0_22, %c0_23] : memref<64x16xf32, #tpu.memory_space<vmem>>, vector<64x16xf32>
    %c0_24 = arith.constant 0 : index
    %c0_25 = arith.constant 0 : index
    %18 = vector.load %arg7[%c0_24, %c0_25] : memref<4x16xbf16, #tpu.memory_space<vmem>>, vector<4x16xbf16>
    %cst_26 = arith.constant dense<0.000000e+00> : vector<64x16xf32>
    %19 = tpu.matmul %8, %18, %cst_26 {dimension_numbers = #tpu.dot_dimension_numbers<[1], [0], [0], [1], [0, 0, 1, 1], [], []>} : vector<64x4xbf16>, vector<4x16xbf16>, vector<64x16xf32> -> vector<64x16xf32>
    %20 = arith.addf %17, %19 : vector<64x16xf32>
    %c0_27 = arith.constant 0 : index
    %c0_28 = arith.constant 0 : index
    %21 = vector.load %arg13[%c0_27, %c0_28] : memref<64x16xf32, #tpu.memory_space<vmem>>, vector<64x16xf32>
    tpu.vector_store %arg13[%c0_27, %c0_28], %20 {strides = array<i32>} : memref<64x16xf32, #tpu.memory_space<vmem>>, vector<64x16xf32>,
    %cst_29 = arith.constant 0.000000e+00 : bf16
    %22 = vector.broadcast %cst_29 : bf16 to vector<10x10x16xbf16>
    %c0_30 = arith.constant 0 : index
    %c0_31 = arith.constant 0 : index
    %c0_32 = arith.constant 0 : index
    %23 = vector.load %arg14[%c0_30, %c0_31, %c0_32] : memref<10x10x16xbf16, #tpu.memory_space<vmem>>, vector<10x10x16xbf16>
    tpu.vector_store %arg14[%c0_30, %c0_31, %c0_32], %22 {strides = array<i32>} : memref<10x10x16xbf16, #tpu.memory_space<vmem>>, vector<10x10x16xbf16>,
    %cst_33 = arith.constant 0.000000e+00 : bf16
    %24 = vector.broadcast %cst_33 : bf16 to vector<10x10x8xbf16>
    %c0_34 = arith.constant 0 : index
    %c0_35 = arith.constant 0 : index
    %c0_36 = arith.constant 0 : index
    %25 = vector.load %arg15[%c0_34, %c0_35, %c0_36] : memref<10x10x8xbf16, #tpu.memory_space<vmem>>, vector<10x10x8xbf16>
    tpu.vector_store %arg15[%c0_34, %c0_35, %c0_36], %24 {strides = array<i32>} : memref<10x10x8xbf16, #tpu.memory_space<vmem>>, vector<10x10x8xbf16>,
    %c0_37 = arith.constant 0 : index
    %c0_38 = arith.constant 0 : index
    %26 = vector.load %arg13[%c0_37, %c0_38] : memref<64x16xf32, #tpu.memory_space<vmem>>, vector<64x16xf32>
    %c0_39 = arith.constant 0 : index
    %c0_40 = arith.constant 0 : index
    %27 = vector.load %arg8[%c0_39, %c0_40] : memref<1x16xf32, #tpu.memory_space<vmem>>, vector<1x16xf32>
    %28 = vector.broadcast %27 : vector<1x16xf32> to vector<64x16xf32>
    %29 = arith.addf %26, %28 : vector<64x16xf32>
    %30 = vector.shape_cast %29 : vector<64x16xf32> to vector<8x8x16xf32>
    %31 = arith.truncf %30 : vector<8x8x16xf32> to vector<8x8x16xbf16>
    %c1 = arith.constant 1 : index
    %c1_41 = arith.constant 1 : index
    %c0_42 = arith.constant 0 : index
    %32 = vector.load %arg14[%c1, %c1_41, %c0_42] : memref<10x10x16xbf16, #tpu.memory_space<vmem>>, vector<8x8x16xbf16>
    tpu.vector_store %arg14[%c1, %c1_41, %c0_42], %31 {strides = array<i32>} : memref<10x10x16xbf16, #tpu.memory_space<vmem>>, vector<8x8x16xbf16>,
    %c0_43 = arith.constant 0 : index
    %c0_44 = arith.constant 0 : index
    %c0_45 = arith.constant 0 : index
    %c0_46 = arith.constant 0 : index
    %33 = vector.load %arg4[%c0_43, %c0_44, %c0_45, %c0_46] : memref<1x8x8x8xf32, #tpu.memory_space<vmem>>, vector<1x8x8x8xf32>
    %34 = vector.shape_cast %33 : vector<1x8x8x8xf32> to vector<8x8x8xf32>
    %35 = arith.truncf %34 : vector<8x8x8xf32> to vector<8x8x8xbf16>
    %c1_47 = arith.constant 1 : index
    %c1_48 = arith.constant 1 : index
    %c0_49 = arith.constant 0 : index
    %36 = vector.load %arg15[%c1_47, %c1_48, %c0_49] : memref<10x10x8xbf16, #tpu.memory_space<vmem>>, vector<8x8x8xbf16>
    tpu.vector_store %arg15[%c1_47, %c1_48, %c0_49], %35 {strides = array<i32>} : memref<10x10x8xbf16, #tpu.memory_space<vmem>>, vector<8x8x8xbf16>,
    %cst_50 = arith.constant 0.000000e+00 : f32
    %37 = vector.broadcast %cst_50 : f32 to vector<64x24xf32>
    %c0_51 = arith.constant 0 : index
    %c0_52 = arith.constant 0 : index
    %38 = vector.load %arg16[%c0_51, %c0_52] : memref<64x24xf32, #tpu.memory_space<vmem>>, vector<64x24xf32>
    tpu.vector_store %arg16[%c0_51, %c0_52], %37 {strides = array<i32>} : memref<64x24xf32, #tpu.memory_space<vmem>>, vector<64x24xf32>,
    %c0_53 = arith.constant 0 : index
    %c0_54 = arith.constant 0 : index
    %c0_55 = arith.constant 0 : index
    %39 = vector.load %arg14[%c0_53, %c0_54, %c0_55] : memref<10x10x16xbf16, #tpu.memory_space<vmem>>, vector<8x8x16xbf16>
    %40 = vector.shape_cast %39 : vector<8x8x16xbf16> to vector<64x16xbf16>
    %c0_56 = arith.constant 0 : index
    %c0_57 = arith.constant 0 : index
    %c0_58 = arith.constant 0 : index
    %41 = vector.load %arg15[%c0_56, %c0_57, %c0_58] : memref<10x10x8xbf16, #tpu.memory_space<vmem>>, vector<8x8x8xbf16>
    %42 = vector.shape_cast %41 : vector<8x8x8xbf16> to vector<64x8xbf16>
    %c0_59 = arith.constant 0 : index
    %c0_60 = arith.constant 0 : index
    %43 = vector.load %arg16[%c0_59, %c0_60] : memref<64x24xf32, #tpu.memory_space<vmem>>, vector<64x24xf32>
    %c0_61 = arith.constant 0 : index
    %c0_62 = arith.constant 0 : index
    %c0_63 = arith.constant 0 : index
    %c0_64 = arith.constant 0 : index
    %44 = vector.load %arg9[%c0_61, %c0_62, %c0_63, %c0_64] : memref<3x3x16x24xbf16, #tpu.memory_space<vmem>>, vector<1x1x16x24xbf16>
    %45 = vector.shape_cast %44 : vector<1x1x16x24xbf16> to vector<16x24xbf16>
    %cst_65 = arith.constant dense<0.000000e+00> : vector<64x24xf32>
    %46 = tpu.matmul %40, %45, %cst_65 {dimension_numbers = #tpu.dot_dimension_numbers<[1], [0], [0], [1], [0, 0, 1, 1], [], []>} : vector<64x16xbf16>, vector<16x24xbf16>, vector<64x24xf32> -> vector<64x24xf32>
    %c0_66 = arith.constant 0 : index
    %c0_67 = arith.constant 0 : index
    %c0_68 = arith.constant 0 : index
    %c0_69 = arith.constant 0 : index
    %47 = vector.load %arg10[%c0_66, %c0_67, %c0_68, %c0_69] : memref<3x3x8x24xbf16, #tpu.memory_space<vmem>>, vector<1x1x8x24xbf16>
    %48 = vector.shape_cast %47 : vector<1x1x8x24xbf16> to vector<8x24xbf16>
    %cst_70 = arith.constant dense<0.000000e+00> : vector<64x24xf32>
    %49 = tpu.matmul %42, %48, %cst_70 {dimension_numbers = #tpu.dot_dimension_numbers<[1], [0], [0], [1], [0, 0, 1, 1], [], []>} : vector<64x8xbf16>, vector<8x24xbf16>, vector<64x24xf32> -> vector<64x24xf32>
    %50 = arith.addf %46, %49 : vector<64x24xf32>
    %51 = arith.addf %43, %50 : vector<64x24xf32>
    %c0_71 = arith.constant 0 : index
    %c0_72 = arith.constant 0 : index
    %52 = vector.load %arg16[%c0_71, %c0_72] : memref<64x24xf32, #tpu.memory_space<vmem>>, vector<64x24xf32>
    tpu.vector_store %arg16[%c0_71, %c0_72], %51 {strides = array<i32>} : memref<64x24xf32, #tpu.memory_space<vmem>>, vector<64x24xf32>,
    %c0_73 = arith.constant 0 : index
    %c1_74 = arith.constant 1 : index
    %c0_75 = arith.constant 0 : index
    %53 = vector.load %arg14[%c0_73, %c1_74, %c0_75] : memref<10x10x16xbf16, #tpu.memory_space<vmem>>, vector<8x8x16xbf16>
    %54 = vector.shape_cast %53 : vector<8x8x16xbf16> to vector<64x16xbf16>
    %c0_76 = arith.constant 0 : index
    %c1_77 = arith.constant 1 : index
    %c0_78 = arith.constant 0 : index
    %55 = vector.load %arg15[%c0_76, %c1_77, %c0_78] : memref<10x10x8xbf16, #tpu.memory_space<vmem>>, vector<8x8x8xbf16>
    %56 = vector.shape_cast %55 : vector<8x8x8xbf16> to vector<64x8xbf16>
    %c0_79 = arith.constant 0 : index
    %c0_80 = arith.constant 0 : index
    %57 = vector.load %arg16[%c0_79, %c0_80] : memref<64x24xf32, #tpu.memory_space<vmem>>, vector<64x24xf32>
    %c0_81 = arith.constant 0 : index
    %c1_82 = arith.constant 1 : index
    %c0_83 = arith.constant 0 : index
    %c0_84 = arith.constant 0 : index
    %58 = vector.load %arg9[%c0_81, %c1_82, %c0_83, %c0_84] : memref<3x3x16x24xbf16, #tpu.memory_space<vmem>>, vector<1x1x16x24xbf16>
    %59 = vector.shape_cast %58 : vector<1x1x16x24xbf16> to vector<16x24xbf16>
    %cst_85 = arith.constant dense<0.000000e+00> : vector<64x24xf32>
    %60 = tpu.matmul %54, %59, %cst_85 {dimension_numbers = #tpu.dot_dimension_numbers<[1], [0], [0], [1], [0, 0, 1, 1], [], []>} : vector<64x16xbf16>, vector<16x24xbf16>, vector<64x24xf32> -> vector<64x24xf32>
    %c0_86 = arith.constant 0 : index
    %c1_87 = arith.constant 1 : index
    %c0_88 = arith.constant 0 : index
    %c0_89 = arith.constant 0 : index
    %61 = vector.load %arg10[%c0_86, %c1_87, %c0_88, %c0_89] : memref<3x3x8x24xbf16, #tpu.memory_space<vmem>>, vector<1x1x8x24xbf16>
    %62 = vector.shape_cast %61 : vector<1x1x8x24xbf16> to vector<8x24xbf16>
    %cst_90 = arith.constant dense<0.000000e+00> : vector<64x24xf32>
    %63 = tpu.matmul %56, %62, %cst_90 {dimension_numbers = #tpu.dot_dimension_numbers<[1], [0], [0], [1], [0, 0, 1, 1], [], []>} : vector<64x8xbf16>, vector<8x24xbf16>, vector<64x24xf32> -> vector<64x24xf32>
    %64 = arith.addf %60, %63 : vector<64x24xf32>
    %65 = arith.addf %57, %64 : vector<64x24xf32>
    %c0_91 = arith.constant 0 : index
    %c0_92 = arith.constant 0 : index
    %66 = vector.load %arg16[%c0_91, %c0_92] : memref<64x24xf32, #tpu.memory_space<vmem>>, vector<64x24xf32>
    tpu.vector_store %arg16[%c0_91, %c0_92], %65 {strides = array<i32>} : memref<64x24xf32, #tpu.memory_space<vmem>>, vector<64x24xf32>,
    %c0_93 = arith.constant 0 : index
    %c2 = arith.constant 2 : index
    %c0_94 = arith.constant 0 : index
    %67 = vector.load %arg14[%c0_93, %c2, %c0_94] : memref<10x10x16xbf16, #tpu.memory_space<vmem>>, vector<8x8x16xbf16>
    %68 = vector.shape_cast %67 : vector<8x8x16xbf16> to vector<64x16xbf16>
    %c0_95 = arith.constant 0 : index
    %c2_96 = arith.constant 2 : index
    %c0_97 = arith.constant 0 : index
    %69 = vector.load %arg15[%c0_95, %c2_96, %c0_97] : memref<10x10x8xbf16, #tpu.memory_space<vmem>>, vector<8x8x8xbf16>
    %70 = vector.shape_cast %69 : vector<8x8x8xbf16> to vector<64x8xbf16>
    %c0_98 = arith.constant 0 : index
    %c0_99 = arith.constant 0 : index
    %71 = vector.load %arg16[%c0_98, %c0_99] : memref<64x24xf32, #tpu.memory_space<vmem>>, vector<64x24xf32>
    %c0_100 = arith.constant 0 : index
    %c2_101 = arith.constant 2 : index
    %c0_102 = arith.constant 0 : index
    %c0_103 = arith.constant 0 : index
    %72 = vector.load %arg9[%c0_100, %c2_101, %c0_102, %c0_103] : memref<3x3x16x24xbf16, #tpu.memory_space<vmem>>, vector<1x1x16x24xbf16>
    %73 = vector.shape_cast %72 : vector<1x1x16x24xbf16> to vector<16x24xbf16>
    %cst_104 = arith.constant dense<0.000000e+00> : vector<64x24xf32>
    %74 = tpu.matmul %68, %73, %cst_104 {dimension_numbers = #tpu.dot_dimension_numbers<[1], [0], [0], [1], [0, 0, 1, 1], [], []>} : vector<64x16xbf16>, vector<16x24xbf16>, vector<64x24xf32> -> vector<64x24xf32>
    %c0_105 = arith.constant 0 : index
    %c2_106 = arith.constant 2 : index
    %c0_107 = arith.constant 0 : index
    %c0_108 = arith.constant 0 : index
    %75 = vector.load %arg10[%c0_105, %c2_106, %c0_107, %c0_108] : memref<3x3x8x24xbf16, #tpu.memory_space<vmem>>, vector<1x1x8x24xbf16>
    %76 = vector.shape_cast %75 : vector<1x1x8x24xbf16> to vector<8x24xbf16>
    %cst_109 = arith.constant dense<0.000000e+00> : vector<64x24xf32>
    %77 = tpu.matmul %70, %76, %cst_109 {dimension_numbers = #tpu.dot_dimension_numbers<[1], [0], [0], [1], [0, 0, 1, 1], [], []>} : vector<64x8xbf16>, vector<8x24xbf16>, vector<64x24xf32> -> vector<64x24xf32>
    %78 = arith.addf %74, %77 : vector<64x24xf32>
    %79 = arith.addf %71, %78 : vector<64x24xf32>
    %c0_110 = arith.constant 0 : index
    %c0_111 = arith.constant 0 : index
    %80 = vector.load %arg16[%c0_110, %c0_111] : memref<64x24xf32, #tpu.memory_space<vmem>>, vector<64x24xf32>
    tpu.vector_store %arg16[%c0_110, %c0_111], %79 {strides = array<i32>} : memref<64x24xf32, #tpu.memory_space<vmem>>, vector<64x24xf32>,
    %c1_112 = arith.constant 1 : index
    %c0_113 = arith.constant 0 : index
    %c0_114 = arith.constant 0 : index
    %81 = vector.load %arg14[%c1_112, %c0_113, %c0_114] : memref<10x10x16xbf16, #tpu.memory_space<vmem>>, vector<8x8x16xbf16>
    %82 = vector.shape_cast %81 : vector<8x8x16xbf16> to vector<64x16xbf16>
    %c1_115 = arith.constant 1 : index
    %c0_116 = arith.constant 0 : index
    %c0_117 = arith.constant 0 : index
    %83 = vector.load %arg15[%c1_115, %c0_116, %c0_117] : memref<10x10x8xbf16, #tpu.memory_space<vmem>>, vector<8x8x8xbf16>
    %84 = vector.shape_cast %83 : vector<8x8x8xbf16> to vector<64x8xbf16>
    %c0_118 = arith.constant 0 : index
    %c0_119 = arith.constant 0 : index
    %85 = vector.load %arg16[%c0_118, %c0_119] : memref<64x24xf32, #tpu.memory_space<vmem>>, vector<64x24xf32>
    %c1_120 = arith.constant 1 : index
    %c0_121 = arith.constant 0 : index
    %c0_122 = arith.constant 0 : index
    %c0_123 = arith.constant 0 : index
    %86 = vector.load %arg9[%c1_120, %c0_121, %c0_122, %c0_123] : memref<3x3x16x24xbf16, #tpu.memory_space<vmem>>, vector<1x1x16x24xbf16>
    %87 = vector.shape_cast %86 : vector<1x1x16x24xbf16> to vector<16x24xbf16>
    %cst_124 = arith.constant dense<0.000000e+00> : vector<64x24xf32>
    %88 = tpu.matmul %82, %87, %cst_124 {dimension_numbers = #tpu.dot_dimension_numbers<[1], [0], [0], [1], [0, 0, 1, 1], [], []>} : vector<64x16xbf16>, vector<16x24xbf16>, vector<64x24xf32> -> vector<64x24xf32>
    %c1_125 = arith.constant 1 : index
    %c0_126 = arith.constant 0 : index
    %c0_127 = arith.constant 0 : index
    %c0_128 = arith.constant 0 : index
    %89 = vector.load %arg10[%c1_125, %c0_126, %c0_127, %c0_128] : memref<3x3x8x24xbf16, #tpu.memory_space<vmem>>, vector<1x1x8x24xbf16>
    %90 = vector.shape_cast %89 : vector<1x1x8x24xbf16> to vector<8x24xbf16>
    %cst_129 = arith.constant dense<0.000000e+00> : vector<64x24xf32>
    %91 = tpu.matmul %84, %90, %cst_129 {dimension_numbers = #tpu.dot_dimension_numbers<[1], [0], [0], [1], [0, 0, 1, 1], [], []>} : vector<64x8xbf16>, vector<8x24xbf16>, vector<64x24xf32> -> vector<64x24xf32>
    %92 = arith.addf %88, %91 : vector<64x24xf32>
    %93 = arith.addf %85, %92 : vector<64x24xf32>
    %c0_130 = arith.constant 0 : index
    %c0_131 = arith.constant 0 : index
    %94 = vector.load %arg16[%c0_130, %c0_131] : memref<64x24xf32, #tpu.memory_space<vmem>>, vector<64x24xf32>
    tpu.vector_store %arg16[%c0_130, %c0_131], %93 {strides = array<i32>} : memref<64x24xf32, #tpu.memory_space<vmem>>, vector<64x24xf32>,
    %c1_132 = arith.constant 1 : index
    %c1_133 = arith.constant 1 : index
    %c0_134 = arith.constant 0 : index
    %95 = vector.load %arg14[%c1_132, %c1_133, %c0_134] : memref<10x10x16xbf16, #tpu.memory_space<vmem>>, vector<8x8x16xbf16>
    %96 = vector.shape_cast %95 : vector<8x8x16xbf16> to vector<64x16xbf16>
    %c1_135 = arith.constant 1 : index
    %c1_136 = arith.constant 1 : index
    %c0_137 = arith.constant 0 : index
    %97 = vector.load %arg15[%c1_135, %c1_136, %c0_137] : memref<10x10x8xbf16, #tpu.memory_space<vmem>>, vector<8x8x8xbf16>
    %98 = vector.shape_cast %97 : vector<8x8x8xbf16> to vector<64x8xbf16>
    %c0_138 = arith.constant 0 : index
    %c0_139 = arith.constant 0 : index
    %99 = vector.load %arg16[%c0_138, %c0_139] : memref<64x24xf32, #tpu.memory_space<vmem>>, vector<64x24xf32>
    %c1_140 = arith.constant 1 : index
    %c1_141 = arith.constant 1 : index
    %c0_142 = arith.constant 0 : index
    %c0_143 = arith.constant 0 : index
    %100 = vector.load %arg9[%c1_140, %c1_141, %c0_142, %c0_143] : memref<3x3x16x24xbf16, #tpu.memory_space<vmem>>, vector<1x1x16x24xbf16>
    %101 = vector.shape_cast %100 : vector<1x1x16x24xbf16> to vector<16x24xbf16>
    %cst_144 = arith.constant dense<0.000000e+00> : vector<64x24xf32>
    %102 = tpu.matmul %96, %101, %cst_144 {dimension_numbers = #tpu.dot_dimension_numbers<[1], [0], [0], [1], [0, 0, 1, 1], [], []>} : vector<64x16xbf16>, vector<16x24xbf16>, vector<64x24xf32> -> vector<64x24xf32>
    %c1_145 = arith.constant 1 : index
    %c1_146 = arith.constant 1 : index
    %c0_147 = arith.constant 0 : index
    %c0_148 = arith.constant 0 : index
    %103 = vector.load %arg10[%c1_145, %c1_146, %c0_147, %c0_148] : memref<3x3x8x24xbf16, #tpu.memory_space<vmem>>, vector<1x1x8x24xbf16>
    %104 = vector.shape_cast %103 : vector<1x1x8x24xbf16> to vector<8x24xbf16>
    %cst_149 = arith.constant dense<0.000000e+00> : vector<64x24xf32>
    %105 = tpu.matmul %98, %104, %cst_149 {dimension_numbers = #tpu.dot_dimension_numbers<[1], [0], [0], [1], [0, 0, 1, 1], [], []>} : vector<64x8xbf16>, vector<8x24xbf16>, vector<64x24xf32> -> vector<64x24xf32>
    %106 = arith.addf %102, %105 : vector<64x24xf32>
    %107 = arith.addf %99, %106 : vector<64x24xf32>
    %c0_150 = arith.constant 0 : index
    %c0_151 = arith.constant 0 : index
    %108 = vector.load %arg16[%c0_150, %c0_151] : memref<64x24xf32, #tpu.memory_space<vmem>>, vector<64x24xf32>
    tpu.vector_store %arg16[%c0_150, %c0_151], %107 {strides = array<i32>} : memref<64x24xf32, #tpu.memory_space<vmem>>, vector<64x24xf32>,
    %c1_152 = arith.constant 1 : index
    %c2_153 = arith.constant 2 : index
    %c0_154 = arith.constant 0 : index
    %109 = vector.load %arg14[%c1_152, %c2_153, %c0_154] : memref<10x10x16xbf16, #tpu.memory_space<vmem>>, vector<8x8x16xbf16>
    %110 = vector.shape_cast %109 : vector<8x8x16xbf16> to vector<64x16xbf16>
    %c1_155 = arith.constant 1 : index
    %c2_156 = arith.constant 2 : index
    %c0_157 = arith.constant 0 : index
    %111 = vector.load %arg15[%c1_155, %c2_156, %c0_157] : memref<10x10x8xbf16, #tpu.memory_space<vmem>>, vector<8x8x8xbf16>
    %112 = vector.shape_cast %111 : vector<8x8x8xbf16> to vector<64x8xbf16>
    %c0_158 = arith.constant 0 : index
    %c0_159 = arith.constant 0 : index
    %113 = vector.load %arg16[%c0_158, %c0_159] : memref<64x24xf32, #tpu.memory_space<vmem>>, vector<64x24xf32>
    %c1_160 = arith.constant 1 : index
    %c2_161 = arith.constant 2 : index
    %c0_162 = arith.constant 0 : index
    %c0_163 = arith.constant 0 : index
    %114 = vector.load %arg9[%c1_160, %c2_161, %c0_162, %c0_163] : memref<3x3x16x24xbf16, #tpu.memory_space<vmem>>, vector<1x1x16x24xbf16>
    %115 = vector.shape_cast %114 : vector<1x1x16x24xbf16> to vector<16x24xbf16>
    %cst_164 = arith.constant dense<0.000000e+00> : vector<64x24xf32>
    %116 = tpu.matmul %110, %115, %cst_164 {dimension_numbers = #tpu.dot_dimension_numbers<[1], [0], [0], [1], [0, 0, 1, 1], [], []>} : vector<64x16xbf16>, vector<16x24xbf16>, vector<64x24xf32> -> vector<64x24xf32>
    %c1_165 = arith.constant 1 : index
    %c2_166 = arith.constant 2 : index
    %c0_167 = arith.constant 0 : index
    %c0_168 = arith.constant 0 : index
    %117 = vector.load %arg10[%c1_165, %c2_166, %c0_167, %c0_168] : memref<3x3x8x24xbf16, #tpu.memory_space<vmem>>, vector<1x1x8x24xbf16>
    %118 = vector.shape_cast %117 : vector<1x1x8x24xbf16> to vector<8x24xbf16>
    %cst_169 = arith.constant dense<0.000000e+00> : vector<64x24xf32>
    %119 = tpu.matmul %112, %118, %cst_169 {dimension_numbers = #tpu.dot_dimension_numbers<[1], [0], [0], [1], [0, 0, 1, 1], [], []>} : vector<64x8xbf16>, vector<8x24xbf16>, vector<64x24xf32> -> vector<64x24xf32>
    %120 = arith.addf %116, %119 : vector<64x24xf32>
    %121 = arith.addf %113, %120 : vector<64x24xf32>
    %c0_170 = arith.constant 0 : index
    %c0_171 = arith.constant 0 : index
    %122 = vector.load %arg16[%c0_170, %c0_171] : memref<64x24xf32, #tpu.memory_space<vmem>>, vector<64x24xf32>
    tpu.vector_store %arg16[%c0_170, %c0_171], %121 {strides = array<i32>} : memref<64x24xf32, #tpu.memory_space<vmem>>, vector<64x24xf32>,
    %c2_172 = arith.constant 2 : index
    %c0_173 = arith.constant 0 : index
    %c0_174 = arith.constant 0 : index
    %123 = vector.load %arg14[%c2_172, %c0_173, %c0_174] : memref<10x10x16xbf16, #tpu.memory_space<vmem>>, vector<8x8x16xbf16>
    %124 = vector.shape_cast %123 : vector<8x8x16xbf16> to vector<64x16xbf16>
    %c2_175 = arith.constant 2 : index
    %c0_176 = arith.constant 0 : index
    %c0_177 = arith.constant 0 : index
    %125 = vector.load %arg15[%c2_175, %c0_176, %c0_177] : memref<10x10x8xbf16, #tpu.memory_space<vmem>>, vector<8x8x8xbf16>
    %126 = vector.shape_cast %125 : vector<8x8x8xbf16> to vector<64x8xbf16>
    %c0_178 = arith.constant 0 : index
    %c0_179 = arith.constant 0 : index
    %127 = vector.load %arg16[%c0_178, %c0_179] : memref<64x24xf32, #tpu.memory_space<vmem>>, vector<64x24xf32>
    %c2_180 = arith.constant 2 : index
    %c0_181 = arith.constant 0 : index
    %c0_182 = arith.constant 0 : index
    %c0_183 = arith.constant 0 : index
    %128 = vector.load %arg9[%c2_180, %c0_181, %c0_182, %c0_183] : memref<3x3x16x24xbf16, #tpu.memory_space<vmem>>, vector<1x1x16x24xbf16>
    %129 = vector.shape_cast %128 : vector<1x1x16x24xbf16> to vector<16x24xbf16>
    %cst_184 = arith.constant dense<0.000000e+00> : vector<64x24xf32>
    %130 = tpu.matmul %124, %129, %cst_184 {dimension_numbers = #tpu.dot_dimension_numbers<[1], [0], [0], [1], [0, 0, 1, 1], [], []>} : vector<64x16xbf16>, vector<16x24xbf16>, vector<64x24xf32> -> vector<64x24xf32>
    %c2_185 = arith.constant 2 : index
    %c0_186 = arith.constant 0 : index
    %c0_187 = arith.constant 0 : index
    %c0_188 = arith.constant 0 : index
    %131 = vector.load %arg10[%c2_185, %c0_186, %c0_187, %c0_188] : memref<3x3x8x24xbf16, #tpu.memory_space<vmem>>, vector<1x1x8x24xbf16>
    %132 = vector.shape_cast %131 : vector<1x1x8x24xbf16> to vector<8x24xbf16>
    %cst_189 = arith.constant dense<0.000000e+00> : vector<64x24xf32>
    %133 = tpu.matmul %126, %132, %cst_189 {dimension_numbers = #tpu.dot_dimension_numbers<[1], [0], [0], [1], [0, 0, 1, 1], [], []>} : vector<64x8xbf16>, vector<8x24xbf16>, vector<64x24xf32> -> vector<64x24xf32>
    %134 = arith.addf %130, %133 : vector<64x24xf32>
    %135 = arith.addf %127, %134 : vector<64x24xf32>
    %c0_190 = arith.constant 0 : index
    %c0_191 = arith.constant 0 : index
    %136 = vector.load %arg16[%c0_190, %c0_191] : memref<64x24xf32, #tpu.memory_space<vmem>>, vector<64x24xf32>
    tpu.vector_store %arg16[%c0_190, %c0_191], %135 {strides = array<i32>} : memref<64x24xf32, #tpu.memory_space<vmem>>, vector<64x24xf32>,
    %c2_192 = arith.constant 2 : index
    %c1_193 = arith.constant 1 : index
    %c0_194 = arith.constant 0 : index
    %137 = vector.load %arg14[%c2_192, %c1_193, %c0_194] : memref<10x10x16xbf16, #tpu.memory_space<vmem>>, vector<8x8x16xbf16>
    %138 = vector.shape_cast %137 : vector<8x8x16xbf16> to vector<64x16xbf16>
    %c2_195 = arith.constant 2 : index
    %c1_196 = arith.constant 1 : index
    %c0_197 = arith.constant 0 : index
    %139 = vector.load %arg15[%c2_195, %c1_196, %c0_197] : memref<10x10x8xbf16, #tpu.memory_space<vmem>>, vector<8x8x8xbf16>
    %140 = vector.shape_cast %139 : vector<8x8x8xbf16> to vector<64x8xbf16>
    %c0_198 = arith.constant 0 : index
    %c0_199 = arith.constant 0 : index
    %141 = vector.load %arg16[%c0_198, %c0_199] : memref<64x24xf32, #tpu.memory_space<vmem>>, vector<64x24xf32>
    %c2_200 = arith.constant 2 : index
    %c1_201 = arith.constant 1 : index
    %c0_202 = arith.constant 0 : index
    %c0_203 = arith.constant 0 : index
    %142 = vector.load %arg9[%c2_200, %c1_201, %c0_202, %c0_203] : memref<3x3x16x24xbf16, #tpu.memory_space<vmem>>, vector<1x1x16x24xbf16>
    %143 = vector.shape_cast %142 : vector<1x1x16x24xbf16> to vector<16x24xbf16>
    %cst_204 = arith.constant dense<0.000000e+00> : vector<64x24xf32>
    %144 = tpu.matmul %138, %143, %cst_204 {dimension_numbers = #tpu.dot_dimension_numbers<[1], [0], [0], [1], [0, 0, 1, 1], [], []>} : vector<64x16xbf16>, vector<16x24xbf16>, vector<64x24xf32> -> vector<64x24xf32>
    %c2_205 = arith.constant 2 : index
    %c1_206 = arith.constant 1 : index
    %c0_207 = arith.constant 0 : index
    %c0_208 = arith.constant 0 : index
    %145 = vector.load %arg10[%c2_205, %c1_206, %c0_207, %c0_208] : memref<3x3x8x24xbf16, #tpu.memory_space<vmem>>, vector<1x1x8x24xbf16>
    %146 = vector.shape_cast %145 : vector<1x1x8x24xbf16> to vector<8x24xbf16>
    %cst_209 = arith.constant dense<0.000000e+00> : vector<64x24xf32>
    %147 = tpu.matmul %140, %146, %cst_209 {dimension_numbers = #tpu.dot_dimension_numbers<[1], [0], [0], [1], [0, 0, 1, 1], [], []>} : vector<64x8xbf16>, vector<8x24xbf16>, vector<64x24xf32> -> vector<64x24xf32>
    %148 = arith.addf %144, %147 : vector<64x24xf32>
    %149 = arith.addf %141, %148 : vector<64x24xf32>
    %c0_210 = arith.constant 0 : index
    %c0_211 = arith.constant 0 : index
    %150 = vector.load %arg16[%c0_210, %c0_211] : memref<64x24xf32, #tpu.memory_space<vmem>>, vector<64x24xf32>
    tpu.vector_store %arg16[%c0_210, %c0_211], %149 {strides = array<i32>} : memref<64x24xf32, #tpu.memory_space<vmem>>, vector<64x24xf32>,
    %c2_212 = arith.constant 2 : index
    %c2_213 = arith.constant 2 : index
    %c0_214 = arith.constant 0 : index
    %151 = vector.load %arg14[%c2_212, %c2_213, %c0_214] : memref<10x10x16xbf16, #tpu.memory_space<vmem>>, vector<8x8x16xbf16>
    %152 = vector.shape_cast %151 : vector<8x8x16xbf16> to vector<64x16xbf16>
    %c2_215 = arith.constant 2 : index
    %c2_216 = arith.constant 2 : index
    %c0_217 = arith.constant 0 : index
    %153 = vector.load %arg15[%c2_215, %c2_216, %c0_217] : memref<10x10x8xbf16, #tpu.memory_space<vmem>>, vector<8x8x8xbf16>
    %154 = vector.shape_cast %153 : vector<8x8x8xbf16> to vector<64x8xbf16>
    %c0_218 = arith.constant 0 : index
    %c0_219 = arith.constant 0 : index
    %155 = vector.load %arg16[%c0_218, %c0_219] : memref<64x24xf32, #tpu.memory_space<vmem>>, vector<64x24xf32>
    %c2_220 = arith.constant 2 : index
    %c2_221 = arith.constant 2 : index
    %c0_222 = arith.constant 0 : index
    %c0_223 = arith.constant 0 : index
    %156 = vector.load %arg9[%c2_220, %c2_221, %c0_222, %c0_223] : memref<3x3x16x24xbf16, #tpu.memory_space<vmem>>, vector<1x1x16x24xbf16>
    %157 = vector.shape_cast %156 : vector<1x1x16x24xbf16> to vector<16x24xbf16>
    %cst_224 = arith.constant dense<0.000000e+00> : vector<64x24xf32>
    %158 = tpu.matmul %152, %157, %cst_224 {dimension_numbers = #tpu.dot_dimension_numbers<[1], [0], [0], [1], [0, 0, 1, 1], [], []>} : vector<64x16xbf16>, vector<16x24xbf16>, vector<64x24xf32> -> vector<64x24xf32>
    %c2_225 = arith.constant 2 : index
    %c2_226 = arith.constant 2 : index
    %c0_227 = arith.constant 0 : index
    %c0_228 = arith.constant 0 : index
    %159 = vector.load %arg10[%c2_225, %c2_226, %c0_227, %c0_228] : memref<3x3x8x24xbf16, #tpu.memory_space<vmem>>, vector<1x1x8x24xbf16>
    %160 = vector.shape_cast %159 : vector<1x1x8x24xbf16> to vector<8x24xbf16>
    %cst_229 = arith.constant dense<0.000000e+00> : vector<64x24xf32>
    %161 = tpu.matmul %154, %160, %cst_229 {dimension_numbers = #tpu.dot_dimension_numbers<[1], [0], [0], [1], [0, 0, 1, 1], [], []>} : vector<64x8xbf16>, vector<8x24xbf16>, vector<64x24xf32> -> vector<64x24xf32>
    %162 = arith.addf %158, %161 : vector<64x24xf32>
    %163 = arith.addf %155, %162 : vector<64x24xf32>
    %c0_230 = arith.constant 0 : index
    %c0_231 = arith.constant 0 : index
    %164 = vector.load %arg16[%c0_230, %c0_231] : memref<64x24xf32, #tpu.memory_space<vmem>>, vector<64x24xf32>
    tpu.vector_store %arg16[%c0_230, %c0_231], %163 {strides = array<i32>} : memref<64x24xf32, #tpu.memory_space<vmem>>, vector<64x24xf32>,
    %c0_232 = arith.constant 0 : index
    %c0_233 = arith.constant 0 : index
    %165 = vector.load %arg16[%c0_232, %c0_233] : memref<64x24xf32, #tpu.memory_space<vmem>>, vector<64x24xf32>
    %c0_234 = arith.constant 0 : index
    %c0_235 = arith.constant 0 : index
    %166 = vector.load %arg11[%c0_234, %c0_235] : memref<1x24xf32, #tpu.memory_space<vmem>>, vector<1x24xf32>
    %167 = vector.broadcast %166 : vector<1x24xf32> to vector<64x24xf32>
    %168 = arith.addf %165, %167 : vector<64x24xf32>
    %169 = vector.extract_strided_slice %168 {offsets = [0, 0], sizes = [64, 8], strides = [1, 1]} : vector<64x24xf32> to vector<64x8xf32>
    %cst_236 = arith.constant 5.000000e-01 : f32
    %170 = vector.broadcast %cst_236 : f32 to vector<64x8xf32>
    %171 = arith.mulf %170, %169 : vector<64x8xf32>
    %172 = math.tanh %171 : vector<64x8xf32>
    %cst_237 = arith.constant 1.000000e+00 : f32
    %173 = vector.broadcast %cst_237 : f32 to vector<64x8xf32>
    %174 = arith.addf %172, %173 : vector<64x8xf32>
    %cst_238 = arith.constant 5.000000e-01 : f32
    %175 = vector.broadcast %cst_238 : f32 to vector<64x8xf32>
    %176 = arith.mulf %175, %174 : vector<64x8xf32>
    %177 = vector.extract_strided_slice %168 {offsets = [0, 8], sizes = [64, 8], strides = [1, 1]} : vector<64x24xf32> to vector<64x8xf32>
    %cst_239 = arith.constant 5.000000e-01 : f32
    %178 = vector.broadcast %cst_239 : f32 to vector<64x8xf32>
    %179 = arith.mulf %178, %177 : vector<64x8xf32>
    %180 = math.tanh %179 : vector<64x8xf32>
    %cst_240 = arith.constant 1.000000e+00 : f32
    %181 = vector.broadcast %cst_240 : f32 to vector<64x8xf32>
    %182 = arith.addf %180, %181 : vector<64x8xf32>
    %cst_241 = arith.constant 5.000000e-01 : f32
    %183 = vector.broadcast %cst_241 : f32 to vector<64x8xf32>
    %184 = arith.mulf %183, %182 : vector<64x8xf32>
    %185 = vector.extract_strided_slice %168 {offsets = [0, 16], sizes = [64, 8], strides = [1, 1]} : vector<64x24xf32> to vector<64x8xf32>
    %186 = math.tanh %185 : vector<64x8xf32>
    %c0_242 = arith.constant 0 : index
    %c0_243 = arith.constant 0 : index
    %c0_244 = arith.constant 0 : index
    %c0_245 = arith.constant 0 : index
    %187 = vector.load %arg4[%c0_242, %c0_243, %c0_244, %c0_245] : memref<1x8x8x8xf32, #tpu.memory_space<vmem>>, vector<1x8x8x8xf32>
    %188 = vector.shape_cast %187 : vector<1x8x8x8xf32> to vector<8x8x8xf32>
    %189 = vector.shape_cast %188 : vector<8x8x8xf32> to vector<64x8xf32>
    %190 = arith.mulf %176, %189 : vector<64x8xf32>
    %cst_246 = arith.constant 1.000000e+00 : f32
    %191 = vector.broadcast %cst_246 : f32 to vector<64x8xf32>
    %192 = arith.subf %191, %184 : vector<64x8xf32>
    %193 = arith.mulf %190, %192 : vector<64x8xf32>
    %194 = arith.mulf %184, %186 : vector<64x8xf32>
    %195 = arith.addf %193, %194 : vector<64x8xf32>
    %196 = tpu.transpose %195, [1, 0] : vector<64x8xf32> -> vector<8x64xf32>
    %c0_247 = arith.constant 0 : index
    %c0_248 = arith.constant 0 : index
    %c0_249 = arith.constant 0 : index
    %197 = vector.load %arg12[%c0_247, %c0_248, %c0_249] : memref<1x8x64xf32, #tpu.memory_space<vmem>>, vector<1x8x64xf32>
    %198 = vector.shape_cast %197 : vector<1x8x64xf32> to vector<8x64xf32>
    %199 = vector.shape_cast %196 : vector<8x64xf32> to vector<1x8x64xf32>
    tpu.vector_store %arg12[%c0_247, %c0_248, %c0_249], %199 {strides = array<i32>} : memref<1x8x64xf32, #tpu.memory_space<vmem>>, vector<1x8x64xf32>,
    return
  }
  func.func @transform_0(%arg0: i32) -> (i32, i32, i32, i32) {
    %c0_i32 = arith.constant 0 : i32
    %c0_i32_0 = arith.constant 0 : i32
    %c0_i32_1 = arith.constant 0 : i32
    %c0_i32_2 = arith.constant 0 : i32
    return %arg0, %c0_i32, %c0_i32_0, %c0_i32_1 : i32, i32, i32, i32
  }
  func.func @transform_1(%arg0: i32) -> (i32, i32, i32, i32) {
    %c0_i32 = arith.constant 0 : i32
    %c0_i32_0 = arith.constant 0 : i32
    %c0_i32_1 = arith.constant 0 : i32
    %c0_i32_2 = arith.constant 0 : i32
    return %arg0, %c0_i32, %c0_i32_0, %c0_i32_1 : i32, i32, i32, i32
  }
  func.func @transform_2(%arg0: i32) -> (i32, i32, i32, i32) {
    %c0_i32 = arith.constant 0 : i32
    %c0_i32_0 = arith.constant 0 : i32
    %c0_i32_1 = arith.constant 0 : i32
    %c0_i32_2 = arith.constant 0 : i32
    return %arg0, %c0_i32, %c0_i32_0, %c0_i32_1 : i32, i32, i32, i32
  }
  func.func @transform_3(%arg0: i32) -> (i32, i32, i32, i32) {
    %c0_i32 = arith.constant 0 : i32
    %c0_i32_0 = arith.constant 0 : i32
    %c0_i32_1 = arith.constant 0 : i32
    %c0_i32_2 = arith.constant 0 : i32
    return %arg0, %c0_i32, %c0_i32_0, %c0_i32_1 : i32, i32, i32, i32
  }
  func.func @transform_4(%arg0: i32) -> (i32, i32) {
    %c0_i32 = arith.constant 0 : i32
    %c0_i32_0 = arith.constant 0 : i32
    %c0_i32_1 = arith.constant 0 : i32
    return %c0_i32, %c0_i32_0 : i32, i32
  }
  func.func @transform_5(%arg0: i32) -> (i32, i32) {
    %c0_i32 = arith.constant 0 : i32
    %c0_i32_0 = arith.constant 0 : i32
    %c0_i32_1 = arith.constant 0 : i32
    return %c0_i32, %c0_i32_0 : i32, i32
  }
  func.func @transform_6(%arg0: i32) -> (i32, i32) {
    %c0_i32 = arith.constant 0 : i32
    %c0_i32_0 = arith.constant 0 : i32
    %c0_i32_1 = arith.constant 0 : i32
    return %c0_i32, %c0_i32_0 : i32, i32
  }
  func.func @transform_7(%arg0: i32) -> (i32, i32) {
    %c0_i32 = arith.constant 0 : i32
    %c0_i32_0 = arith.constant 0 : i32
    %c0_i32_1 = arith.constant 0 : i32
    return %c0_i32, %c0_i32_0 : i32, i32
  }
  func.func @transform_8(%arg0: i32) -> (i32, i32, i32, i32) {
    %c0_i32 = arith.constant 0 : i32
    %c0_i32_0 = arith.constant 0 : i32
    %c0_i32_1 = arith.constant 0 : i32
    %c0_i32_2 = arith.constant 0 : i32
    %c0_i32_3 = arith.constant 0 : i32
    return %c0_i32, %c0_i32_0, %c0_i32_1, %c0_i32_2 : i32, i32, i32, i32
  }
  func.func @transform_9(%arg0: i32) -> (i32, i32, i32, i32) {
    %c0_i32 = arith.constant 0 : i32
    %c0_i32_0 = arith.constant 0 : i32
    %c0_i32_1 = arith.constant 0 : i32
    %c0_i32_2 = arith.constant 0 : i32
    %c0_i32_3 = arith.constant 0 : i32
    return %c0_i32, %c0_i32_0, %c0_i32_1, %c0_i32_2 : i32, i32, i32, i32
  }
  func.func @transform_10(%arg0: i32) -> (i32, i32) {
    %c0_i32 = arith.constant 0 : i32
    %c0_i32_0 = arith.constant 0 : i32
    %c0_i32_1 = arith.constant 0 : i32
    return %c0_i32, %c0_i32_0 : i32, i32
  }
  func.func @transform_11(%arg0: i32) -> (i32, i32, i32) {
    %c0_i32 = arith.constant 0 : i32
    %c0_i32_0 = arith.constant 0 : i32
    %c0_i32_1 = arith.constant 0 : i32
    return %arg0, %c0_i32, %c0_i32_0 : i32, i32, i32
  }
}

</mosaic_0001>

<llo_original>
// kernel: _lambda_.1
$region0: #{_lambda_.1}
  #allocation0 [shape = 'u32[]', space=smem, size = 0x4, offset = 0x4, fixed_abs, tag = 'smem constant byte address 0x4 - core index']
  #allocation1 [shape = 'u32[144,128]{1,0:T(1,128)}', space=vmem, size = 0x12000, scoped, tag = 'internal scratch']
  #allocation2 [shape = 'f32[64,16]{1,0:T(8,128)}', space=vmem, size = 0x8000, scoped, tag = 'scratch operand']
  #allocation3 [shape = 'bf16[10,10,16]{2,1,0:T(8,128)(2,1)}', space=vmem, size = 0xa000, scoped, tag = 'scratch operand']
  #allocation4 [shape = 'bf16[10,10,8]{2,1,0:T(8,128)(2,1)}', space=vmem, size = 0xa000, scoped, tag = 'scratch operand']
  #allocation5 [shape = 'f32[64,24]{1,0:T(8,128)}', space=vmem, size = 0x8000, scoped, tag = 'scratch operand']
  %s0 = inlined_call_operand.vmem [shape: bf16[4,8,8,8], index: 0, kind: input, shape index: {}]
  %s1 = inlined_call_operand.vmem [shape: bf16[4,8,8,6], index: 1, kind: input, shape index: {}]
  %s2 = inlined_call_operand.vmem [shape: bf16[4,8,8,4], index: 2, kind: input, shape index: {}]
  %s3 = inlined_call_operand.vmem [shape: f32[4,8,8,8], index: 3, kind: input, shape index: {}]
  %s4 = inlined_call_operand.vmem [shape: bf16[8,16], index: 4, kind: input, shape index: {}]
  %s5 = inlined_call_operand.vmem [shape: bf16[6,16], index: 5, kind: input, shape index: {}]
  %s6 = inlined_call_operand.vmem [shape: bf16[4,16], index: 6, kind: input, shape index: {}]
  %s7 = inlined_call_operand.vmem [shape: f32[1,16], index: 7, kind: input, shape index: {}]
  %s8 = inlined_call_operand.vmem [shape: bf16[3,3,16,24], index: 8, kind: input, shape index: {}]
  %s9 = inlined_call_operand.vmem [shape: bf16[3,3,8,24], index: 9, kind: input, shape index: {}]
  %s10 = inlined_call_operand.vmem [shape: f32[1,24], index: 10, kind: input, shape index: {}]
  %s11 = inlined_call_operand.vmem [shape: f32[4,8,64], index: 11, kind: output, shape index: {}]
  %s12 = sld [smem:[#allocation0]]
  $region77: #{_lambda_.1} parent=0
    _
  %s14 = ssub.s32 1, %s12
  %s15 = scalar_select 0, %s14, %s12
  loop: start=0, step=1, limit=6
  $region2: #{_lambda_.1} parent=0 // loop_pre_header
    _
  $region3: #{_lambda_.1} parent=0 // loop_header
    %s17 = sphi 0, %s21
    %p18 = scmp.ge.s32.totalorder %s17, 6
    %s27 = sphi 0, %s29
    %s30 = sphi 0, %s27
    %s31 = sphi 0, %s30
    %s47 = sphi 0, %s31
    %s53 = sphi 0, %s55
    %s56 = sphi 0, %s53
    %s57 = sphi 0, %s56
    %s73 = sphi 0, %s57
    %s79 = sphi 0, %s81
    %s82 = sphi 0, %s79
    %s83 = sphi 0, %s82
    %s99 = sphi 0, %s83
    %s105 = sphi 0, %s107
    %s108 = sphi 0, %s105
    %s109 = sphi 0, %s108
    %s125 = sphi 0, %s109
    %s129 = sphi 0, %s129
    %s131 = sphi 0, %s129
    %s132 = sphi 0, %s131
    %s146 = sphi 0, %s132
    %s150 = sphi 0, %s150
    %s152 = sphi 0, %s150
    %s153 = sphi 0, %s152
    %s167 = sphi 0, %s153
    %s171 = sphi 0, %s171
    %s173 = sphi 0, %s171
    %s174 = sphi 0, %s173
    %s188 = sphi 0, %s174
    %s192 = sphi 0, %s192
    %s194 = sphi 0, %s192
    %s195 = sphi 0, %s194
    %s209 = sphi 0, %s195
    %s213 = sphi 0, %s213
    %s215 = sphi 0, %s213
    %s216 = sphi 0, %s215
    %s230 = sphi 0, %s216
    %s234 = sphi 0, %s234
    %s236 = sphi 0, %s234
    %s237 = sphi 0, %s236
    %s251 = sphi 0, %s237
    %s255 = sphi 0, %s255
    %s257 = sphi 0, %s255
    %s258 = sphi 0, %s257
    %s272 = sphi 0, %s258
    %s278 = sphi 0, %s280
    %s281 = sphi 0, %s278
    %s282 = sphi 0, %s281
    %s298 = sphi 0, %s282
  $region4: #{_lambda_.1} parent=0 // loop_header_branch
    %20 = sbr.rel (%p18) target = $region8
  $region5: #{_lambda_.1} parent=0 // loop_body
    %s22 = ssub.s32 %s17, 1
    %s23 = ssub.s32 %s17, 2
    %s24 = sadd.s32 %s17, 1
    %s25 = ssub.s32 %s17, %s24
    %p26 = scmp.eq.s32.totalorder %s25, 0
    %s28 = sadd.s32 %s27, 1
    %s29 = scalar_select %p26, %s27, %s28
    %p32 = pneg %p26
    %p33 = scmp.eq.s32.totalorder %s17, 3
    %p34 = por %p32, %p33
    %p35 = scmp.ne.s32.totalorder %s27, %s30
    %p36 = scmp.eq.s32.totalorder %s17, 0
    %p37 = por %p35, %p36
    %p38 = scmp.ne.s32.totalorder %s27, %s30
    %p39 = scmp.eq.s32.totalorder %s22, 3
    %p40 = por %p38, %p39
    %p41 = scmp.ne.s32.totalorder %s30, %s31
    %p42 = scmp.eq.s32.totalorder %s22, 0
    %p43 = por %p41, %p42
    %p44 = scmp.ne.s32.totalorder %s30, %s31
    %p45 = scmp.eq.s32.totalorder %s23, 3
    %p46 = por %p44, %p45
    %p48 = scmp.ne.s32.totalorder %s31, %s47
    %p49 = scmp.eq.s32.totalorder %s23, 0
    %p50 = por %p48, %p49
    %s51 = ssub.s32 %s17, %s24
    %p52 = scmp.eq.s32.totalorder %s51, 0
    %s54 = sadd.s32 %s53, 1
    %s55 = scalar_select %p52, %s53, %s54
    %p58 = pneg %p52
    %p59 = scmp.eq.s32.totalorder %s17, 3
    %p60 = por %p58, %p59
    %p61 = scmp.ne.s32.totalorder %s53, %s56
    %p62 = scmp.eq.s32.totalorder %s17, 0
    %p63 = por %p61, %p62
    %p64 = scmp.ne.s32.totalorder %s53, %s56
    %p65 = scmp.eq.s32.totalorder %s22, 3
    %p66 = por %p64, %p65
    %p67 = scmp.ne.s32.totalorder %s56, %s57
    %p68 = scmp.eq.s32.totalorder %s22, 0
    %p69 = por %p67, %p68
    %p70 = scmp.ne.s32.totalorder %s56, %s57
    %p71 = scmp.eq.s32.totalorder %s23, 3
    %p72 = por %p70, %p71
    %p74 = scmp.ne.s32.totalorder %s57, %s73
    %p75 = scmp.eq.s32.totalorder %s23, 0
    %p76 = por %p74, %p75
    %s77 = ssub.s32 %s17, %s24
    %p78 = scmp.eq.s32.totalorder %s77, 0
    %s80 = sadd.s32 %s79, 1
    %s81 = scalar_select %p78, %s79, %s80
    %p84 = pneg %p78
    %p85 = scmp.eq.s32.totalorder %s17, 3
    %p86 = por %p84, %p85
    %p87 = scmp.ne.s32.totalorder %s79, %s82
    %p88 = scmp.eq.s32.totalorder %s17, 0
    %p89 = por %p87, %p88
    %p90 = scmp.ne.s32.totalorder %s79, %s82
    %p91 = scmp.eq.s32.totalorder %s22, 3
    %p92 = por %p90, %p91
    %p93 = scmp.ne.s32.totalorder %s82, %s83
    %p94 = scmp.eq.s32.totalorder %s22, 0
    %p95 = por %p93, %p94
    %p96 = scmp.ne.s32.totalorder %s82, %s83
    %p97 = scmp.eq.s32.totalorder %s23, 3
    %p98 = por %p96, %p97
    %p100 = scmp.ne.s32.totalorder %s83, %s99
    %p101 = scmp.eq.s32.totalorder %s23, 0
    %p102 = por %p100, %p101
    %s103 = ssub.s32 %s17, %s24
    %p104 = scmp.eq.s32.totalorder %s103, 0
    %s106 = sadd.s32 %s105, 1
    %s107 = scalar_select %p104, %s105, %s106
    %p110 = pneg %p104
    %p111 = scmp.eq.s32.totalorder %s17, 3
    %p112 = por %p110, %p111
    %p113 = scmp.ne.s32.totalorder %s105, %s108
    %p114 = scmp.eq.s32.totalorder %s17, 0
    %p115 = por %p113, %p114
    %p116 = scmp.ne.s32.totalorder %s105, %s108
    %p117 = scmp.eq.s32.totalorder %s22, 3
    %p118 = por %p116, %p117
    %p119 = scmp.ne.s32.totalorder %s108, %s109
    %p120 = scmp.eq.s32.totalorder %s22, 0
    %p121 = por %p119, %p120
    %p122 = scmp.ne.s32.totalorder %s108, %s109
    %p123 = scmp.eq.s32.totalorder %s23, 3
    %p124 = por %p122, %p123
    %p126 = scmp.ne.s32.totalorder %s109, %s125
    %p127 = scmp.eq.s32.totalorder %s23, 0
    %p128 = por %p126, %p127
    %s130 = sadd.s32 %s129, 1
    %p133 = scmp.eq.s32.totalorder %s17, 3
    %p134 = scmp.ne.s32.totalorder %s129, %s131
    %p135 = scmp.eq.s32.totalorder %s17, 0
    %p136 = por %p134, %p135
    %p137 = scmp.ne.s32.totalorder %s129, %s131
    %p138 = scmp.eq.s32.totalorder %s22, 3
    %p139 = por %p137, %p138
    %p140 = scmp.ne.s32.totalorder %s131, %s132
    %p141 = scmp.eq.s32.totalorder %s22, 0
    %p142 = por %p140, %p141
    %p143 = scmp.ne.s32.totalorder %s131, %s132
    %p144 = scmp.eq.s32.totalorder %s23, 3
    %p145 = por %p143, %p144
    %p147 = scmp.ne.s32.totalorder %s132, %s146
    %p148 = scmp.eq.s32.totalorder %s23, 0
    %p149 = por %p147, %p148
    %s151 = sadd.s32 %s150, 1
    %p154 = scmp.eq.s32.totalorder %s17, 3
    %p155 = scmp.ne.s32.totalorder %s150, %s152
    %p156 = scmp.eq.s32.totalorder %s17, 0
    %p157 = por %p155, %p156
    %p158 = scmp.ne.s32.totalorder %s150, %s152
    %p159 = scmp.eq.s32.totalorder %s22, 3
    %p160 = por %p158, %p159
    %p161 = scmp.ne.s32.totalorder %s152, %s153
    %p162 = scmp.eq.s32.totalorder %s22, 0
    %p163 = por %p161, %p162
    %p164 = scmp.ne.s32.totalorder %s152, %s153
    %p165 = scmp.eq.s32.totalorder %s23, 3
    %p166 = por %p164, %p165
    %p168 = scmp.ne.s32.totalorder %s153, %s167
    %p169 = scmp.eq.s32.totalorder %s23, 0
    %p170 = por %p168, %p169
    %s172 = sadd.s32 %s171, 1
    %p175 = scmp.eq.s32.totalorder %s17, 3
    %p176 = scmp.ne.s32.totalorder %s171, %s173
    %p177 = scmp.eq.s32.totalorder %s17, 0
    %p178 = por %p176, %p177
    %p179 = scmp.ne.s32.totalorder %s171, %s173
    %p180 = scmp.eq.s32.totalorder %s22, 3
    %p181 = por %p179, %p180
    %p182 = scmp.ne.s32.totalorder %s173, %s174
    %p183 = scmp.eq.s32.totalorder %s22, 0
    %p184 = por %p182, %p183
    %p185 = scmp.ne.s32.totalorder %s173, %s174
    %p186 = scmp.eq.s32.totalorder %s23, 3
    %p187 = por %p185, %p186
    %p189 = scmp.ne.s32.totalorder %s174, %s188
    %p190 = scmp.eq.s32.totalorder %s23, 0
    %p191 = por %p189, %p190
    %s193 = sadd.s32 %s192, 1
    %p196 = scmp.eq.s32.totalorder %s17, 3
    %p197 = scmp.ne.s32.totalorder %s192, %s194
    %p198 = scmp.eq.s32.totalorder %s17, 0
    %p199 = por %p197, %p198
    %p200 = scmp.ne.s32.totalorder %s192, %s194
    %p201 = scmp.eq.s32.totalorder %s22, 3
    %p202 = por %p200, %p201
    %p203 = scmp.ne.s32.totalorder %s194, %s195
    %p204 = scmp.eq.s32.totalorder %s22, 0
    %p205 = por %p203, %p204
    %p206 = scmp.ne.s32.totalorder %s194, %s195
    %p207 = scmp.eq.s32.totalorder %s23, 3
    %p208 = por %p206, %p207
    %p210 = scmp.ne.s32.totalorder %s195, %s209
    %p211 = scmp.eq.s32.totalorder %s23, 0
    %p212 = por %p210, %p211
    %s214 = sadd.s32 %s213, 1
    %p217 = scmp.eq.s32.totalorder %s17, 3
    %p218 = scmp.ne.s32.totalorder %s213, %s215
    %p219 = scmp.eq.s32.totalorder %s17, 0
    %p220 = por %p218, %p219
    %p221 = scmp.ne.s32.totalorder %s213, %s215
    %p222 = scmp.eq.s32.totalorder %s22, 3
    %p223 = por %p221, %p222
    %p224 = scmp.ne.s32.totalorder %s215, %s216
    %p225 = scmp.eq.s32.totalorder %s22, 0
    %p226 = por %p224, %p225
    %p227 = scmp.ne.s32.totalorder %s215, %s216
    %p228 = scmp.eq.s32.totalorder %s23, 3
    %p229 = por %p227, %p228
    %p231 = scmp.ne.s32.totalorder %s216, %s230
    %p232 = scmp.eq.s32.totalorder %s23, 0
    %p233 = por %p231, %p232
    %s235 = sadd.s32 %s234, 1
    %p238 = scmp.eq.s32.totalorder %s17, 3
    %p239 = scmp.ne.s32.totalorder %s234, %s236
    %p240 = scmp.eq.s32.totalorder %s17, 0
    %p241 = por %p239, %p240
    %p242 = scmp.ne.s32.totalorder %s234, %s236
    %p243 = scmp.eq.s32.totalorder %s22, 3
    %p244 = por %p242, %p243
    %p245 = scmp.ne.s32.totalorder %s236, %s237
    %p246 = scmp.eq.s32.totalorder %s22, 0
    %p247 = por %p245, %p246
    %p248 = scmp.ne.s32.totalorder %s236, %s237
    %p249 = scmp.eq.s32.totalorder %s23, 3
    %p250 = por %p248, %p249
    %p252 = scmp.ne.s32.totalorder %s237, %s251
    %p253 = scmp.eq.s32.totalorder %s23, 0
    %p254 = por %p252, %p253
    %s256 = sadd.s32 %s255, 1
    %p259 = scmp.eq.s32.totalorder %s17, 3
    %p260 = scmp.ne.s32.totalorder %s255, %s257
    %p261 = scmp.eq.s32.totalorder %s17, 0
    %p262 = por %p260, %p261
    %p263 = scmp.ne.s32.totalorder %s255, %s257
    %p264 = scmp.eq.s32.totalorder %s22, 3
    %p265 = por %p263, %p264
    %p266 = scmp.ne.s32.totalorder %s257, %s258
    %p267 = scmp.eq.s32.totalorder %s22, 0
    %p268 = por %p266, %p267
    %p269 = scmp.ne.s32.totalorder %s257, %s258
    %p270 = scmp.eq.s32.totalorder %s23, 3
    %p271 = por %p269, %p270
    %p273 = scmp.ne.s32.totalorder %s258, %s272
    %p274 = scmp.eq.s32.totalorder %s23, 0
    %p275 = por %p273, %p274
    %s276 = ssub.s32 %s17, %s24
    %p277 = scmp.eq.s32.totalorder %s276, 0
    %s279 = sadd.s32 %s278, 1
    %s280 = scalar_select %p277, %s278, %s279
    %p283 = pneg %p277
    %p284 = scmp.eq.s32.totalorder %s17, 3
    %p285 = por %p283, %p284
    %p286 = scmp.ne.s32.totalorder %s278, %s281
    %p287 = scmp.eq.s32.totalorder %s17, 0
    %p288 = por %p286, %p287
    %p289 = scmp.ne.s32.totalorder %s278, %s281
    %p290 = scmp.eq.s32.totalorder %s22, 3
    %p291 = por %p289, %p290
    %p292 = scmp.ne.s32.totalorder %s281, %s282
    %p293 = scmp.eq.s32.totalorder %s22, 0
    %p294 = por %p292, %p293
    %p295 = scmp.ne.s32.totalorder %s281, %s282
    %p296 = scmp.eq.s32.totalorder %s23, 3
    %p297 = por %p295, %p296
    %p299 = scmp.ne.s32.totalorder %s282, %s298
    %p300 = scmp.eq.s32.totalorder %s23, 0
    %p301 = por %p299, %p300
    %p302 = scmp.le.s32.totalorder 1, %s17
    %p303 = scmp.lt.s32.totalorder %s17, 5
    %p304 = pnand %p302, %p303
    %p305 = pneg %p304
    // Predicated region
    $region9: #{_lambda_.1} parent=5 // pred_check
      _
    $region10: #{_lambda_.1} parent=5 // pred_check_branch
      %307 = sbr.rel (%p304) target = $region12
    $region11: #{_lambda_.1} parent=5 // pred_region
      %s308 = ssub.s32 %s17, 1
      // Predicated region
      $region13: #{_lambda_.1} parent=11 // pred_check
        %p309 = pneg %p142
      $region14: #{_lambda_.1} parent=11 // pred_check_branch
        %311 = sbr.rel (%p309) target = $region16
      $region15: #{_lambda_.1} parent=11 // pred_region
        _
      $region16: #{_lambda_.1} parent=11 // pred_fallthru
        _
      // Predicated region
      $region17: #{_lambda_.1} parent=11 // pred_check
        %p312 = pneg %p163
      $region18: #{_lambda_.1} parent=11 // pred_check_branch
        %314 = sbr.rel (%p312) target = $region20
      $region19: #{_lambda_.1} parent=11 // pred_region
        _
      $region20: #{_lambda_.1} parent=11 // pred_fallthru
        _
      // Predicated region
      $region21: #{_lambda_.1} parent=11 // pred_check
        %p315 = pneg %p184
      $region22: #{_lambda_.1} parent=11 // pred_check_branch
        %317 = sbr.rel (%p315) target = $region24
      $region23: #{_lambda_.1} parent=11 // pred_region
        _
      $region24: #{_lambda_.1} parent=11 // pred_fallthru
        _
      // Predicated region
      $region25: #{_lambda_.1} parent=11 // pred_check
        %p318 = pneg %p205
      $region26: #{_lambda_.1} parent=11 // pred_check_branch
        %320 = sbr.rel (%p318) target = $region28
      $region27: #{_lambda_.1} parent=11 // pred_region
        _
      $region28: #{_lambda_.1} parent=11 // pred_fallthru
        _
      // Predicated region
      $region29: #{_lambda_.1} parent=11 // pred_check
        %p321 = pneg %p226
      $region30: #{_lambda_.1} parent=11 // pred_check_branch
        %323 = sbr.rel (%p321) target = $region32
      $region31: #{_lambda_.1} parent=11 // pred_region
        _
      $region32: #{_lambda_.1} parent=11 // pred_fallthru
        _
      // Predicated region
      $region33: #{_lambda_.1} parent=11 // pred_check
        %p324 = pneg %p247
      $region34: #{_lambda_.1} parent=11 // pred_check_branch
        %326 = sbr.rel (%p324) target = $region36
      $region35: #{_lambda_.1} parent=11 // pred_region
        _
      $region36: #{_lambda_.1} parent=11 // pred_fallthru
        _
      // Predicated region
      $region37: #{_lambda_.1} parent=11 // pred_check
        %p327 = pneg %p268
      $region38: #{_lambda_.1} parent=11 // pred_check_branch
        %329 = sbr.rel (%p327) target = $region40
      $region39: #{_lambda_.1} parent=11 // pred_region
        _
      $region40: #{_lambda_.1} parent=11 // pred_fallthru
        _
    $region12: #{_lambda_.1} parent=5 // pred_fallthru
      _
    %p330 = scmp.lt.s32.totalorder %s17, 4
    // Predicated region
    $region41: #{_lambda_.1} parent=5 // pred_check
      %p331 = pneg %p330
    $region42: #{_lambda_.1} parent=5 // pred_check_branch
      %333 = sbr.rel (%p331) target = $region44
    $region43: #{_lambda_.1} parent=5 // pred_region
      // Predicated region
      $region45: #{_lambda_.1} parent=43 // pred_check
        %p334 = pneg %p37
      $region46: #{_lambda_.1} parent=43 // pred_check_branch
        %336 = sbr.rel (%p334) target = $region48
      $region47: #{_lambda_.1} parent=43 // pred_region
        %p337 = scmp.lt.s32.totalorder %s17, 3
        %s338 = scalar_select %p337, %s17, 3
        %s339 = smul.addr %s338, 8
        %s340 = smul.addr %s339, 4
        %s341 = scalar_lea.vmem %s0, %s340
      $region48: #{_lambda_.1} parent=43 // pred_fallthru
        _
      // Predicated region
      $region49: #{_lambda_.1} parent=43 // pred_check
        %p342 = pneg %p63
      $region50: #{_lambda_.1} parent=43 // pred_check_branch
        %344 = sbr.rel (%p342) target = $region52
      $region51: #{_lambda_.1} parent=43 // pred_region
        %p345 = scmp.lt.s32.totalorder %s17, 3
        %s346 = scalar_select %p345, %s17, 3
        %s347 = smul.addr %s346, 8
        %s348 = smul.addr %s347, 4
        %s349 = scalar_lea.vmem %s1, %s348
      $region52: #{_lambda_.1} parent=43 // pred_fallthru
        _
      // Predicated region
      $region53: #{_lambda_.1} parent=43 // pred_check
        %p350 = pneg %p89
      $region54: #{_lambda_.1} parent=43 // pred_check_branch
        %352 = sbr.rel (%p350) target = $region56
      $region55: #{_lambda_.1} parent=43 // pred_region
        %p353 = scmp.lt.s32.totalorder %s17, 3
        %s354 = scalar_select %p353, %s17, 3
        %s355 = smul.addr %s354, 8
        %s356 = smul.addr %s355, 4
        %s357 = scalar_lea.vmem %s2, %s356
      $region56: #{_lambda_.1} parent=43 // pred_fallthru
        _
      // Predicated region
      $region57: #{_lambda_.1} parent=43 // pred_check
        %p358 = pneg %p115
      $region58: #{_lambda_.1} parent=43 // pred_check_branch
        %360 = sbr.rel (%p358) target = $region60
      $region59: #{_lambda_.1} parent=43 // pred_region
        %p361 = scmp.lt.s32.totalorder %s17, 3
        %s362 = scalar_select %p361, %s17, 3
        %s363 = smul.addr %s362, 8
        %s364 = smul.addr %s363, 8
        %s365 = scalar_lea.vmem %s3, %s364
      $region60: #{_lambda_.1} parent=43 // pred_fallthru
        _
    $region44: #{_lambda_.1} parent=5 // pred_fallthru
      _
    %p366 = scmp.le.s32.totalorder 1, %s17
    %p367 = scmp.lt.s32.totalorder %s17, 5
    %p368 = pnand %p366, %p367
    %p369 = pneg %p368
    // Predicated region
    $region61: #{_lambda_.1} parent=5 // pred_check
      _
    $region62: #{_lambda_.1} parent=5 // pred_check_branch
      %371 = sbr.rel (%p368) target = $region64
    $region63: #{_lambda_.1} parent=5 // pred_region
      %s372 = ssub.s32 %s17, 1
      %p373 = scmp.lt.s32.totalorder %s22, 3
      %s374 = scalar_select %p373, %s22, 3
      %s375 = smul.addr %s374, 8
      %s376 = smul.addr %s375, 4
      %s377 = scalar_lea.vmem %s0, %s376
      %p378 = pneg %p43
      %p379 = pneg %p40
      %p380 = scmp.lt.s32.totalorder %s22, 3
      %s381 = scalar_select %p380, %s22, 3
      %s382 = smul.addr %s381, 8
      %s383 = smul.addr %s382, 4
      %s384 = scalar_lea.vmem %s1, %s383
      %p385 = pneg %p69
      %p386 = pneg %p66
      %p387 = scmp.lt.s32.totalorder %s22, 3
      %s388 = scalar_select %p387, %s22, 3
      %s389 = smul.addr %s388, 8
      %s390 = smul.addr %s389, 4
      %s391 = scalar_lea.vmem %s2, %s390
      %p392 = pneg %p95
      %p393 = pneg %p92
      %p394 = scmp.lt.s32.totalorder %s22, 3
      %s395 = scalar_select %p394, %s22, 3
      %s396 = smul.addr %s395, 8
      %s397 = smul.addr %s396, 8
      %s398 = scalar_lea.vmem %s3, %s397
      %p399 = pneg %p121
      %p400 = pneg %p118
      %p401 = pneg %p142
      %p402 = pneg %p139
      %p403 = pneg %p163
      %p404 = pneg %p160
      %p405 = pneg %p184
      %p406 = pneg %p181
      %p407 = pneg %p205
      %p408 = pneg %p202
      %p409 = pneg %p226
      %p410 = pneg %p223
      %p411 = pneg %p247
      %p412 = pneg %p244
      %p413 = pneg %p268
      %p414 = pneg %p265
      %p415 = pneg %p294
      %p416 = pneg %p291
      %p417 = scmp.lt.s32.totalorder %s22, 3
      %s418 = scalar_select %p417, %s22, 3
      %s419 = smul.addr %s418, 8
      %s420 = scalar_lea.vmem %s11, %s419
      %p421 = scmp.lt.s32.totalorder %s22, 3
      %s422 = scalar_select %p421, %s22, 3
      %s423 = smul.addr %s422, 8
      %s424 = smul.addr %s423, 4
      %s425 = scalar_lea.vmem %s0, %s424
      %p426 = scmp.lt.s32.totalorder %s22, 3
      %s427 = scalar_select %p426, %s22, 3
      %s428 = smul.addr %s427, 8
      %s429 = smul.addr %s428, 4
      %s430 = scalar_lea.vmem %s1, %s429
      %p431 = scmp.lt.s32.totalorder %s22, 3
      %s432 = scalar_select %p431, %s22, 3
      %s433 = smul.addr %s432, 8
      %s434 = smul.addr %s433, 4
      %s435 = scalar_lea.vmem %s2, %s434
      %p436 = scmp.lt.s32.totalorder %s22, 3
      %s437 = scalar_select %p436, %s22, 3
      %s438 = smul.addr %s437, 8
      %s439 = smul.addr %s438, 8
      %s440 = scalar_lea.vmem %s3, %s439
      %p441 = scmp.lt.s32.totalorder %s22, 3
      %s442 = scalar_select %p441, %s22, 3
      %s443 = smul.addr %s442, 8
      %s444 = scalar_lea.vmem %s11, %s443
      %v446 = vld [vmem:[%s425] sm:$0xf]
      %v447 = vld [vmem:[%s425 + $0x4] sm:$0xf]
      %v448 = vld [vmem:[%s425 + $0x8] sm:$0xf]
      %v449 = vld [vmem:[%s425 + $0xc] sm:$0xf]
      %v450 = vld [vmem:[%s425 + $0x10] sm:$0xf]
      %v451 = vld [vmem:[%s425 + $0x14] sm:$0xf]
      %v452 = vld [vmem:[%s425 + $0x18] sm:$0xf]
      %v453 = vld [vmem:[%s425 + $0x1c] sm:$0xf]
      %v454 = vld [vmem:[%s430] sm:$0xf]
      %v455 = vld [vmem:[%s430 + $0x4] sm:$0xf]
      %v456 = vld [vmem:[%s430 + $0x8] sm:$0xf]
      %v457 = vld [vmem:[%s430 + $0xc] sm:$0xf]
      %v458 = vld [vmem:[%s430 + $0x10] sm:$0xf]
      %v459 = vld [vmem:[%s430 + $0x14] sm:$0xf]
      %v460 = vld [vmem:[%s430 + $0x18] sm:$0xf]
      %v461 = vld [vmem:[%s430 + $0x1c] sm:$0xf]
      %v462 = vld [vmem:[%s435] sm:$0xf]
      %v463 = vld [vmem:[%s435 + $0x4] sm:$0xf]
      %v464 = vld [vmem:[%s435 + $0x8] sm:$0xf]
      %v465 = vld [vmem:[%s435 + $0xc] sm:$0xf]
      %v466 = vld [vmem:[%s435 + $0x10] sm:$0xf]
      %v467 = vld [vmem:[%s435 + $0x14] sm:$0xf]
      %v468 = vld [vmem:[%s435 + $0x18] sm:$0xf]
      %v469 = vld [vmem:[%s435 + $0x1c] sm:$0xf]
      %v470 = vld [vmem:[%s4] sm:$0xf]
      %v479 = vunpack.c.l.b16 %v446
      %v480 = vunpack.c.l.b16 %v447
      %v481 = vunpack.c.l.b16 %v448
      %v482 = vunpack.c.l.b16 %v449
      %v483 = vunpack.c.l.b16 %v450
      %v484 = vunpack.c.l.b16 %v451
      %v485 = vunpack.c.l.b16 %v452
      %v486 = vunpack.c.l.b16 %v453
      %v487 = vpack.c.b16 %v480, %v479
      %v488 = vpack.c.b16 %v482, %v481
      %v489 = vpack.c.b16 %v484, %v483
      %v490 = vpack.c.b16 %v486, %v485
      %vm491 = vcmask 64512
      %v493 = vsel %vm491, %v487, 0
      %v496 = vsel %vm491, %v488, 0
      %v499 = vsel %vm491, %v489, 0
      %v502 = vsel %vm491, %v490, 0
      %vm504 = vcmask 1043456
      %v506 = vsel %vm504, %v470, 0
      %508 = vmatprep.subr.bf16.mxu0 0
      %509 = vmatpush1.bf16.msra.mxu0 %v506
      %510 = vmatprep.subr.bf16.mxu0 0
      %511 = vmatpush1.bf16.msra.mxu0 0
      %512 = vmatprep.subr.bf16.mxu0 0
      %513 = vmatpush1.bf16.msra.mxu0 0
      %514 = vmatprep.subr.bf16.mxu0 0
      %515 = vmatpush1.bf16.msra.mxu0 0
      %516 = vmatprep.subr.bf16.mxu0 0
      %517 = vmatpush1.bf16.msra.mxu0 0
      %518 = vmatprep.subr.bf16.mxu0 0
      %519 = vmatpush1.bf16.msra.mxu0 0
      %520 = vmatprep.subr.bf16.mxu0 0
      %521 = vmatpush1.bf16.msra.mxu0 0
      %522 = vmatprep.subr.bf16.mxu0 0
      %523 = vmatpush1.bf16.msra.mxu0 0
      %524 = vmatprep.subr.bf16.mxu0 0
      %525 = vmatpush1.bf16.msra.mxu0 0
      %526 = vmatprep.subr.bf16.mxu0 0
      %527 = vmatpush1.bf16.msra.mxu0 0
      %528 = vmatprep.subr.bf16.mxu0 0
      %529 = vmatpush1.bf16.msra.mxu0 0
      %530 = vmatprep.subr.bf16.mxu0 0
      %531 = vmatpush1.bf16.msra.mxu0 0
      %532 = vmatprep.subr.bf16.mxu0 0
      %533 = vmatpush1.bf16.msra.mxu0 0
      %534 = vmatprep.subr.bf16.mxu0 0
      %535 = vmatpush1.bf16.msra.mxu0 0
      %536 = vmatprep.subr.bf16.mxu0 0
      %537 = vmatpush1.bf16.msra.mxu0 0
      %538 = vmatprep.subr.bf16.mxu0 0
      %539 = vmatpush1.bf16.msra.mxu0 0
      %540 = vmatprep.mubr.bf16.mxu0 0
      %541 = vmatmul.mubr.bf16.gmra.mrb[0].mxu0 %v493
      %v542 = vpop.f32.mrb[0].mxu0
      %v543 = vadd.f32 0.0, %v542
      %v544 = vpop.f32.mrb[0].mxu0
      %v545 = vpop.f32.mrb[0].mxu0
      %v546 = vadd.f32 0.0, %v545
      %v547 = vpop.f32.mrb[0].mxu0
      %548 = vmatprep.mubr.bf16.mxu0 0
      %549 = vmatmul.mubr.bf16.gmra.mrb[0].mxu0 %v496
      %v550 = vpop.f32.mrb[0].mxu0
      %v551 = vadd.f32 0.0, %v550
      %v552 = vpop.f32.mrb[0].mxu0
      %v553 = vpop.f32.mrb[0].mxu0
      %v554 = vadd.f32 0.0, %v553
      %v555 = vpop.f32.mrb[0].mxu0
      %556 = vmatprep.mubr.bf16.mxu0 0
      %557 = vmatmul.mubr.bf16.gmra.mrb[0].mxu0 %v499
      %v558 = vpop.f32.mrb[0].mxu0
      %v559 = vadd.f32 0.0, %v558
      %v560 = vpop.f32.mrb[0].mxu0
      %v561 = vpop.f32.mrb[0].mxu0
      %v562 = vadd.f32 0.0, %v561
      %v563 = vpop.f32.mrb[0].mxu0
      %564 = vmatprep.mubr.bf16.mxu0 0
      %565 = vmatmul.mubr.bf16.gmra.mrb[0].mxu0 %v502
      %v566 = vpop.f32.mrb[0].mxu0
      %v567 = vadd.f32 0.0, %v566
      %v568 = vpop.f32.mrb[0].mxu0
      %v569 = vpop.f32.mrb[0].mxu0
      %v570 = vadd.f32 0.0, %v569
      %v571 = vpop.f32.mrb[0].mxu0
      %572 = vdwg.mxu0
      %vm573 = vcmask 130048
      %574 = vst.msk [vmem:[#allocation2] sm:$0xff] %vm573, %v543
      %575 = vst.msk [vmem:[#allocation2 + $0x8] sm:$0xff] %vm573, %v546
      %576 = vst.msk [vmem:[#allocation2 + $0x10] sm:$0xff] %vm573, %v551
      %577 = vst.msk [vmem:[#allocation2 + $0x18] sm:$0xff] %vm573, %v554
      %578 = vst.msk [vmem:[#allocation2 + $0x20] sm:$0xff] %vm573, %v559
      %579 = vst.msk [vmem:[#allocation2 + $0x28] sm:$0xff] %vm573, %v562
      %580 = vst.msk [vmem:[#allocation2 + $0x30] sm:$0xff] %vm573, %v567
      %581 = vst.msk [vmem:[#allocation2 + $0x38] sm:$0xff] %vm573, %v570
      %v582 = vld [vmem:[#allocation2] sm:$0xff]
      %v583 = vld [vmem:[#allocation2 + $0x8] sm:$0xff]
      %v584 = vld [vmem:[#allocation2 + $0x10] sm:$0xff]
      %v585 = vld [vmem:[#allocation2 + $0x18] sm:$0xff]
      %v586 = vld [vmem:[#allocation2 + $0x20] sm:$0xff]
      %v587 = vld [vmem:[#allocation2 + $0x28] sm:$0xff]
      %v588 = vld [vmem:[#allocation2 + $0x30] sm:$0xff]
      %v589 = vld [vmem:[#allocation2 + $0x38] sm:$0xff]
      %v590 = vld [vmem:[%s5] sm:$0x7]
      %v599 = vunpack.c.l.b16 %v454
      %v600 = vunpack.c.l.b16 %v455
      %v601 = vunpack.c.l.b16 %v456
      %v602 = vunpack.c.l.b16 %v457
      %v603 = vunpack.c.l.b16 %v458
      %v604 = vunpack.c.l.b16 %v459
      %v605 = vunpack.c.l.b16 %v460
      %v606 = vunpack.c.l.b16 %v461
      %v607 = vpack.c.b16 %v600, %v599
      %v608 = vpack.c.b16 %v602, %v601
      %v609 = vpack.c.b16 %v604, %v603
      %v610 = vpack.c.b16 %v606, %v605
      %vm611 = vcmask 48128
      %v613 = vsel %vm611, %v607, 0
      %v616 = vsel %vm611, %v608, 0
      %v619 = vsel %vm611, %v609, 0
      %v622 = vsel %vm611, %v610, 0
      %vm624 = vcmask 1042432
      %v626 = vsel %vm624, %v590, 0
      %628 = vmatprep.subr.bf16.mxu0 0
      %629 = vmatpush1.bf16.msra.mxu0 %v626
      %630 = vmatprep.subr.bf16.mxu0 0
      %631 = vmatpush1.bf16.msra.mxu0 0
      %632 = vmatprep.subr.bf16.mxu0 0
      %633 = vmatpush1.bf16.msra.mxu0 0
      %634 = vmatprep.subr.bf16.mxu0 0
      %635 = vmatpush1.bf16.msra.mxu0 0
      %636 = vmatprep.subr.bf16.mxu0 0
      %637 = vmatpush1.bf16.msra.mxu0 0
      %638 = vmatprep.subr.bf16.mxu0 0
      %639 = vmatpush1.bf16.msra.mxu0 0
      %640 = vmatprep.subr.bf16.mxu0 0
      %641 = vmatpush1.bf16.msra.mxu0 0
      %642 = vmatprep.subr.bf16.mxu0 0
      %643 = vmatpush1.bf16.msra.mxu0 0
      %644 = vmatprep.subr.bf16.mxu0 0
      %645 = vmatpush1.bf16.msra.mxu0 0
      %646 = vmatprep.subr.bf16.mxu0 0
      %647 = vmatpush1.bf16.msra.mxu0 0
      %648 = vmatprep.subr.bf16.mxu0 0
      %649 = vmatpush1.bf16.msra.mxu0 0
      %650 = vmatprep.subr.bf16.mxu0 0
      %651 = vmatpush1.bf16.msra.mxu0 0
      %652 = vmatprep.subr.bf16.mxu0 0
      %653 = vmatpush1.bf16.msra.mxu0 0
      %654 = vmatprep.subr.bf16.mxu0 0
      %655 = vmatpush1.bf16.msra.mxu0 0
      %656 = vmatprep.subr.bf16.mxu0 0
      %657 = vmatpush1.bf16.msra.mxu0 0
      %658 = vmatprep.subr.bf16.mxu0 0
      %659 = vmatpush1.bf16.msra.mxu0 0
      %660 = vmatprep.mubr.bf16.mxu0 0
      %661 = vmatmul.mubr.bf16.gmra.mrb[0].mxu0 %v613
      %v662 = vpop.f32.mrb[0].mxu0
      %v663 = vadd.f32 0.0, %v662
      %v664 = vpop.f32.mrb[0].mxu0
      %v665 = vpop.f32.mrb[0].mxu0
      %v666 = vadd.f32 0.0, %v665
      %v667 = vpop.f32.mrb[0].mxu0
      %668 = vmatprep.mubr.bf16.mxu0 0
      %669 = vmatmul.mubr.bf16.gmra.mrb[0].mxu0 %v616
      %v670 = vpop.f32.mrb[0].mxu0
      %v671 = vadd.f32 0.0, %v670
      %v672 = vpop.f32.mrb[0].mxu0
      %v673 = vpop.f32.mrb[0].mxu0
      %v674 = vadd.f32 0.0, %v673
      %v675 = vpop.f32.mrb[0].mxu0
      %676 = vmatprep.mubr.bf16.mxu0 0
      %677 = vmatmul.mubr.bf16.gmra.mrb[0].mxu0 %v619
      %v678 = vpop.f32.mrb[0].mxu0
      %v679 = vadd.f32 0.0, %v678
      %v680 = vpop.f32.mrb[0].mxu0
      %v681 = vpop.f32.mrb[0].mxu0
      %v682 = vadd.f32 0.0, %v681
      %v683 = vpop.f32.mrb[0].mxu0
      %684 = vmatprep.mubr.bf16.mxu0 0
      %685 = vmatmul.mubr.bf16.gmra.mrb[0].mxu0 %v622
      %v686 = vpop.f32.mrb[0].mxu0
      %v687 = vadd.f32 0.0, %v686
      %v688 = vpop.f32.mrb[0].mxu0
      %v689 = vpop.f32.mrb[0].mxu0
      %v690 = vadd.f32 0.0, %v689
      %v691 = vpop.f32.mrb[0].mxu0
      %692 = vdwg.mxu0
      %v693 = vadd.f32 %v582, %v663
      %v694 = vadd.f32 %v583, %v666
      %v695 = vadd.f32 %v584, %v671
      %v696 = vadd.f32 %v585, %v674
      %v697 = vadd.f32 %v586, %v679
      %v698 = vadd.f32 %v587, %v682
      %v699 = vadd.f32 %v588, %v687
      %v700 = vadd.f32 %v589, %v690
      %701 = vst.msk [vmem:[#allocation2] sm:$0xff] %vm573, %v693
      %702 = vst.msk [vmem:[#allocation2 + $0x8] sm:$0xff] %vm573, %v694
      %703 = vst.msk [vmem:[#allocation2 + $0x10] sm:$0xff] %vm573, %v695
      %704 = vst.msk [vmem:[#allocation2 + $0x18] sm:$0xff] %vm573, %v696
      %705 = vst.msk [vmem:[#allocation2 + $0x20] sm:$0xff] %vm573, %v697
      %706 = vst.msk [vmem:[#allocation2 + $0x28] sm:$0xff] %vm573, %v698
      %707 = vst.msk [vmem:[#allocation2 + $0x30] sm:$0xff] %vm573, %v699
      %708 = vst.msk [vmem:[#allocation2 + $0x38] sm:$0xff] %vm573, %v700
      %v709 = vld [vmem:[#allocation2] sm:$0xff]
      %v710 = vld [vmem:[#allocation2 + $0x8] sm:$0xff]
      %v711 = vld [vmem:[#allocation2 + $0x10] sm:$0xff]
      %v712 = vld [vmem:[#allocation2 + $0x18] sm:$0xff]
      %v713 = vld [vmem:[#allocation2 + $0x20] sm:$0xff]
      %v714 = vld [vmem:[#allocation2 + $0x28] sm:$0xff]
      %v715 = vld [vmem:[#allocation2 + $0x30] sm:$0xff]
      %v716 = vld [vmem:[#allocation2 + $0x38] sm:$0xff]
      %v717 = vld [vmem:[%s6] sm:$0x3]
      %v726 = vunpack.c.l.b16 %v462
      %v727 = vunpack.c.l.b16 %v463
      %v728 = vunpack.c.l.b16 %v464
      %v729 = vunpack.c.l.b16 %v465
      %v730 = vunpack.c.l.b16 %v466
      %v731 = vunpack.c.l.b16 %v467
      %v732 = vunpack.c.l.b16 %v468
      %v733 = vunpack.c.l.b16 %v469
      %v734 = vpack.c.b16 %v727, %v726
      %v735 = vpack.c.b16 %v729, %v728
      %v736 = vpack.c.b16 %v731, %v730
      %v737 = vpack.c.b16 %v733, %v732
      %vm738 = vcmask 31744
      %v740 = vsel %vm738, %v734, 0
      %v743 = vsel %vm738, %v735, 0
      %v746 = vsel %vm738, %v736, 0
      %v749 = vsel %vm738, %v737, 0
      %vm751 = vcmask 1041408
      %v753 = vsel %vm751, %v717, 0
      %755 = vmatprep.subr.bf16.mxu0 0
      %756 = vmatpush1.bf16.msra.mxu0 %v753
      %757 = vmatprep.subr.bf16.mxu0 0
      %758 = vmatpush1.bf16.msra.mxu0 0
      %759 = vmatprep.subr.bf16.mxu0 0
      %760 = vmatpush1.bf16.msra.mxu0 0
      %761 = vmatprep.subr.bf16.mxu0 0
      %762 = vmatpush1.bf16.msra.mxu0 0
      %763 = vmatprep.subr.bf16.mxu0 0
      %764 = vmatpush1.bf16.msra.mxu0 0
      %765 = vmatprep.subr.bf16.mxu0 0
      %766 = vmatpush1.bf16.msra.mxu0 0
      %767 = vmatprep.subr.bf16.mxu0 0
      %768 = vmatpush1.bf16.msra.mxu0 0
      %769 = vmatprep.subr.bf16.mxu0 0
      %770 = vmatpush1.bf16.msra.mxu0 0
      %771 = vmatprep.subr.bf16.mxu0 0
      %772 = vmatpush1.bf16.msra.mxu0 0
      %773 = vmatprep.subr.bf16.mxu0 0
      %774 = vmatpush1.bf16.msra.mxu0 0
      %775 = vmatprep.subr.bf16.mxu0 0
      %776 = vmatpush1.bf16.msra.mxu0 0
      %777 = vmatprep.subr.bf16.mxu0 0
      %778 = vmatpush1.bf16.msra.mxu0 0
      %779 = vmatprep.subr.bf16.mxu0 0
      %780 = vmatpush1.bf16.msra.mxu0 0
      %781 = vmatprep.subr.bf16.mxu0 0
      %782 = vmatpush1.bf16.msra.mxu0 0
      %783 = vmatprep.subr.bf16.mxu0 0
      %784 = vmatpush1.bf16.msra.mxu0 0
      %785 = vmatprep.subr.bf16.mxu0 0
      %786 = vmatpush1.bf16.msra.mxu0 0
      %787 = vmatprep.mubr.bf16.mxu0 0
      %788 = vmatmul.mubr.bf16.gmra.mrb[0].mxu0 %v740
      %v789 = vpop.f32.mrb[0].mxu0
      %v790 = vadd.f32 0.0, %v789
      %v791 = vpop.f32.mrb[0].mxu0
      %v792 = vpop.f32.mrb[0].mxu0
      %v793 = vadd.f32 0.0, %v792
      %v794 = vpop.f32.mrb[0].mxu0
      %795 = vmatprep.mubr.bf16.mxu0 0
      %796 = vmatmul.mubr.bf16.gmra.mrb[0].mxu0 %v743
      %v797 = vpop.f32.mrb[0].mxu0
      %v798 = vadd.f32 0.0, %v797
      %v799 = vpop.f32.mrb[0].mxu0
      %v800 = vpop.f32.mrb[0].mxu0
      %v801 = vadd.f32 0.0, %v800
      %v802 = vpop.f32.mrb[0].mxu0
      %803 = vmatprep.mubr.bf16.mxu0 0
      %804 = vmatmul.mubr.bf16.gmra.mrb[0].mxu0 %v746
      %v805 = vpop.f32.mrb[0].mxu0
      %v806 = vadd.f32 0.0, %v805
      %v807 = vpop.f32.mrb[0].mxu0
      %v808 = vpop.f32.mrb[0].mxu0
      %v809 = vadd.f32 0.0, %v808
      %v810 = vpop.f32.mrb[0].mxu0
      %811 = vmatprep.mubr.bf16.mxu0 0
      %812 = vmatmul.mubr.bf16.gmra.mrb[0].mxu0 %v749
      %v813 = vpop.f32.mrb[0].mxu0
      %v814 = vadd.f32 0.0, %v813
      %v815 = vpop.f32.mrb[0].mxu0
      %v816 = vpop.f32.mrb[0].mxu0
      %v817 = vadd.f32 0.0, %v816
      %v818 = vpop.f32.mrb[0].mxu0
      %819 = vdwg.mxu0
      %v820 = vadd.f32 %v709, %v790
      %v821 = vadd.f32 %v710, %v793
      %v822 = vadd.f32 %v711, %v798
      %v823 = vadd.f32 %v712, %v801
      %v824 = vadd.f32 %v713, %v806
      %v825 = vadd.f32 %v714, %v809
      %v826 = vadd.f32 %v715, %v814
      %v827 = vadd.f32 %v716, %v817
      %828 = vst.msk [vmem:[#allocation2] sm:$0xff] %vm573, %v820
      %829 = vst.msk [vmem:[#allocation2 + $0x8] sm:$0xff] %vm573, %v821
      %830 = vst.msk [vmem:[#allocation2 + $0x10] sm:$0xff] %vm573, %v822
      %831 = vst.msk [vmem:[#allocation2 + $0x18] sm:$0xff] %vm573, %v823
      %832 = vst.msk [vmem:[#allocation2 + $0x20] sm:$0xff] %vm573, %v824
      %833 = vst.msk [vmem:[#allocation2 + $0x28] sm:$0xff] %vm573, %v825
      %834 = vst.msk [vmem:[#allocation2 + $0x30] sm:$0xff] %vm573, %v826
      %835 = vst.msk [vmem:[#allocation2 + $0x38] sm:$0xff] %vm573, %v827
      %vm836 = vcmask 125952
      %837 = vst.msk [vmem:[#allocation3] sm:$0xf] %vm836, 0
      %vm838 = vcmask 122880
      %839 = vst.msk [vmem:[#allocation3 + $0x4] sm:$0x1] %vm838, 0
      %840 = vst.msk [vmem:[#allocation3 + $0x8] sm:$0xf] %vm836, 0
      %841 = vst.msk [vmem:[#allocation3 + $0xc] sm:$0x1] %vm838, 0
      %842 = vst.msk [vmem:[#allocation3 + $0x10] sm:$0xf] %vm836, 0
      %843 = vst.msk [vmem:[#allocation3 + $0x14] sm:$0x1] %vm838, 0
      %844 = vst.msk [vmem:[#allocation3 + $0x18] sm:$0xf] %vm836, 0
      %845 = vst.msk [vmem:[#allocation3 + $0x1c] sm:$0x1] %vm838, 0
      %846 = vst.msk [vmem:[#allocation3 + $0x20] sm:$0xf] %vm836, 0
      %847 = vst.msk [vmem:[#allocation3 + $0x24] sm:$0x1] %vm838, 0
      %848 = vst.msk [vmem:[#allocation3 + $0x28] sm:$0xf] %vm836, 0
      %849 = vst.msk [vmem:[#allocation3 + $0x2c] sm:$0x1] %vm838, 0
      %850 = vst.msk [vmem:[#allocation3 + $0x30] sm:$0xf] %vm836, 0
      %851 = vst.msk [vmem:[#allocation3 + $0x34] sm:$0x1] %vm838, 0
      %852 = vst.msk [vmem:[#allocation3 + $0x38] sm:$0xf] %vm836, 0
      %853 = vst.msk [vmem:[#allocation3 + $0x3c] sm:$0x1] %vm838, 0
      %854 = vst.msk [vmem:[#allocation3 + $0x40] sm:$0xf] %vm836, 0
      %855 = vst.msk [vmem:[#allocation3 + $0x44] sm:$0x1] %vm838, 0
      %856 = vst.msk [vmem:[#allocation3 + $0x48] sm:$0xf] %vm836, 0
      %857 = vst.msk [vmem:[#allocation3 + $0x4c] sm:$0x1] %vm838, 0
      %vm858 = vcmask 60416
      %859 = vst.msk [vmem:[#allocation4] sm:$0xf] %vm858, 0
      %vm860 = vcmask 57344
      %861 = vst.msk [vmem:[#allocation4 + $0x4] sm:$0x1] %vm860, 0
      %862 = vst.msk [vmem:[#allocation4 + $0x8] sm:$0xf] %vm858, 0
      %863 = vst.msk [vmem:[#allocation4 + $0xc] sm:$0x1] %vm860, 0
      %864 = vst.msk [vmem:[#allocation4 + $0x10] sm:$0xf] %vm858, 0
      %865 = vst.msk [vmem:[#allocation4 + $0x14] sm:$0x1] %vm860, 0
      %866 = vst.msk [vmem:[#allocation4 + $0x18] sm:$0xf] %vm858, 0
      %867 = vst.msk [vmem:[#allocation4 + $0x1c] sm:$0x1] %vm860, 0
      %868 = vst.msk [vmem:[#allocation4 + $0x20] sm:$0xf] %vm858, 0
      %869 = vst.msk [vmem:[#allocation4 + $0x24] sm:$0x1] %vm860, 0
      %870 = vst.msk [vmem:[#allocation4 + $0x28] sm:$0xf] %vm858, 0
      %871 = vst.msk [vmem:[#allocation4 + $0x2c] sm:$0x1] %vm860, 0
      %872 = vst.msk [vmem:[#allocation4 + $0x30] sm:$0xf] %vm858, 0
      %873 = vst.msk [vmem:[#allocation4 + $0x34] sm:$0x1] %vm860, 0
      %874 = vst.msk [vmem:[#allocation4 + $0x38] sm:$0xf] %vm858, 0
      %875 = vst.msk [vmem:[#allocation4 + $0x3c] sm:$0x1] %vm860, 0
      %876 = vst.msk [vmem:[#allocation4 + $0x40] sm:$0xf] %vm858, 0
      %877 = vst.msk [vmem:[#allocation4 + $0x44] sm:$0x1] %vm860, 0
      %878 = vst.msk [vmem:[#allocation4 + $0x48] sm:$0xf] %vm858, 0
      %879 = vst.msk [vmem:[#allocation4 + $0x4c] sm:$0x1] %vm860, 0
      %v880 = vld [vmem:[#allocation2] sm:$0xff]
      %v881 = vld [vmem:[#allocation2 + $0x8] sm:$0xff]
      %v882 = vld [vmem:[#allocation2 + $0x10] sm:$0xff]
      %v883 = vld [vmem:[#allocation2 + $0x18] sm:$0xff]
      %v884 = vld [vmem:[#allocation2 + $0x20] sm:$0xff]
      %v885 = vld [vmem:[#allocation2 + $0x28] sm:$0xff]
      %v886 = vld [vmem:[#allocation2 + $0x30] sm:$0xff]
      %v887 = vld [vmem:[#allocation2 + $0x38] sm:$0xff]
      %v888 = vld [vmem:[%s7] sm:$0x1]
      %v890 = vlaneseq
      %v891 = vshrl.u32 %v890, 7
      %v892 = vsub.s32 0, %v891
      %v893 = vrot.slane %v888, %v892
      %v895 = vadd.f32 %v880, %v893
      %v896 = vadd.f32 %v881, %v893
      %v897 = vadd.f32 %v882, %v893
      %v898 = vadd.f32 %v883, %v893
      %v899 = vadd.f32 %v884, %v893
      %v900 = vadd.f32 %v885, %v893
      %v901 = vadd.f32 %v886, %v893
      %v902 = vadd.f32 %v887, %v893
      %v903 = vpack.c.bf16 %v895, %v895
      %v904 = vpack.c.bf16 %v896, %v896
      %v905 = vpack.c.bf16 %v897, %v897
      %v906 = vpack.c.bf16 %v898, %v898
      %v907 = vpack.c.bf16 %v899, %v899
      %v908 = vpack.c.bf16 %v900, %v900
      %v909 = vpack.c.bf16 %v901, %v901
      %v910 = vpack.c.bf16 %v902, %v902
      %v919 = vunpack.c.l.b16 %v903
      %v920 = vunpack.c.l.b16 %v904
      %v921 = vunpack.c.l.b16 %v905
      %v922 = vunpack.c.l.b16 %v906
      %v923 = vunpack.c.l.b16 %v907
      %v924 = vunpack.c.l.b16 %v908
      %v925 = vunpack.c.l.b16 %v909
      %v926 = vunpack.c.l.b16 %v910
      %v927 = vpack.c.b16 %v919, %v919
      %v928 = vpack.c.b16 %v920, %v920
      %v929 = vpack.c.b16 %v921, %v921
      %v930 = vpack.c.b16 %v922, %v922
      %v931 = vpack.c.b16 %v923, %v923
      %v932 = vpack.c.b16 %v924, %v924
      %v933 = vpack.c.b16 %v925, %v925
      %v934 = vpack.c.b16 %v926, %v926
      %v936 = vshrl.u32 %v927, 16
      %v938 = vrot.slane %v936, 7
      %v939 = vshll.u32 %v927, 16
      %v941 = vor.u32 %v938, %v939
      %v942 = vrot.slane %v938, 4
      %v944 = vshrl.u32 %v928, 16
      %v946 = vrot.slane %v944, 7
      %v947 = vshll.u32 %v928, 16
      %v949 = vor.u32 %v946, %v947
      %v950 = vrot.slane %v946, 4
      %v952 = vshrl.u32 %v929, 16
      %v954 = vrot.slane %v952, 7
      %v955 = vshll.u32 %v929, 16
      %v957 = vor.u32 %v954, %v955
      %v958 = vrot.slane %v954, 4
      %v960 = vshrl.u32 %v930, 16
      %v962 = vrot.slane %v960, 7
      %v963 = vshll.u32 %v930, 16
      %v965 = vor.u32 %v962, %v963
      %v966 = vrot.slane %v962, 4
      %v968 = vshrl.u32 %v931, 16
      %v970 = vrot.slane %v968, 7
      %v971 = vshll.u32 %v931, 16
      %v973 = vor.u32 %v970, %v971
      %v974 = vrot.slane %v970, 4
      %v976 = vshrl.u32 %v932, 16
      %v978 = vrot.slane %v976, 7
      %v979 = vshll.u32 %v932, 16
      %v981 = vor.u32 %v978, %v979
      %v982 = vrot.slane %v978, 4
      %v984 = vshrl.u32 %v933, 16
      %v986 = vrot.slane %v984, 7
      %v987 = vshll.u32 %v933, 16
      %v989 = vor.u32 %v986, %v987
      %v990 = vrot.slane %v986, 4
      %v992 = vshrl.u32 %v934, 16
      %v994 = vrot.slane %v992, 7
      %v995 = vshll.u32 %v934, 16
      %v997 = vor.u32 %v994, %v995
      %v998 = vrot.slane %v994, 4
      %s1015 = scalar_lea.vmem [#allocation3], 8
      %vm1016 = vcmask 125952
      %vm1017 = vsmask.f32 7938
      %vm1018 = vmand %vm1016, %vm1017
      %v1019 = vld [vmem:[%s1015] sm:$0xf]
      %v1020 = vsel %vm1018, %v941, %v1019
      %1021 = vst [vmem:[%s1015] sm:$0xf] %v1020
      %vm1022 = vcmask 122880
      %vm1023 = vsmask.f32 256
      %vm1024 = vmand %vm1022, %vm1023
      %v1025 = vld [vmem:[%s1015 + $0x4] sm:$0x1]
      %v1026 = vsel %vm1024, %v942, %v1025
      %1027 = vst [vmem:[%s1015 + $0x4] sm:$0x1] %v1026
      %v1028 = vld [vmem:[%s1015 + $0x8] sm:$0xf]
      %v1029 = vsel %vm1018, %v949, %v1028
      %1030 = vst [vmem:[%s1015 + $0x8] sm:$0xf] %v1029
      %v1031 = vld [vmem:[%s1015 + $0xc] sm:$0x1]
      %v1032 = vsel %vm1024, %v950, %v1031
      %1033 = vst [vmem:[%s1015 + $0xc] sm:$0x1] %v1032
      %v1034 = vld [vmem:[%s1015 + $0x10] sm:$0xf]
      %v1035 = vsel %vm1018, %v957, %v1034
      %1036 = vst [vmem:[%s1015 + $0x10] sm:$0xf] %v1035
      %v1037 = vld [vmem:[%s1015 + $0x14] sm:$0x1]
      %v1038 = vsel %vm1024, %v958, %v1037
      %1039 = vst [vmem:[%s1015 + $0x14] sm:$0x1] %v1038
      %v1040 = vld [vmem:[%s1015 + $0x18] sm:$0xf]
      %v1041 = vsel %vm1018, %v965, %v1040
      %1042 = vst [vmem:[%s1015 + $0x18] sm:$0xf] %v1041
      %v1043 = vld [vmem:[%s1015 + $0x1c] sm:$0x1]
      %v1044 = vsel %vm1024, %v966, %v1043
      %1045 = vst [vmem:[%s1015 + $0x1c] sm:$0x1] %v1044
      %v1046 = vld [vmem:[%s1015 + $0x20] sm:$0xf]
      %v1047 = vsel %vm1018, %v973, %v1046
      %1048 = vst [vmem:[%s1015 + $0x20] sm:$0xf] %v1047
      %v1049 = vld [vmem:[%s1015 + $0x24] sm:$0x1]
      %v1050 = vsel %vm1024, %v974, %v1049
      %1051 = vst [vmem:[%s1015 + $0x24] sm:$0x1] %v1050
      %v1052 = vld [vmem:[%s1015 + $0x28] sm:$0xf]
      %v1053 = vsel %vm1018, %v981, %v1052
      %1054 = vst [vmem:[%s1015 + $0x28] sm:$0xf] %v1053
      %v1055 = vld [vmem:[%s1015 + $0x2c] sm:$0x1]
      %v1056 = vsel %vm1024, %v982, %v1055
      %1057 = vst [vmem:[%s1015 + $0x2c] sm:$0x1] %v1056
      %v1058 = vld [vmem:[%s1015 + $0x30] sm:$0xf]
      %v1059 = vsel %vm1018, %v989, %v1058
      %1060 = vst [vmem:[%s1015 + $0x30] sm:$0xf] %v1059
      %v1061 = vld [vmem:[%s1015 + $0x34] sm:$0x1]
      %v1062 = vsel %vm1024, %v990, %v1061
      %1063 = vst [vmem:[%s1015 + $0x34] sm:$0x1] %v1062
      %v1064 = vld [vmem:[%s1015 + $0x38] sm:$0xf]
      %v1065 = vsel %vm1018, %v997, %v1064
      %1066 = vst [vmem:[%s1015 + $0x38] sm:$0xf] %v1065
      %v1067 = vld [vmem:[%s1015 + $0x3c] sm:$0x1]
      %v1068 = vsel %vm1024, %v998, %v1067
      %1069 = vst [vmem:[%s1015 + $0x3c] sm:$0x1] %v1068
      %v1070 = vld [vmem:[%s440] sm:$0xff]
      %v1071 = vld [vmem:[%s440 + $0x8] sm:$0xff]
      %v1072 = vld [vmem:[%s440 + $0x10] sm:$0xff]
      %v1073 = vld [vmem:[%s440 + $0x18] sm:$0xff]
      %v1074 = vld [vmem:[%s440 + $0x20] sm:$0xff]
      %v1075 = vld [vmem:[%s440 + $0x28] sm:$0xff]
      %v1076 = vld [vmem:[%s440 + $0x30] sm:$0xff]
      %v1077 = vld [vmem:[%s440 + $0x38] sm:$0xff]
      %v1078 = vpack.c.bf16 %v1070, %v1070
      %v1079 = vpack.c.bf16 %v1071, %v1071
      %v1080 = vpack.c.bf16 %v1072, %v1072
      %v1081 = vpack.c.bf16 %v1073, %v1073
      %v1082 = vpack.c.bf16 %v1074, %v1074
      %v1083 = vpack.c.bf16 %v1075, %v1075
      %v1084 = vpack.c.bf16 %v1076, %v1076
      %v1085 = vpack.c.bf16 %v1077, %v1077
      %v1094 = vunpack.c.l.b16 %v1078
      %v1095 = vunpack.c.l.b16 %v1079
      %v1096 = vunpack.c.l.b16 %v1080
      %v1097 = vunpack.c.l.b16 %v1081
      %v1098 = vunpack.c.l.b16 %v1082
      %v1099 = vunpack.c.l.b16 %v1083
      %v1100 = vunpack.c.l.b16 %v1084
      %v1101 = vunpack.c.l.b16 %v1085
      %v1102 = vpack.c.b16 %v1094, %v1094
      %v1103 = vpack.c.b16 %v1095, %v1095
      %v1104 = vpack.c.b16 %v1096, %v1096
      %v1105 = vpack.c.b16 %v1097, %v1097
      %v1106 = vpack.c.b16 %v1098, %v1098
      %v1107 = vpack.c.b16 %v1099, %v1099
      %v1108 = vpack.c.b16 %v1100, %v1100
      %v1109 = vpack.c.b16 %v1101, %v1101
      %v1111 = vshrl.u32 %v1102, 16
      %v1113 = vrot.slane %v1111, 7
      %v1114 = vshll.u32 %v1102, 16
      %v1116 = vor.u32 %v1113, %v1114
      %v1117 = vrot.slane %v1113, 4
      %v1119 = vshrl.u32 %v1103, 16
      %v1121 = vrot.slane %v1119, 7
      %v1122 = vshll.u32 %v1103, 16
      %v1124 = vor.u32 %v1121, %v1122
      %v1125 = vrot.slane %v1121, 4
      %v1127 = vshrl.u32 %v1104, 16
      %v1129 = vrot.slane %v1127, 7
      %v1130 = vshll.u32 %v1104, 16
      %v1132 = vor.u32 %v1129, %v1130
      %v1133 = vrot.slane %v1129, 4
      %v1135 = vshrl.u32 %v1105, 16
      %v1137 = vrot.slane %v1135, 7
      %v1138 = vshll.u32 %v1105, 16
      %v1140 = vor.u32 %v1137, %v1138
      %v1141 = vrot.slane %v1137, 4
      %v1143 = vshrl.u32 %v1106, 16
      %v1145 = vrot.slane %v1143, 7
      %v1146 = vshll.u32 %v1106, 16
      %v1148 = vor.u32 %v1145, %v1146
      %v1149 = vrot.slane %v1145, 4
      %v1151 = vshrl.u32 %v1107, 16
      %v1153 = vrot.slane %v1151, 7
      %v1154 = vshll.u32 %v1107, 16
      %v1156 = vor.u32 %v1153, %v1154
      %v1157 = vrot.slane %v1153, 4
      %v1159 = vshrl.u32 %v1108, 16
      %v1161 = vrot.slane %v1159, 7
      %v1162 = vshll.u32 %v1108, 16
      %v1164 = vor.u32 %v1161, %v1162
      %v1165 = vrot.slane %v1161, 4
      %v1167 = vshrl.u32 %v1109, 16
      %v1169 = vrot.slane %v1167, 7
      %v1170 = vshll.u32 %v1109, 16
      %v1172 = vor.u32 %v1169, %v1170
      %v1173 = vrot.slane %v1169, 4
      %s1190 = scalar_lea.vmem [#allocation4], 8
      %vm1191 = vcmask 60416
      %vm1192 = vmand %vm1191, %vm1017
      %v1193 = vld [vmem:[%s1190] sm:$0xf]
      %v1194 = vsel %vm1192, %v1116, %v1193
      %1195 = vst [vmem:[%s1190] sm:$0xf] %v1194
      %vm1196 = vcmask 57344
      %vm1197 = vmand %vm1196, %vm1023
      %v1198 = vld [vmem:[%s1190 + $0x4] sm:$0x1]
      %v1199 = vsel %vm1197, %v1117, %v1198
      %1200 = vst [vmem:[%s1190 + $0x4] sm:$0x1] %v1199
      %v1201 = vld [vmem:[%s1190 + $0x8] sm:$0xf]
      %v1202 = vsel %vm1192, %v1124, %v1201
      %1203 = vst [vmem:[%s1190 + $0x8] sm:$0xf] %v1202
      %v1204 = vld [vmem:[%s1190 + $0xc] sm:$0x1]
      %v1205 = vsel %vm1197, %v1125, %v1204
      %1206 = vst [vmem:[%s1190 + $0xc] sm:$0x1] %v1205
      %v1207 = vld [vmem:[%s1190 + $0x10] sm:$0xf]
      %v1208 = vsel %vm1192, %v1132, %v1207
      %1209 = vst [vmem:[%s1190 + $0x10] sm:$0xf] %v1208
      %v1210 = vld [vmem:[%s1190 + $0x14] sm:$0x1]
      %v1211 = vsel %vm1197, %v1133, %v1210
      %1212 = vst [vmem:[%s1190 + $0x14] sm:$0x1] %v1211
      %v1213 = vld [vmem:[%s1190 + $0x18] sm:$0xf]
      %v1214 = vsel %vm1192, %v1140, %v1213
      %1215 = vst [vmem:[%s1190 + $0x18] sm:$0xf] %v1214
      %v1216 = vld [vmem:[%s1190 + $0x1c] sm:$0x1]
      %v1217 = vsel %vm1197, %v1141, %v1216
      %1218 = vst [vmem:[%s1190 + $0x1c] sm:$0x1] %v1217
      %v1219 = vld [vmem:[%s1190 + $0x20] sm:$0xf]
      %v1220 = vsel %vm1192, %v1148, %v1219
      %1221 = vst [vmem:[%s1190 + $0x20] sm:$0xf] %v1220
      %v1222 = vld [vmem:[%s1190 + $0x24] sm:$0x1]
      %v1223 = vsel %vm1197, %v1149, %v1222
      %1224 = vst [vmem:[%s1190 + $0x24] sm:$0x1] %v1223
      %v1225 = vld [vmem:[%s1190 + $0x28] sm:$0xf]
      %v1226 = vsel %vm1192, %v1156, %v1225
      %1227 = vst [vmem:[%s1190 + $0x28] sm:$0xf] %v1226
      %v1228 = vld [vmem:[%s1190 + $0x2c] sm:$0x1]
      %v1229 = vsel %vm1197, %v1157, %v1228
      %1230 = vst [vmem:[%s1190 + $0x2c] sm:$0x1] %v1229
      %v1231 = vld [vmem:[%s1190 + $0x30] sm:$0xf]
      %v1232 = vsel %vm1192, %v1164, %v1231
      %1233 = vst [vmem:[%s1190 + $0x30] sm:$0xf] %v1232
      %v1234 = vld [vmem:[%s1190 + $0x34] sm:$0x1]
      %v1235 = vsel %vm1197, %v1165, %v1234
      %1236 = vst [vmem:[%s1190 + $0x34] sm:$0x1] %v1235
      %v1237 = vld [vmem:[%s1190 + $0x38] sm:$0xf]
      %v1238 = vsel %vm1192, %v1172, %v1237
      %1239 = vst [vmem:[%s1190 + $0x38] sm:$0xf] %v1238
      %v1240 = vld [vmem:[%s1190 + $0x3c] sm:$0x1]
      %v1241 = vsel %vm1197, %v1173, %v1240
      %1242 = vst [vmem:[%s1190 + $0x3c] sm:$0x1] %v1241
      %vm1243 = vcmask 195584
      %1244 = vst.msk [vmem:[#allocation5] sm:$0xff] %vm1243, 0.0
      %1245 = vst.msk [vmem:[#allocation5 + $0x8] sm:$0xff] %vm1243, 0.0
      %1246 = vst.msk [vmem:[#allocation5 + $0x10] sm:$0xff] %vm1243, 0.0
      %1247 = vst.msk [vmem:[#allocation5 + $0x18] sm:$0xff] %vm1243, 0.0
      %1248 = vst.msk [vmem:[#allocation5 + $0x20] sm:$0xff] %vm1243, 0.0
      %1249 = vst.msk [vmem:[#allocation5 + $0x28] sm:$0xff] %vm1243, 0.0
      %1250 = vst.msk [vmem:[#allocation5 + $0x30] sm:$0xff] %vm1243, 0.0
      %1251 = vst.msk [vmem:[#allocation5 + $0x38] sm:$0xff] %vm1243, 0.0
      %v1252 = vld [vmem:[#allocation3] sm:$0xf]
      %v1253 = vld [vmem:[#allocation3 + $0x8] sm:$0xf]
      %v1254 = vld [vmem:[#allocation3 + $0x10] sm:$0xf]
      %v1255 = vld [vmem:[#allocation3 + $0x18] sm:$0xf]
      %v1256 = vld [vmem:[#allocation3 + $0x20] sm:$0xf]
      %v1257 = vld [vmem:[#allocation3 + $0x28] sm:$0xf]
      %v1258 = vld [vmem:[#allocation3 + $0x30] sm:$0xf]
      %v1259 = vld [vmem:[#allocation3 + $0x38] sm:$0xf]
      %v1260 = vld [vmem:[#allocation4] sm:$0xf]
      %v1261 = vld [vmem:[#allocation4 + $0x8] sm:$0xf]
      %v1262 = vld [vmem:[#allocation4 + $0x10] sm:$0xf]
      %v1263 = vld [vmem:[#allocation4 + $0x18] sm:$0xf]
      %v1264 = vld [vmem:[#allocation4 + $0x20] sm:$0xf]
      %v1265 = vld [vmem:[#allocation4 + $0x28] sm:$0xf]
      %v1266 = vld [vmem:[#allocation4 + $0x30] sm:$0xf]
      %v1267 = vld [vmem:[#allocation4 + $0x38] sm:$0xf]
      %v1268 = vld [vmem:[#allocation5] sm:$0xff]
      %v1269 = vld [vmem:[#allocation5 + $0x8] sm:$0xff]
      %v1270 = vld [vmem:[#allocation5 + $0x10] sm:$0xff]
      %v1271 = vld [vmem:[#allocation5 + $0x18] sm:$0xff]
      %v1272 = vld [vmem:[#allocation5 + $0x20] sm:$0xff]
      %v1273 = vld [vmem:[#allocation5 + $0x28] sm:$0xff]
      %v1274 = vld [vmem:[#allocation5 + $0x30] sm:$0xff]
      %v1275 = vld [vmem:[#allocation5 + $0x38] sm:$0xff]
      %v1276 = vld [vmem:[%s8] sm:$0xf]
      %v1277 = vld [vmem:[%s8 + $0x4] sm:$0xf]
      %v1278 = vld [vmem:[%s9] sm:$0xf]
      %v1287 = vunpack.c.l.b16 %v1260
      %v1288 = vunpack.c.l.b16 %v1261
      %v1289 = vunpack.c.l.b16 %v1262
      %v1290 = vunpack.c.l.b16 %v1263
      %v1291 = vunpack.c.l.b16 %v1264
      %v1292 = vunpack.c.l.b16 %v1265
      %v1293 = vunpack.c.l.b16 %v1266
      %v1294 = vunpack.c.l.b16 %v1267
      %v1295 = vpack.c.b16 %v1288, %v1287
      %v1296 = vpack.c.b16 %v1290, %v1289
      %v1297 = vpack.c.b16 %v1292, %v1291
      %v1298 = vpack.c.b16 %v1294, %v1293
      %v1300 = vsel %vm491, %v1295, 0
      %v1303 = vsel %vm491, %v1296, 0
      %v1306 = vsel %vm491, %v1297, 0
      %v1309 = vsel %vm491, %v1298, 0
      %v1312 = vsel %vm504, %v1278, 0
      %1314 = vmatprep.subr.bf16.mxu0 0
      %1315 = vmatpush1.bf16.msra.mxu0 %v1312
      %1316 = vmatprep.subr.bf16.mxu0 0
      %1317 = vmatpush1.bf16.msra.mxu0 0
      %1318 = vmatprep.subr.bf16.mxu0 0
      %1319 = vmatpush1.bf16.msra.mxu0 0
      %1320 = vmatprep.subr.bf16.mxu0 0
      %1321 = vmatpush1.bf16.msra.mxu0 0
      %1322 = vmatprep.subr.bf16.mxu0 0
      %1323 = vmatpush1.bf16.msra.mxu0 0
      %1324 = vmatprep.subr.bf16.mxu0 0
      %1325 = vmatpush1.bf16.msra.mxu0 0
      %1326 = vmatprep.subr.bf16.mxu0 0
      %1327 = vmatpush1.bf16.msra.mxu0 0
      %1328 = vmatprep.subr.bf16.mxu0 0
      %1329 = vmatpush1.bf16.msra.mxu0 0
      %1330 = vmatprep.subr.bf16.mxu0 0
      %1331 = vmatpush1.bf16.msra.mxu0 0
      %1332 = vmatprep.subr.bf16.mxu0 0
      %1333 = vmatpush1.bf16.msra.mxu0 0
      %1334 = vmatprep.subr.bf16.mxu0 0
      %1335 = vmatpush1.bf16.msra.mxu0 0
      %1336 = vmatprep.subr.bf16.mxu0 0
      %1337 = vmatpush1.bf16.msra.mxu0 0
      %1338 = vmatprep.subr.bf16.mxu0 0
      %1339 = vmatpush1.bf16.msra.mxu0 0
      %1340 = vmatprep.subr.bf16.mxu0 0
      %1341 = vmatpush1.bf16.msra.mxu0 0
      %1342 = vmatprep.subr.bf16.mxu0 0
      %1343 = vmatpush1.bf16.msra.mxu0 0
      %1344 = vmatprep.subr.bf16.mxu0 0
      %1345 = vmatpush1.bf16.msra.mxu0 0
      %1346 = vmatprep.mubr.bf16.mxu0 0
      %1347 = vmatmul.mubr.bf16.gmra.mrb[0].mxu0 %v1300
      %v1348 = vpop.f32.mrb[0].mxu0
      %v1349 = vadd.f32 0.0, %v1348
      %v1350 = vpop.f32.mrb[0].mxu0
      %v1351 = vpop.f32.mrb[0].mxu0
      %v1352 = vadd.f32 0.0, %v1351
      %v1353 = vpop.f32.mrb[0].mxu0
      %1354 = vmatprep.mubr.bf16.mxu0 0
      %1355 = vmatmul.mubr.bf16.gmra.mrb[0].mxu0 %v1303
      %v1356 = vpop.f32.mrb[0].mxu0
      %v1357 = vadd.f32 0.0, %v1356
      %v1358 = vpop.f32.mrb[0].mxu0
      %v1359 = vpop.f32.mrb[0].mxu0
      %v1360 = vadd.f32 0.0, %v1359
      %v1361 = vpop.f32.mrb[0].mxu0
      %1362 = vmatprep.mubr.bf16.mxu0 0
      %1363 = vmatmul.mubr.bf16.gmra.mrb[0].mxu0 %v1306
      %v1364 = vpop.f32.mrb[0].mxu0
      %v1365 = vadd.f32 0.0, %v1364
      %v1366 = vpop.f32.mrb[0].mxu0
      %v1367 = vpop.f32.mrb[0].mxu0
      %v1368 = vadd.f32 0.0, %v1367
      %v1369 = vpop.f32.mrb[0].mxu0
      %1370 = vmatprep.mubr.bf16.mxu0 0
      %1371 = vmatmul.mubr.bf16.gmra.mrb[0].mxu0 %v1309
      %v1372 = vpop.f32.mrb[0].mxu0
      %v1373 = vadd.f32 0.0, %v1372
      %v1374 = vpop.f32.mrb[0].mxu0
      %v1375 = vpop.f32.mrb[0].mxu0
      %v1376 = vadd.f32 0.0, %v1375
      %v1377 = vpop.f32.mrb[0].mxu0
      %1378 = vdwg.mxu0
      %v1387 = vunpack.c.l.b16 %v1252
      %v1388 = vunpack.c.l.b16 %v1253
      %v1389 = vunpack.c.l.b16 %v1254
      %v1390 = vunpack.c.l.b16 %v1255
      %v1391 = vunpack.c.l.b16 %v1256
      %v1392 = vunpack.c.l.b16 %v1257
      %v1393 = vunpack.c.l.b16 %v1258
      %v1394 = vunpack.c.l.b16 %v1259
      %v1395 = vpack.c.b16 %v1388, %v1387
      %v1396 = vpack.c.b16 %v1390, %v1389
      %v1397 = vpack.c.b16 %v1392, %v1391
      %v1398 = vpack.c.b16 %v1394, %v1393
      %v1401 = vunpack.c.l.b16 %v1276
      %v1402 = vunpack.c.l.b16 %v1277
      %v1403 = vpack.c.b16 %v1402, %v1401
      %v1406 = vsel %vm573, %v1395, 0
      %v1409 = vsel %vm573, %v1396, 0
      %v1412 = vsel %vm573, %v1397, 0
      %v1415 = vsel %vm573, %v1398, 0
      %1417 = vmatprep.subr.bf16.mxu0 0
      %1418 = vmatpush1.bf16.msra.mxu0 %v1403
      %1419 = vmatprep.subr.bf16.mxu0 0
      %1420 = vmatpush1.bf16.msra.mxu0 0
      %1421 = vmatprep.subr.bf16.mxu0 0
      %1422 = vmatpush1.bf16.msra.mxu0 0
      %1423 = vmatprep.subr.bf16.mxu0 0
      %1424 = vmatpush1.bf16.msra.mxu0 0
      %1425 = vmatprep.subr.bf16.mxu0 0
      %1426 = vmatpush1.bf16.msra.mxu0 0
      %1427 = vmatprep.subr.bf16.mxu0 0
      %1428 = vmatpush1.bf16.msra.mxu0 0
      %1429 = vmatprep.subr.bf16.mxu0 0
      %1430 = vmatpush1.bf16.msra.mxu0 0
      %1431 = vmatprep.subr.bf16.mxu0 0
      %1432 = vmatpush1.bf16.msra.mxu0 0
      %1433 = vmatprep.subr.bf16.mxu0 0
      %1434 = vmatpush1.bf16.msra.mxu0 0
      %1435 = vmatprep.subr.bf16.mxu0 0
      %1436 = vmatpush1.bf16.msra.mxu0 0
      %1437 = vmatprep.subr.bf16.mxu0 0
      %1438 = vmatpush1.bf16.msra.mxu0 0
      %1439 = vmatprep.subr.bf16.mxu0 0
      %1440 = vmatpush1.bf16.msra.mxu0 0
      %1441 = vmatprep.subr.bf16.mxu0 0
      %1442 = vmatpush1.bf16.msra.mxu0 0
      %1443 = vmatprep.subr.bf16.mxu0 0
      %1444 = vmatpush1.bf16.msra.mxu0 0
      %1445 = vmatprep.subr.bf16.mxu0 0
      %1446 = vmatpush1.bf16.msra.mxu0 0
      %1447 = vmatprep.subr.bf16.mxu0 0
      %1448 = vmatpush1.bf16.msra.mxu0 0
      %1449 = vmatprep.mubr.bf16.mxu0 0
      %1450 = vmatmul.mubr.bf16.gmra.mrb[0].mxu0 %v1406
      %v1451 = vpop.f32.mrb[0].mxu0
      %v1452 = vadd.f32 %v1349, %v1451
      %v1453 = vpop.f32.mrb[0].mxu0
      %v1454 = vpop.f32.mrb[0].mxu0
      %v1455 = vadd.f32 %v1352, %v1454
      %v1456 = vpop.f32.mrb[0].mxu0
      %1457 = vmatprep.mubr.bf16.mxu0 0
      %1458 = vmatmul.mubr.bf16.gmra.mrb[0].mxu0 %v1409
      %v1459 = vpop.f32.mrb[0].mxu0
      %v1460 = vadd.f32 %v1357, %v1459
      %v1461 = vpop.f32.mrb[0].mxu0
      %v1462 = vpop.f32.mrb[0].mxu0
      %v1463 = vadd.f32 %v1360, %v1462
      %v1464 = vpop.f32.mrb[0].mxu0
      %1465 = vmatprep.mubr.bf16.mxu0 0
      %1466 = vmatmul.mubr.bf16.gmra.mrb[0].mxu0 %v1412
      %v1467 = vpop.f32.mrb[0].mxu0
      %v1468 = vadd.f32 %v1365, %v1467
      %v1469 = vpop.f32.mrb[0].mxu0
      %v1470 = vpop.f32.mrb[0].mxu0
      %v1471 = vadd.f32 %v1368, %v1470
      %v1472 = vpop.f32.mrb[0].mxu0
      %1473 = vmatprep.mubr.bf16.mxu0 0
      %1474 = vmatmul.mubr.bf16.gmra.mrb[0].mxu0 %v1415
      %v1475 = vpop.f32.mrb[0].mxu0
      %v1476 = vadd.f32 %v1373, %v1475
      %v1477 = vpop.f32.mrb[0].mxu0
      %v1478 = vpop.f32.mrb[0].mxu0
      %v1479 = vadd.f32 %v1376, %v1478
      %v1480 = vpop.f32.mrb[0].mxu0
      %1481 = vdwg.mxu0
      %v1482 = vadd.f32 %v1268, %v1452
      %v1483 = vadd.f32 %v1269, %v1455
      %v1484 = vadd.f32 %v1270, %v1460
      %v1485 = vadd.f32 %v1271, %v1463
      %v1486 = vadd.f32 %v1272, %v1468
      %v1487 = vadd.f32 %v1273, %v1471
      %v1488 = vadd.f32 %v1274, %v1476
      %v1489 = vadd.f32 %v1275, %v1479
      %1490 = vst.msk [vmem:[#allocation5] sm:$0xff] %vm1243, %v1482
      %1491 = vst.msk [vmem:[#allocation5 + $0x8] sm:$0xff] %vm1243, %v1483
      %1492 = vst.msk [vmem:[#allocation5 + $0x10] sm:$0xff] %vm1243, %v1484
      %1493 = vst.msk [vmem:[#allocation5 + $0x18] sm:$0xff] %vm1243, %v1485
      %1494 = vst.msk [vmem:[#allocation5 + $0x20] sm:$0xff] %vm1243, %v1486
      %1495 = vst.msk [vmem:[#allocation5 + $0x28] sm:$0xff] %vm1243, %v1487
      %1496 = vst.msk [vmem:[#allocation5 + $0x30] sm:$0xff] %vm1243, %v1488
      %1497 = vst.msk [vmem:[#allocation5 + $0x38] sm:$0xff] %vm1243, %v1489
      %v1498 = vld [vmem:[#allocation3] sm:$0xf]
      %v1499 = vld [vmem:[#allocation3 + $0x4] sm:$0x1]
      %v1500 = vld [vmem:[#allocation3 + $0x8] sm:$0xf]
      %v1501 = vld [vmem:[#allocation3 + $0xc] sm:$0x1]
      %v1502 = vld [vmem:[#allocation3 + $0x10] sm:$0xf]
      %v1503 = vld [vmem:[#allocation3 + $0x14] sm:$0x1]
      %v1504 = vld [vmem:[#allocation3 + $0x18] sm:$0xf]
      %v1505 = vld [vmem:[#allocation3 + $0x1c] sm:$0x1]
      %v1506 = vld [vmem:[#allocation3 + $0x20] sm:$0xf]
      %v1507 = vld [vmem:[#allocation3 + $0x24] sm:$0x1]
      %v1508 = vld [vmem:[#allocation3 + $0x28] sm:$0xf]
      %v1509 = vld [vmem:[#allocation3 + $0x2c] sm:$0x1]
      %v1510 = vld [vmem:[#allocation3 + $0x30] sm:$0xf]
      %v1511 = vld [vmem:[#allocation3 + $0x34] sm:$0x1]
      %v1512 = vld [vmem:[#allocation3 + $0x38] sm:$0xf]
      %v1513 = vld [vmem:[#allocation3 + $0x3c] sm:$0x1]
      %vm1514 = vsmask.f32 3328
      %vm1515 = vsmask.f32 7440
      %vm1516 = vmor %vm1514, %vm1515
      %v1518 = vshrl.u32 %v1498, 16
      %v1520 = vrot.slane %v1518, 4
      %v1521 = vshll.u32 %v1498, 16
      %v1523 = vrot.slane %v1521, 5
      %v1524 = vor.u32 %v1520, %v1523
      %v1525 = vrot.slane %v1524, 4
      %v1527 = vshll.u32 %v1499, 16
      %v1529 = vrot.slane %v1527, 5
      %v1530 = vsel %vm1516, %v1525, %v1529
      %v1532 = vshrl.u32 %v1500, 16
      %v1534 = vrot.slane %v1532, 4
      %v1535 = vshll.u32 %v1500, 16
      %v1537 = vrot.slane %v1535, 5
      %v1538 = vor.u32 %v1534, %v1537
      %v1539 = vrot.slane %v1538, 4
      %v1541 = vshll.u32 %v1501, 16
      %v1543 = vrot.slane %v1541, 5
      %v1544 = vsel %vm1516, %v1539, %v1543
      %v1546 = vshrl.u32 %v1502, 16
      %v1548 = vrot.slane %v1546, 4
      %v1549 = vshll.u32 %v1502, 16
      %v1551 = vrot.slane %v1549, 5
      %v1552 = vor.u32 %v1548, %v1551
      %v1553 = vrot.slane %v1552, 4
      %v1555 = vshll.u32 %v1503, 16
      %v1557 = vrot.slane %v1555, 5
      %v1558 = vsel %vm1516, %v1553, %v1557
      %v1560 = vshrl.u32 %v1504, 16
      %v1562 = vrot.slane %v1560, 4
      %v1563 = vshll.u32 %v1504, 16
      %v1565 = vrot.slane %v1563, 5
      %v1566 = vor.u32 %v1562, %v1565
      %v1567 = vrot.slane %v1566, 4
      %v1569 = vshll.u32 %v1505, 16
      %v1571 = vrot.slane %v1569, 5
      %v1572 = vsel %vm1516, %v1567, %v1571
      %v1574 = vshrl.u32 %v1506, 16
      %v1576 = vrot.slane %v1574, 4
      %v1577 = vshll.u32 %v1506, 16
      %v1579 = vrot.slane %v1577, 5
      %v1580 = vor.u32 %v1576, %v1579
      %v1581 = vrot.slane %v1580, 4
      %v1583 = vshll.u32 %v1507, 16
      %v1585 = vrot.slane %v1583, 5
      %v1586 = vsel %vm1516, %v1581, %v1585
      %v1588 = vshrl.u32 %v1508, 16
      %v1590 = vrot.slane %v1588, 4
      %v1591 = vshll.u32 %v1508, 16
      %v1593 = vrot.slane %v1591, 5
      %v1594 = vor.u32 %v1590, %v1593
      %v1595 = vrot.slane %v1594, 4
      %v1597 = vshll.u32 %v1509, 16
      %v1599 = vrot.slane %v1597, 5
      %v1600 = vsel %vm1516, %v1595, %v1599
      %v1602 = vshrl.u32 %v1510, 16
      %v1604 = vrot.slane %v1602, 4
      %v1605 = vshll.u32 %v1510, 16
      %v1607 = vrot.slane %v1605, 5
      %v1608 = vor.u32 %v1604, %v1607
      %v1609 = vrot.slane %v1608, 4
      %v1611 = vshll.u32 %v1511, 16
      %v1613 = vrot.slane %v1611, 5
      %v1614 = vsel %vm1516, %v1609, %v1613
      %v1616 = vshrl.u32 %v1512, 16
      %v1618 = vrot.slane %v1616, 4
      %v1619 = vshll.u32 %v1512, 16
      %v1621 = vrot.slane %v1619, 5
      %v1622 = vor.u32 %v1618, %v1621
      %v1623 = vrot.slane %v1622, 4
      %v1625 = vshll.u32 %v1513, 16
      %v1627 = vrot.slane %v1625, 5
      %v1628 = vsel %vm1516, %v1623, %v1627
      %v1629 = vld [vmem:[#allocation4] sm:$0xf]
      %v1630 = vld [vmem:[#allocation4 + $0x4] sm:$0x1]
      %v1631 = vld [vmem:[#allocation4 + $0x8] sm:$0xf]
      %v1632 = vld [vmem:[#allocation4 + $0xc] sm:$0x1]
      %v1633 = vld [vmem:[#allocation4 + $0x10] sm:$0xf]
      %v1634 = vld [vmem:[#allocation4 + $0x14] sm:$0x1]
      %v1635 = vld [vmem:[#allocation4 + $0x18] sm:$0xf]
      %v1636 = vld [vmem:[#allocation4 + $0x1c] sm:$0x1]
      %v1637 = vld [vmem:[#allocation4 + $0x20] sm:$0xf]
      %v1638 = vld [vmem:[#allocation4 + $0x24] sm:$0x1]
      %v1639 = vld [vmem:[#allocation4 + $0x28] sm:$0xf]
      %v1640 = vld [vmem:[#allocation4 + $0x2c] sm:$0x1]
      %v1641 = vld [vmem:[#allocation4 + $0x30] sm:$0xf]
      %v1642 = vld [vmem:[#allocation4 + $0x34] sm:$0x1]
      %v1643 = vld [vmem:[#allocation4 + $0x38] sm:$0xf]
      %v1644 = vld [vmem:[#allocation4 + $0x3c] sm:$0x1]
      %v1646 = vshrl.u32 %v1629, 16
      %v1648 = vrot.slane %v1646, 4
      %v1649 = vshll.u32 %v1629, 16
      %v1651 = vrot.slane %v1649, 5
      %v1652 = vor.u32 %v1648, %v1651
      %v1653 = vrot.slane %v1652, 4
      %v1655 = vshll.u32 %v1630, 16
      %v1657 = vrot.slane %v1655, 5
      %v1658 = vsel %vm1516, %v1653, %v1657
      %v1660 = vshrl.u32 %v1631, 16
      %v1662 = vrot.slane %v1660, 4
      %v1663 = vshll.u32 %v1631, 16
      %v1665 = vrot.slane %v1663, 5
      %v1666 = vor.u32 %v1662, %v1665
      %v1667 = vrot.slane %v1666, 4
      %v1669 = vshll.u32 %v1632, 16
      %v1671 = vrot.slane %v1669, 5
      %v1672 = vsel %vm1516, %v1667, %v1671
      %v1674 = vshrl.u32 %v1633, 16
      %v1676 = vrot.slane %v1674, 4
      %v1677 = vshll.u32 %v1633, 16
      %v1679 = vrot.slane %v1677, 5
      %v1680 = vor.u32 %v1676, %v1679
      %v1681 = vrot.slane %v1680, 4
      %v1683 = vshll.u32 %v1634, 16
      %v1685 = vrot.slane %v1683, 5
      %v1686 = vsel %vm1516, %v1681, %v1685
      %v1688 = vshrl.u32 %v1635, 16
      %v1690 = vrot.slane %v1688, 4
      %v1691 = vshll.u32 %v1635, 16
      %v1693 = vrot.slane %v1691, 5
      %v1694 = vor.u32 %v1690, %v1693
      %v1695 = vrot.slane %v1694, 4
      %v1697 = vshll.u32 %v1636, 16
      %v1699 = vrot.slane %v1697, 5
      %v1700 = vsel %vm1516, %v1695, %v1699
      %v1702 = vshrl.u32 %v1637, 16
      %v1704 = vrot.slane %v1702, 4
      %v1705 = vshll.u32 %v1637, 16
      %v1707 = vrot.slane %v1705, 5
      %v1708 = vor.u32 %v1704, %v1707
      %v1709 = vrot.slane %v1708, 4
      %v1711 = vshll.u32 %v1638, 16
      %v1713 = vrot.slane %v1711, 5
      %v1714 = vsel %vm1516, %v1709, %v1713
      %v1716 = vshrl.u32 %v1639, 16
      %v1718 = vrot.slane %v1716, 4
      %v1719 = vshll.u32 %v1639, 16
      %v1721 = vrot.slane %v1719, 5
      %v1722 = vor.u32 %v1718, %v1721
      %v1723 = vrot.slane %v1722, 4
      %v1725 = vshll.u32 %v1640, 16
      %v1727 = vrot.slane %v1725, 5
      %v1728 = vsel %vm1516, %v1723, %v1727
      %v1730 = vshrl.u32 %v1641, 16
      %v1732 = vrot.slane %v1730, 4
      %v1733 = vshll.u32 %v1641, 16
      %v1735 = vrot.slane %v1733, 5
      %v1736 = vor.u32 %v1732, %v1735
      %v1737 = vrot.slane %v1736, 4
      %v1739 = vshll.u32 %v1642, 16
      %v1741 = vrot.slane %v1739, 5
      %v1742 = vsel %vm1516, %v1737, %v1741
      %v1744 = vshrl.u32 %v1643, 16
      %v1746 = vrot.slane %v1744, 4
      %v1747 = vshll.u32 %v1643, 16
      %v1749 = vrot.slane %v1747, 5
      %v1750 = vor.u32 %v1746, %v1749
      %v1751 = vrot.slane %v1750, 4
      %v1753 = vshll.u32 %v1644, 16
      %v1755 = vrot.slane %v1753, 5
      %v1756 = vsel %vm1516, %v1751, %v1755
      %v1757 = vld [vmem:[#allocation5] sm:$0xff]
      %v1758 = vld [vmem:[#allocation5 + $0x8] sm:$0xff]
      %v1759 = vld [vmem:[#allocation5 + $0x10] sm:$0xff]
      %v1760 = vld [vmem:[#allocation5 + $0x18] sm:$0xff]
      %v1761 = vld [vmem:[#allocation5 + $0x20] sm:$0xff]
      %v1762 = vld [vmem:[#allocation5 + $0x28] sm:$0xff]
      %v1763 = vld [vmem:[#allocation5 + $0x30] sm:$0xff]
      %v1764 = vld [vmem:[#allocation5 + $0x38] sm:$0xff]
      %s1765 = scalar_lea.vmem %s8, 8
      %v1766 = vld [vmem:[%s1765] sm:$0xf]
      %v1767 = vld [vmem:[%s1765 + $0x4] sm:$0xf]
      %s1768 = scalar_lea.vmem %s9, 4
      %v1769 = vld [vmem:[%s1768] sm:$0xf]
      %v1770 = vunpack.c.l.b16 %v1658
      %v1771 = vunpack.c.l.b16 %v1672
      %v1772 = vunpack.c.l.b16 %v1686
      %v1773 = vunpack.c.l.b16 %v1700
      %v1774 = vunpack.c.l.b16 %v1714
      %v1775 = vunpack.c.l.b16 %v1728
      %v1776 = vunpack.c.l.b16 %v1742
      %v1777 = vunpack.c.l.b16 %v1756
      %v1778 = vpack.c.b16 %v1771, %v1770
      %v1779 = vpack.c.b16 %v1773, %v1772
      %v1780 = vpack.c.b16 %v1775, %v1774
      %v1781 = vpack.c.b16 %v1777, %v1776
      %v1783 = vsel %vm491, %v1778, 0
      %v1786 = vsel %vm491, %v1779, 0
      %v1789 = vsel %vm491, %v1780, 0
      %v1792 = vsel %vm491, %v1781, 0
      %v1795 = vsel %vm504, %v1769, 0
      %1797 = vmatprep.subr.bf16.mxu0 0
      %1798 = vmatpush1.bf16.msra.mxu0 %v1795
      %1799 = vmatprep.subr.bf16.mxu0 0
      %1800 = vmatpush1.bf16.msra.mxu0 0
      %1801 = vmatprep.subr.bf16.mxu0 0
      %1802 = vmatpush1.bf16.msra.mxu0 0
      %1803 = vmatprep.subr.bf16.mxu0 0
      %1804 = vmatpush1.bf16.msra.mxu0 0
      %1805 = vmatprep.subr.bf16.mxu0 0
      %1806 = vmatpush1.bf16.msra.mxu0 0
      %1807 = vmatprep.subr.bf16.mxu0 0
      %1808 = vmatpush1.bf16.msra.mxu0 0
      %1809 = vmatprep.subr.bf16.mxu0 0
      %1810 = vmatpush1.bf16.msra.mxu0 0
      %1811 = vmatprep.subr.bf16.mxu0 0
      %1812 = vmatpush1.bf16.msra.mxu0 0
      %1813 = vmatprep.subr.bf16.mxu0 0
      %1814 = vmatpush1.bf16.msra.mxu0 0
      %1815 = vmatprep.subr.bf16.mxu0 0
      %1816 = vmatpush1.bf16.msra.mxu0 0
      %1817 = vmatprep.subr.bf16.mxu0 0
      %1818 = vmatpush1.bf16.msra.mxu0 0
      %1819 = vmatprep.subr.bf16.mxu0 0
      %1820 = vmatpush1.bf16.msra.mxu0 0
      %1821 = vmatprep.subr.bf16.mxu0 0
      %1822 = vmatpush1.bf16.msra.mxu0 0
      %1823 = vmatprep.subr.bf16.mxu0 0
      %1824 = vmatpush1.bf16.msra.mxu0 0
      %1825 = vmatprep.subr.bf16.mxu0 0
      %1826 = vmatpush1.bf16.msra.mxu0 0
      %1827 = vmatprep.subr.bf16.mxu0 0
      %1828 = vmatpush1.bf16.msra.mxu0 0
      %1829 = vmatprep.mubr.bf16.mxu0 0
      %1830 = vmatmul.mubr.bf16.gmra.mrb[0].mxu0 %v1783
      %v1831 = vpop.f32.mrb[0].mxu0
      %v1832 = vadd.f32 0.0, %v1831
      %v1833 = vpop.f32.mrb[0].mxu0
      %v1834 = vpop.f32.mrb[0].mxu0
      %v1835 = vadd.f32 0.0, %v1834
      %v1836 = vpop.f32.mrb[0].mxu0
      %1837 = vmatprep.mubr.bf16.mxu0 0
      %1838 = vmatmul.mubr.bf16.gmra.mrb[0].mxu0 %v1786
      %v1839 = vpop.f32.mrb[0].mxu0
      %v1840 = vadd.f32 0.0, %v1839
      %v1841 = vpop.f32.mrb[0].mxu0
      %v1842 = vpop.f32.mrb[0].mxu0
      %v1843 = vadd.f32 0.0, %v1842
      %v1844 = vpop.f32.mrb[0].mxu0
      %1845 = vmatprep.mubr.bf16.mxu0 0
      %1846 = vmatmul.mubr.bf16.gmra.mrb[0].mxu0 %v1789
      %v1847 = vpop.f32.mrb[0].mxu0
      %v1848 = vadd.f32 0.0, %v1847
      %v1849 = vpop.f32.mrb[0].mxu0
      %v1850 = vpop.f32.mrb[0].mxu0
      %v1851 = vadd.f32 0.0, %v1850
      %v1852 = vpop.f32.mrb[0].mxu0
      %1853 = vmatprep.mubr.bf16.mxu0 0
      %1854 = vmatmul.mubr.bf16.gmra.mrb[0].mxu0 %v1792
      %v1855 = vpop.f32.mrb[0].mxu0
      %v1856 = vadd.f32 0.0, %v1855
      %v1857 = vpop.f32.mrb[0].mxu0
      %v1858 = vpop.f32.mrb[0].mxu0
      %v1859 = vadd.f32 0.0, %v1858
      %v1860 = vpop.f32.mrb[0].mxu0
      %1861 = vdwg.mxu0
      %v1862 = vunpack.c.l.b16 %v1530
      %v1863 = vunpack.c.l.b16 %v1544
      %v1864 = vunpack.c.l.b16 %v1558
      %v1865 = vunpack.c.l.b16 %v1572
      %v1866 = vunpack.c.l.b16 %v1586
      %v1867 = vunpack.c.l.b16 %v1600
      %v1868 = vunpack.c.l.b16 %v1614
      %v1869 = vunpack.c.l.b16 %v1628
      %v1870 = vpack.c.b16 %v1863, %v1862
      %v1871 = vpack.c.b16 %v1865, %v1864
      %v1872 = vpack.c.b16 %v1867, %v1866
      %v1873 = vpack.c.b16 %v1869, %v1868
      %v1876 = vunpack.c.l.b16 %v1766
      %v1877 = vunpack.c.l.b16 %v1767
      %v1878 = vpack.c.b16 %v1877, %v1876
      %v1881 = vsel %vm573, %v1870, 0
      %v1884 = vsel %vm573, %v1871, 0
      %v1887 = vsel %vm573, %v1872, 0
      %v1890 = vsel %vm573, %v1873, 0
      %1892 = vmatprep.subr.bf16.mxu0 0
      %1893 = vmatpush1.bf16.msra.mxu0 %v1878
      %1894 = vmatprep.subr.bf16.mxu0 0
      %1895 = vmatpush1.bf16.msra.mxu0 0
      %1896 = vmatprep.subr.bf16.mxu0 0
      %1897 = vmatpush1.bf16.msra.mxu0 0
      %1898 = vmatprep.subr.bf16.mxu0 0
      %1899 = vmatpush1.bf16.msra.mxu0 0
      %1900 = vmatprep.subr.bf16.mxu0 0
      %1901 = vmatpush1.bf16.msra.mxu0 0
      %1902 = vmatprep.subr.bf16.mxu0 0
      %1903 = vmatpush1.bf16.msra.mxu0 0
      %1904 = vmatprep.subr.bf16.mxu0 0
      %1905 = vmatpush1.bf16.msra.mxu0 0
      %1906 = vmatprep.subr.bf16.mxu0 0
      %1907 = vmatpush1.bf16.msra.mxu0 0
      %1908 = vmatprep.subr.bf16.mxu0 0
      %1909 = vmatpush1.bf16.msra.mxu0 0
      %1910 = vmatprep.subr.bf16.mxu0 0
      %1911 = vmatpush1.bf16.msra.mxu0 0
      %1912 = vmatprep.subr.bf16.mxu0 0
      %1913 = vmatpush1.bf16.msra.mxu0 0
      %1914 = vmatprep.subr.bf16.mxu0 0
      %1915 = vmatpush1.bf16.msra.mxu0 0
      %1916 = vmatprep.subr.bf16.mxu0 0
      %1917 = vmatpush1.bf16.msra.mxu0 0
      %1918 = vmatprep.subr.bf16.mxu0 0
      %1919 = vmatpush1.bf16.msra.mxu0 0
      %1920 = vmatprep.subr.bf16.mxu0 0
      %1921 = vmatpush1.bf16.msra.mxu0 0
      %1922 = vmatprep.subr.bf16.mxu0 0
      %1923 = vmatpush1.bf16.msra.mxu0 0
      %1924 = vmatprep.mubr.bf16.mxu0 0
      %1925 = vmatmul.mubr.bf16.gmra.mrb[0].mxu0 %v1881
      %v1926 = vpop.f32.mrb[0].mxu0
      %v1927 = vadd.f32 %v1832, %v1926
      %v1928 = vpop.f32.mrb[0].mxu0
      %v1929 = vpop.f32.mrb[0].mxu0
      %v1930 = vadd.f32 %v1835, %v1929
      %v1931 = vpop.f32.mrb[0].mxu0
      %1932 = vmatprep.mubr.bf16.mxu0 0
      %1933 = vmatmul.mubr.bf16.gmra.mrb[0].mxu0 %v1884
      %v1934 = vpop.f32.mrb[0].mxu0
      %v1935 = vadd.f32 %v1840, %v1934
      %v1936 = vpop.f32.mrb[0].mxu0
      %v1937 = vpop.f32.mrb[0].mxu0
      %v1938 = vadd.f32 %v1843, %v1937
      %v1939 = vpop.f32.mrb[0].mxu0
      %1940 = vmatprep.mubr.bf16.mxu0 0
      %1941 = vmatmul.mubr.bf16.gmra.mrb[0].mxu0 %v1887
      %v1942 = vpop.f32.mrb[0].mxu0
      %v1943 = vadd.f32 %v1848, %v1942
      %v1944 = vpop.f32.mrb[0].mxu0
      %v1945 = vpop.f32.mrb[0].mxu0
      %v1946 = vadd.f32 %v1851, %v1945
      %v1947 = vpop.f32.mrb[0].mxu0
      %1948 = vmatprep.mubr.bf16.mxu0 0
      %1949 = vmatmul.mubr.bf16.gmra.mrb[0].mxu0 %v1890
      %v1950 = vpop.f32.mrb[0].mxu0
      %v1951 = vadd.f32 %v1856, %v1950
      %v1952 = vpop.f32.mrb[0].mxu0
      %v1953 = vpop.f32.mrb[0].mxu0
      %v1954 = vadd.f32 %v1859, %v1953
      %v1955 = vpop.f32.mrb[0].mxu0
      %1956 = vdwg.mxu0
      %v1957 = vadd.f32 %v1757, %v1927
      %v1958 = vadd.f32 %v1758, %v1930
      %v1959 = vadd.f32 %v1759, %v1935
      %v1960 = vadd.f32 %v1760, %v1938
      %v1961 = vadd.f32 %v1761, %v1943
      %v1962 = vadd.f32 %v1762, %v1946
      %v1963 = vadd.f32 %v1763, %v1951
      %v1964 = vadd.f32 %v1764, %v1954
      %1965 = vst.msk [vmem:[#allocation5] sm:$0xff] %vm1243, %v1957
      %1966 = vst.msk [vmem:[#allocation5 + $0x8] sm:$0xff] %vm1243, %v1958
      %1967 = vst.msk [vmem:[#allocation5 + $0x10] sm:$0xff] %vm1243, %v1959
      %1968 = vst.msk [vmem:[#allocation5 + $0x18] sm:$0xff] %vm1243, %v1960
      %1969 = vst.msk [vmem:[#allocation5 + $0x20] sm:$0xff] %vm1243, %v1961
      %1970 = vst.msk [vmem:[#allocation5 + $0x28] sm:$0xff] %vm1243, %v1962
      %1971 = vst.msk [vmem:[#allocation5 + $0x30] sm:$0xff] %vm1243, %v1963
      %1972 = vst.msk [vmem:[#allocation5 + $0x38] sm:$0xff] %vm1243, %v1964
      %v1973 = vld [vmem:[#allocation3] sm:$0xe]
      %v1974 = vld [vmem:[#allocation3 + $0x4] sm:$0x1]
      %v1975 = vld [vmem:[#allocation3 + $0x8] sm:$0xe]
      %v1976 = vld [vmem:[#allocation3 + $0xc] sm:$0x1]
      %v1977 = vld [vmem:[#allocation3 + $0x10] sm:$0xe]
      %v1978 = vld [vmem:[#allocation3 + $0x14] sm:$0x1]
      %v1979 = vld [vmem:[#allocation3 + $0x18] sm:$0xe]
      %v1980 = vld [vmem:[#allocation3 + $0x1c] sm:$0x1]
      %v1981 = vld [vmem:[#allocation3 + $0x20] sm:$0xe]
      %v1982 = vld [vmem:[#allocation3 + $0x24] sm:$0x1]
      %v1983 = vld [vmem:[#allocation3 + $0x28] sm:$0xe]
      %v1984 = vld [vmem:[#allocation3 + $0x2c] sm:$0x1]
      %v1985 = vld [vmem:[#allocation3 + $0x30] sm:$0xe]
      %v1986 = vld [vmem:[#allocation3 + $0x34] sm:$0x1]
      %v1987 = vld [vmem:[#allocation3 + $0x38] sm:$0xe]
      %v1988 = vld [vmem:[#allocation3 + $0x3c] sm:$0x1]
      %vm2005 = vcmask 1042432
      %vm2006 = vcmask 1046532
      %vm2007 = vmor %vm2005, %vm2006
      %v2008 = vrot.slane %v1973, 5
      %v2009 = vrot.slane %v2008, 4
      %v2010 = vrot.slane %v1974, 5
      %v2011 = vsel %vm2007, %v2009, %v2010
      %v2012 = vrot.slane %v1975, 5
      %v2013 = vrot.slane %v2012, 4
      %v2014 = vrot.slane %v1976, 5
      %v2015 = vsel %vm2007, %v2013, %v2014
      %v2016 = vrot.slane %v1977, 5
      %v2017 = vrot.slane %v2016, 4
      %v2018 = vrot.slane %v1978, 5
      %v2019 = vsel %vm2007, %v2017, %v2018
      %v2020 = vrot.slane %v1979, 5
      %v2021 = vrot.slane %v2020, 4
      %v2022 = vrot.slane %v1980, 5
      %v2023 = vsel %vm2007, %v2021, %v2022
      %v2024 = vrot.slane %v1981, 5
      %v2025 = vrot.slane %v2024, 4
      %v2026 = vrot.slane %v1982, 5
      %v2027 = vsel %vm2007, %v2025, %v2026
      %v2028 = vrot.slane %v1983, 5
      %v2029 = vrot.slane %v2028, 4
      %v2030 = vrot.slane %v1984, 5
      %v2031 = vsel %vm2007, %v2029, %v2030
      %v2032 = vrot.slane %v1985, 5
      %v2033 = vrot.slane %v2032, 4
      %v2034 = vrot.slane %v1986, 5
      %v2035 = vsel %vm2007, %v2033, %v2034
      %v2036 = vrot.slane %v1987, 5
      %v2037 = vrot.slane %v2036, 4
      %v2038 = vrot.slane %v1988, 5
      %v2039 = vsel %vm2007, %v2037, %v2038
      %v2040 = vld [vmem:[#allocation4] sm:$0xe]
      %v2041 = vld [vmem:[#allocation4 + $0x4] sm:$0x1]
      %v2042 = vld [vmem:[#allocation4 + $0x8] sm:$0xe]
      %v2043 = vld [vmem:[#allocation4 + $0xc] sm:$0x1]
      %v2044 = vld [vmem:[#allocation4 + $0x10] sm:$0xe]
      %v2045 = vld [vmem:[#allocation4 + $0x14] sm:$0x1]
      %v2046 = vld [vmem:[#allocation4 + $0x18] sm:$0xe]
      %v2047 = vld [vmem:[#allocation4 + $0x1c] sm:$0x1]
      %v2048 = vld [vmem:[#allocation4 + $0x20] sm:$0xe]
      %v2049 = vld [vmem:[#allocation4 + $0x24] sm:$0x1]
      %v2050 = vld [vmem:[#allocation4 + $0x28] sm:$0xe]
      %v2051 = vld [vmem:[#allocation4 + $0x2c] sm:$0x1]
      %v2052 = vld [vmem:[#allocation4 + $0x30] sm:$0xe]
      %v2053 = vld [vmem:[#allocation4 + $0x34] sm:$0x1]
      %v2054 = vld [vmem:[#allocation4 + $0x38] sm:$0xe]
      %v2055 = vld [vmem:[#allocation4 + $0x3c] sm:$0x1]
      %v2072 = vrot.slane %v2040, 5
      %v2073 = vrot.slane %v2072, 4
      %v2074 = vrot.slane %v2041, 5
      %v2075 = vsel %vm2007, %v2073, %v2074
      %v2076 = vrot.slane %v2042, 5
      %v2077 = vrot.slane %v2076, 4
      %v2078 = vrot.slane %v2043, 5
      %v2079 = vsel %vm2007, %v2077, %v2078
      %v2080 = vrot.slane %v2044, 5
      %v2081 = vrot.slane %v2080, 4
      %v2082 = vrot.slane %v2045, 5
      %v2083 = vsel %vm2007, %v2081, %v2082
      %v2084 = vrot.slane %v2046, 5
      %v2085 = vrot.slane %v2084, 4
      %v2086 = vrot.slane %v2047, 5
      %v2087 = vsel %vm2007, %v2085, %v2086
      %v2088 = vrot.slane %v2048, 5
      %v2089 = vrot.slane %v2088, 4
      %v2090 = vrot.slane %v2049, 5
      %v2091 = vsel %vm2007, %v2089, %v2090
      %v2092 = vrot.slane %v2050, 5
      %v2093 = vrot.slane %v2092, 4
      %v2094 = vrot.slane %v2051, 5
      %v2095 = vsel %vm2007, %v2093, %v2094
      %v2096 = vrot.slane %v2052, 5
      %v2097 = vrot.slane %v2096, 4
      %v2098 = vrot.slane %v2053, 5
      %v2099 = vsel %vm2007, %v2097, %v2098
      %v2100 = vrot.slane %v2054, 5
      %v2101 = vrot.slane %v2100, 4
      %v2102 = vrot.slane %v2055, 5
      %v2103 = vsel %vm2007, %v2101, %v2102
      %v2104 = vld [vmem:[#allocation5] sm:$0xff]
      %v2105 = vld [vmem:[#allocation5 + $0x8] sm:$0xff]
      %v2106 = vld [vmem:[#allocation5 + $0x10] sm:$0xff]
      %v2107 = vld [vmem:[#allocation5 + $0x18] sm:$0xff]
      %v2108 = vld [vmem:[#allocation5 + $0x20] sm:$0xff]
      %v2109 = vld [vmem:[#allocation5 + $0x28] sm:$0xff]
      %v2110 = vld [vmem:[#allocation5 + $0x30] sm:$0xff]
      %v2111 = vld [vmem:[#allocation5 + $0x38] sm:$0xff]
      %s2112 = scalar_lea.vmem %s8, 16
      %v2113 = vld [vmem:[%s2112] sm:$0xf]
      %v2114 = vld [vmem:[%s2112 + $0x4] sm:$0xf]
      %s2115 = scalar_lea.vmem %s9, 8
      %v2116 = vld [vmem:[%s2115] sm:$0xf]
      %v2117 = vunpack.c.l.b16 %v2075
      %v2118 = vunpack.c.l.b16 %v2079
      %v2119 = vunpack.c.l.b16 %v2083
      %v2120 = vunpack.c.l.b16 %v2087
      %v2121 = vunpack.c.l.b16 %v2091
      %v2122 = vunpack.c.l.b16 %v2095
      %v2123 = vunpack.c.l.b16 %v2099
      %v2124 = vunpack.c.l.b16 %v2103
      %v2125 = vpack.c.b16 %v2118, %v2117
      %v2126 = vpack.c.b16 %v2120, %v2119
      %v2127 = vpack.c.b16 %v2122, %v2121
      %v2128 = vpack.c.b16 %v2124, %v2123
      %v2130 = vsel %vm491, %v2125, 0
      %v2133 = vsel %vm491, %v2126, 0
      %v2136 = vsel %vm491, %v2127, 0
      %v2139 = vsel %vm491, %v2128, 0
      %v2142 = vsel %vm504, %v2116, 0
      %2144 = vmatprep.subr.bf16.mxu0 0
      %2145 = vmatpush1.bf16.msra.mxu0 %v2142
      %2146 = vmatprep.subr.bf16.mxu0 0
      %2147 = vmatpush1.bf16.msra.mxu0 0
      %2148 = vmatprep.subr.bf16.mxu0 0
      %2149 = vmatpush1.bf16.msra.mxu0 0
      %2150 = vmatprep.subr.bf16.mxu0 0
      %2151 = vmatpush1.bf16.msra.mxu0 0
      %2152 = vmatprep.subr.bf16.mxu0 0
      %2153 = vmatpush1.bf16.msra.mxu0 0
      %2154 = vmatprep.subr.bf16.mxu0 0
      %2155 = vmatpush1.bf16.msra.mxu0 0
      %2156 = vmatprep.subr.bf16.mxu0 0
      %2157 = vmatpush1.bf16.msra.mxu0 0
      %2158 = vmatprep.subr.bf16.mxu0 0
      %2159 = vmatpush1.bf16.msra.mxu0 0
      %2160 = vmatprep.subr.bf16.mxu0 0
      %2161 = vmatpush1.bf16.msra.mxu0 0
      %2162 = vmatprep.subr.bf16.mxu0 0
      %2163 = vmatpush1.bf16.msra.mxu0 0
      %2164 = vmatprep.subr.bf16.mxu0 0
      %2165 = vmatpush1.bf16.msra.mxu0 0
      %2166 = vmatprep.subr.bf16.mxu0 0
      %2167 = vmatpush1.bf16.msra.mxu0 0
      %2168 = vmatprep.subr.bf16.mxu0 0
      %2169 = vmatpush1.bf16.msra.mxu0 0
      %2170 = vmatprep.subr.bf16.mxu0 0
      %2171 = vmatpush1.bf16.msra.mxu0 0
      %2172 = vmatprep.subr.bf16.mxu0 0
      %2173 = vmatpush1.bf16.msra.mxu0 0
      %2174 = vmatprep.subr.bf16.mxu0 0
      %2175 = vmatpush1.bf16.msra.mxu0 0
      %2176 = vmatprep.mubr.bf16.mxu0 0
      %2177 = vmatmul.mubr.bf16.gmra.mrb[0].mxu0 %v2130
      %v2178 = vpop.f32.mrb[0].mxu0
      %v2179 = vadd.f32 0.0, %v2178
      %v2180 = vpop.f32.mrb[0].mxu0
      %v2181 = vpop.f32.mrb[0].mxu0
      %v2182 = vadd.f32 0.0, %v2181
      %v2183 = vpop.f32.mrb[0].mxu0
      %2184 = vmatprep.mubr.bf16.mxu0 0
      %2185 = vmatmul.mubr.bf16.gmra.mrb[0].mxu0 %v2133
      %v2186 = vpop.f32.mrb[0].mxu0
      %v2187 = vadd.f32 0.0, %v2186
      %v2188 = vpop.f32.mrb[0].mxu0
      %v2189 = vpop.f32.mrb[0].mxu0
      %v2190 = vadd.f32 0.0, %v2189
      %v2191 = vpop.f32.mrb[0].mxu0
      %2192 = vmatprep.mubr.bf16.mxu0 0
      %2193 = vmatmul.mubr.bf16.gmra.mrb[0].mxu0 %v2136
      %v2194 = vpop.f32.mrb[0].mxu0
      %v2195 = vadd.f32 0.0, %v2194
      %v2196 = vpop.f32.mrb[0].mxu0
      %v2197 = vpop.f32.mrb[0].mxu0
      %v2198 = vadd.f32 0.0, %v2197
      %v2199 = vpop.f32.mrb[0].mxu0
      %2200 = vmatprep.mubr.bf16.mxu0 0
      %2201 = vmatmul.mubr.bf16.gmra.mrb[0].mxu0 %v2139
      %v2202 = vpop.f32.mrb[0].mxu0
      %v2203 = vadd.f32 0.0, %v2202
      %v2204 = vpop.f32.mrb[0].mxu0
      %v2205 = vpop.f32.mrb[0].mxu0
      %v2206 = vadd.f32 0.0, %v2205
      %v2207 = vpop.f32.mrb[0].mxu0
      %2208 = vdwg.mxu0
      %v2209 = vunpack.c.l.b16 %v2011
      %v2210 = vunpack.c.l.b16 %v2015
      %v2211 = vunpack.c.l.b16 %v2019
      %v2212 = vunpack.c.l.b16 %v2023
      %v2213 = vunpack.c.l.b16 %v2027
      %v2214 = vunpack.c.l.b16 %v2031
      %v2215 = vunpack.c.l.b16 %v2035
      %v2216 = vunpack.c.l.b16 %v2039
      %v2217 = vpack.c.b16 %v2210, %v2209
      %v2218 = vpack.c.b16 %v2212, %v2211
      %v2219 = vpack.c.b16 %v2214, %v2213
      %v2220 = vpack.c.b16 %v2216, %v2215
      %v2223 = vunpack.c.l.b16 %v2113
      %v2224 = vunpack.c.l.b16 %v2114
      %v2225 = vpack.c.b16 %v2224, %v2223
      %v2228 = vsel %vm573, %v2217, 0
      %v2231 = vsel %vm573, %v2218, 0
      %v2234 = vsel %vm573, %v2219, 0
      %v2237 = vsel %vm573, %v2220, 0
      %2239 = vmatprep.subr.bf16.mxu0 0
      %2240 = vmatpush1.bf16.msra.mxu0 %v2225
      %2241 = vmatprep.subr.bf16.mxu0 0
      %2242 = vmatpush1.bf16.msra.mxu0 0
      %2243 = vmatprep.subr.bf16.mxu0 0
      %2244 = vmatpush1.bf16.msra.mxu0 0
      %2245 = vmatprep.subr.bf16.mxu0 0
      %2246 = vmatpush1.bf16.msra.mxu0 0
      %2247 = vmatprep.subr.bf16.mxu0 0
      %2248 = vmatpush1.bf16.msra.mxu0 0
      %2249 = vmatprep.subr.bf16.mxu0 0
      %2250 = vmatpush1.bf16.msra.mxu0 0
      %2251 = vmatprep.subr.bf16.mxu0 0
      %2252 = vmatpush1.bf16.msra.mxu0 0
      %2253 = vmatprep.subr.bf16.mxu0 0
      %2254 = vmatpush1.bf16.msra.mxu0 0
      %2255 = vmatprep.subr.bf16.mxu0 0
      %2256 = vmatpush1.bf16.msra.mxu0 0
      %2257 = vmatprep.subr.bf16.mxu0 0
      %2258 = vmatpush1.bf16.msra.mxu0 0
      %2259 = vmatprep.subr.bf16.mxu0 0
      %2260 = vmatpush1.bf16.msra.mxu0 0
      %2261 = vmatprep.subr.bf16.mxu0 0
      %2262 = vmatpush1.bf16.msra.mxu0 0
      %2263 = vmatprep.subr.bf16.mxu0 0
      %2264 = vmatpush1.bf16.msra.mxu0 0
      %2265 = vmatprep.subr.bf16.mxu0 0
      %2266 = vmatpush1.bf16.msra.mxu0 0
      %2267 = vmatprep.subr.bf16.mxu0 0
      %2268 = vmatpush1.bf16.msra.mxu0 0
      %2269 = vmatprep.subr.bf16.mxu0 0
      %2270 = vmatpush1.bf16.msra.mxu0 0
      %2271 = vmatprep.mubr.bf16.mxu0 0
      %2272 = vmatmul.mubr.bf16.gmra.mrb[0].mxu0 %v2228
      %v2273 = vpop.f32.mrb[0].mxu0
      %v2274 = vadd.f32 %v2179, %v2273
      %v2275 = vpop.f32.mrb[0].mxu0
      %v2276 = vpop.f32.mrb[0].mxu0
      %v2277 = vadd.f32 %v2182, %v2276
      %v2278 = vpop.f32.mrb[0].mxu0
      %2279 = vmatprep.mubr.bf16.mxu0 0
      %2280 = vmatmul.mubr.bf16.gmra.mrb[0].mxu0 %v2231
      %v2281 = vpop.f32.mrb[0].mxu0
      %v2282 = vadd.f32 %v2187, %v2281
      %v2283 = vpop.f32.mrb[0].mxu0
      %v2284 = vpop.f32.mrb[0].mxu0
      %v2285 = vadd.f32 %v2190, %v2284
      %v2286 = vpop.f32.mrb[0].mxu0
      %2287 = vmatprep.mubr.bf16.mxu0 0
      %2288 = vmatmul.mubr.bf16.gmra.mrb[0].mxu0 %v2234
      %v2289 = vpop.f32.mrb[0].mxu0
      %v2290 = vadd.f32 %v2195, %v2289
      %v2291 = vpop.f32.mrb[0].mxu0
      %v2292 = vpop.f32.mrb[0].mxu0
      %v2293 = vadd.f32 %v2198, %v2292
      %v2294 = vpop.f32.mrb[0].mxu0
      %2295 = vmatprep.mubr.bf16.mxu0 0
      %2296 = vmatmul.mubr.bf16.gmra.mrb[0].mxu0 %v2237
      %v2297 = vpop.f32.mrb[0].mxu0
      %v2298 = vadd.f32 %v2203, %v2297
      %v2299 = vpop.f32.mrb[0].mxu0
      %v2300 = vpop.f32.mrb[0].mxu0
      %v2301 = vadd.f32 %v2206, %v2300
      %v2302 = vpop.f32.mrb[0].mxu0
      %2303 = vdwg.mxu0
      %v2304 = vadd.f32 %v2104, %v2274
      %v2305 = vadd.f32 %v2105, %v2277
      %v2306 = vadd.f32 %v2106, %v2282
      %v2307 = vadd.f32 %v2107, %v2285
      %v2308 = vadd.f32 %v2108, %v2290
      %v2309 = vadd.f32 %v2109, %v2293
      %v2310 = vadd.f32 %v2110, %v2298
      %v2311 = vadd.f32 %v2111, %v2301
      %2312 = vst.msk [vmem:[#allocation5] sm:$0xff] %vm1243, %v2304
      %2313 = vst.msk [vmem:[#allocation5 + $0x8] sm:$0xff] %vm1243, %v2305
      %2314 = vst.msk [vmem:[#allocation5 + $0x10] sm:$0xff] %vm1243, %v2306
      %2315 = vst.msk [vmem:[#allocation5 + $0x18] sm:$0xff] %vm1243, %v2307
      %2316 = vst.msk [vmem:[#allocation5 + $0x20] sm:$0xff] %vm1243, %v2308
      %2317 = vst.msk [vmem:[#allocation5 + $0x28] sm:$0xff] %vm1243, %v2309
      %2318 = vst.msk [vmem:[#allocation5 + $0x30] sm:$0xff] %vm1243, %v2310
      %2319 = vst.msk [vmem:[#allocation5 + $0x38] sm:$0xff] %vm1243, %v2311
      %v2320 = vld [vmem:[%s1015] sm:$0xf]
      %v2321 = vld [vmem:[%s1015 + $0x8] sm:$0xf]
      %v2322 = vld [vmem:[%s1015 + $0x10] sm:$0xf]
      %v2323 = vld [vmem:[%s1015 + $0x18] sm:$0xf]
      %v2324 = vld [vmem:[%s1015 + $0x20] sm:$0xf]
      %v2325 = vld [vmem:[%s1015 + $0x28] sm:$0xf]
      %v2326 = vld [vmem:[%s1015 + $0x30] sm:$0xf]
      %v2327 = vld [vmem:[%s1015 + $0x38] sm:$0xf]
      %v2328 = vld [vmem:[%s1190] sm:$0xf]
      %v2329 = vld [vmem:[%s1190 + $0x8] sm:$0xf]
      %v2330 = vld [vmem:[%s1190 + $0x10] sm:$0xf]
      %v2331 = vld [vmem:[%s1190 + $0x18] sm:$0xf]
      %v2332 = vld [vmem:[%s1190 + $0x20] sm:$0xf]
      %v2333 = vld [vmem:[%s1190 + $0x28] sm:$0xf]
      %v2334 = vld [vmem:[%s1190 + $0x30] sm:$0xf]
      %v2335 = vld [vmem:[%s1190 + $0x38] sm:$0xf]
      %v2336 = vld [vmem:[#allocation5] sm:$0xff]
      %v2337 = vld [vmem:[#allocation5 + $0x8] sm:$0xff]
      %v2338 = vld [vmem:[#allocation5 + $0x10] sm:$0xff]
      %v2339 = vld [vmem:[#allocation5 + $0x18] sm:$0xff]
      %v2340 = vld [vmem:[#allocation5 + $0x20] sm:$0xff]
      %v2341 = vld [vmem:[#allocation5 + $0x28] sm:$0xff]
      %v2342 = vld [vmem:[#allocation5 + $0x30] sm:$0xff]
      %v2343 = vld [vmem:[#allocation5 + $0x38] sm:$0xff]
      %s2344 = scalar_lea.vmem %s8, 24
      %v2345 = vld [vmem:[%s2344] sm:$0xf]
      %v2346 = vld [vmem:[%s2344 + $0x4] sm:$0xf]
      %s2347 = scalar_lea.vmem %s9, 12
      %v2348 = vld [vmem:[%s2347] sm:$0xf]
      %v2357 = vunpack.c.l.b16 %v2328
      %v2358 = vunpack.c.l.b16 %v2329
      %v2359 = vunpack.c.l.b16 %v2330
      %v2360 = vunpack.c.l.b16 %v2331
      %v2361 = vunpack.c.l.b16 %v2332
      %v2362 = vunpack.c.l.b16 %v2333
      %v2363 = vunpack.c.l.b16 %v2334
      %v2364 = vunpack.c.l.b16 %v2335
      %v2365 = vpack.c.b16 %v2358, %v2357
      %v2366 = vpack.c.b16 %v2360, %v2359
      %v2367 = vpack.c.b16 %v2362, %v2361
      %v2368 = vpack.c.b16 %v2364, %v2363
      %v2370 = vsel %vm491, %v2365, 0
      %v2373 = vsel %vm491, %v2366, 0
      %v2376 = vsel %vm491, %v2367, 0
      %v2379 = vsel %vm491, %v2368, 0
      %v2382 = vsel %vm504, %v2348, 0
      %2384 = vmatprep.subr.bf16.mxu0 0
      %2385 = vmatpush1.bf16.msra.mxu0 %v2382
      %2386 = vmatprep.subr.bf16.mxu0 0
      %2387 = vmatpush1.bf16.msra.mxu0 0
      %2388 = vmatprep.subr.bf16.mxu0 0
      %2389 = vmatpush1.bf16.msra.mxu0 0
      %2390 = vmatprep.subr.bf16.mxu0 0
      %2391 = vmatpush1.bf16.msra.mxu0 0
      %2392 = vmatprep.subr.bf16.mxu0 0
      %2393 = vmatpush1.bf16.msra.mxu0 0
      %2394 = vmatprep.subr.bf16.mxu0 0
      %2395 = vmatpush1.bf16.msra.mxu0 0
      %2396 = vmatprep.subr.bf16.mxu0 0
      %2397 = vmatpush1.bf16.msra.mxu0 0
      %2398 = vmatprep.subr.bf16.mxu0 0
      %2399 = vmatpush1.bf16.msra.mxu0 0
      %2400 = vmatprep.subr.bf16.mxu0 0
      %2401 = vmatpush1.bf16.msra.mxu0 0
      %2402 = vmatprep.subr.bf16.mxu0 0
      %2403 = vmatpush1.bf16.msra.mxu0 0
      %2404 = vmatprep.subr.bf16.mxu0 0
      %2405 = vmatpush1.bf16.msra.mxu0 0
      %2406 = vmatprep.subr.bf16.mxu0 0
      %2407 = vmatpush1.bf16.msra.mxu0 0
      %2408 = vmatprep.subr.bf16.mxu0 0
      %2409 = vmatpush1.bf16.msra.mxu0 0
      %2410 = vmatprep.subr.bf16.mxu0 0
      %2411 = vmatpush1.bf16.msra.mxu0 0
      %2412 = vmatprep.subr.bf16.mxu0 0
      %2413 = vmatpush1.bf16.msra.mxu0 0
      %2414 = vmatprep.subr.bf16.mxu0 0
      %2415 = vmatpush1.bf16.msra.mxu0 0
      %2416 = vmatprep.mubr.bf16.mxu0 0
      %2417 = vmatmul.mubr.bf16.gmra.mrb[0].mxu0 %v2370
      %v2418 = vpop.f32.mrb[0].mxu0
      %v2419 = vadd.f32 0.0, %v2418
      %v2420 = vpop.f32.mrb[0].mxu0
      %v2421 = vpop.f32.mrb[0].mxu0
      %v2422 = vadd.f32 0.0, %v2421
      %v2423 = vpop.f32.mrb[0].mxu0
      %2424 = vmatprep.mubr.bf16.mxu0 0
      %2425 = vmatmul.mubr.bf16.gmra.mrb[0].mxu0 %v2373
      %v2426 = vpop.f32.mrb[0].mxu0
      %v2427 = vadd.f32 0.0, %v2426
      %v2428 = vpop.f32.mrb[0].mxu0
      %v2429 = vpop.f32.mrb[0].mxu0
      %v2430 = vadd.f32 0.0, %v2429
      %v2431 = vpop.f32.mrb[0].mxu0
      %2432 = vmatprep.mubr.bf16.mxu0 0
      %2433 = vmatmul.mubr.bf16.gmra.mrb[0].mxu0 %v2376
      %v2434 = vpop.f32.mrb[0].mxu0
      %v2435 = vadd.f32 0.0, %v2434
      %v2436 = vpop.f32.mrb[0].mxu0
      %v2437 = vpop.f32.mrb[0].mxu0
      %v2438 = vadd.f32 0.0, %v2437
      %v2439 = vpop.f32.mrb[0].mxu0
      %2440 = vmatprep.mubr.bf16.mxu0 0
      %2441 = vmatmul.mubr.bf16.gmra.mrb[0].mxu0 %v2379
      %v2442 = vpop.f32.mrb[0].mxu0
      %v2443 = vadd.f32 0.0, %v2442
      %v2444 = vpop.f32.mrb[0].mxu0
      %v2445 = vpop.f32.mrb[0].mxu0
      %v2446 = vadd.f32 0.0, %v2445
      %v2447 = vpop.f32.mrb[0].mxu0
      %2448 = vdwg.mxu0
      %v2457 = vunpack.c.l.b16 %v2320
      %v2458 = vunpack.c.l.b16 %v2321
      %v2459 = vunpack.c.l.b16 %v2322
      %v2460 = vunpack.c.l.b16 %v2323
      %v2461 = vunpack.c.l.b16 %v2324
      %v2462 = vunpack.c.l.b16 %v2325
      %v2463 = vunpack.c.l.b16 %v2326
      %v2464 = vunpack.c.l.b16 %v2327
      %v2465 = vpack.c.b16 %v2458, %v2457
      %v2466 = vpack.c.b16 %v2460, %v2459
      %v2467 = vpack.c.b16 %v2462, %v2461
      %v2468 = vpack.c.b16 %v2464, %v2463
      %v2471 = vunpack.c.l.b16 %v2345
      %v2472 = vunpack.c.l.b16 %v2346
      %v2473 = vpack.c.b16 %v2472, %v2471
      %v2476 = vsel %vm573, %v2465, 0
      %v2479 = vsel %vm573, %v2466, 0
      %v2482 = vsel %vm573, %v2467, 0
      %v2485 = vsel %vm573, %v2468, 0
      %2487 = vmatprep.subr.bf16.mxu0 0
      %2488 = vmatpush1.bf16.msra.mxu0 %v2473
      %2489 = vmatprep.subr.bf16.mxu0 0
      %2490 = vmatpush1.bf16.msra.mxu0 0
      %2491 = vmatprep.subr.bf16.mxu0 0
      %2492 = vmatpush1.bf16.msra.mxu0 0
      %2493 = vmatprep.subr.bf16.mxu0 0
      %2494 = vmatpush1.bf16.msra.mxu0 0
      %2495 = vmatprep.subr.bf16.mxu0 0
      %2496 = vmatpush1.bf16.msra.mxu0 0
      %2497 = vmatprep.subr.bf16.mxu0 0
      %2498 = vmatpush1.bf16.msra.mxu0 0
      %2499 = vmatprep.subr.bf16.mxu0 0
      %2500 = vmatpush1.bf16.msra.mxu0 0
      %2501 = vmatprep.subr.bf16.mxu0 0
      %2502 = vmatpush1.bf16.msra.mxu0 0
      %2503 = vmatprep.subr.bf16.mxu0 0
      %2504 = vmatpush1.bf16.msra.mxu0 0
      %2505 = vmatprep.subr.bf16.mxu0 0
      %2506 = vmatpush1.bf16.msra.mxu0 0
      %2507 = vmatprep.subr.bf16.mxu0 0
      %2508 = vmatpush1.bf16.msra.mxu0 0
      %2509 = vmatprep.subr.bf16.mxu0 0
      %2510 = vmatpush1.bf16.msra.mxu0 0
      %2511 = vmatprep.subr.bf16.mxu0 0
      %2512 = vmatpush1.bf16.msra.mxu0 0
      %2513 = vmatprep.subr.bf16.mxu0 0
      %2514 = vmatpush1.bf16.msra.mxu0 0
      %2515 = vmatprep.subr.bf16.mxu0 0
      %2516 = vmatpush1.bf16.msra.mxu0 0
      %2517 = vmatprep.subr.bf16.mxu0 0
      %2518 = vmatpush1.bf16.msra.mxu0 0
      %2519 = vmatprep.mubr.bf16.mxu0 0
      %2520 = vmatmul.mubr.bf16.gmra.mrb[0].mxu0 %v2476
      %v2521 = vpop.f32.mrb[0].mxu0
      %v2522 = vadd.f32 %v2419, %v2521
      %v2523 = vpop.f32.mrb[0].mxu0
      %v2524 = vpop.f32.mrb[0].mxu0
      %v2525 = vadd.f32 %v2422, %v2524
      %v2526 = vpop.f32.mrb[0].mxu0
      %2527 = vmatprep.mubr.bf16.mxu0 0
      %2528 = vmatmul.mubr.bf16.gmra.mrb[0].mxu0 %v2479
      %v2529 = vpop.f32.mrb[0].mxu0
      %v2530 = vadd.f32 %v2427, %v2529
      %v2531 = vpop.f32.mrb[0].mxu0
      %v2532 = vpop.f32.mrb[0].mxu0
      %v2533 = vadd.f32 %v2430, %v2532
      %v2534 = vpop.f32.mrb[0].mxu0
      %2535 = vmatprep.mubr.bf16.mxu0 0
      %2536 = vmatmul.mubr.bf16.gmra.mrb[0].mxu0 %v2482
      %v2537 = vpop.f32.mrb[0].mxu0
      %v2538 = vadd.f32 %v2435, %v2537
      %v2539 = vpop.f32.mrb[0].mxu0
      %v2540 = vpop.f32.mrb[0].mxu0
      %v2541 = vadd.f32 %v2438, %v2540
      %v2542 = vpop.f32.mrb[0].mxu0
      %2543 = vmatprep.mubr.bf16.mxu0 0
      %2544 = vmatmul.mubr.bf16.gmra.mrb[0].mxu0 %v2485
      %v2545 = vpop.f32.mrb[0].mxu0
      %v2546 = vadd.f32 %v2443, %v2545
      %v2547 = vpop.f32.mrb[0].mxu0
      %v2548 = vpop.f32.mrb[0].mxu0
      %v2549 = vadd.f32 %v2446, %v2548
      %v2550 = vpop.f32.mrb[0].mxu0
      %2551 = vdwg.mxu0
      %v2552 = vadd.f32 %v2336, %v2522
      %v2553 = vadd.f32 %v2337, %v2525
      %v2554 = vadd.f32 %v2338, %v2530
      %v2555 = vadd.f32 %v2339, %v2533
      %v2556 = vadd.f32 %v2340, %v2538
      %v2557 = vadd.f32 %v2341, %v2541
      %v2558 = vadd.f32 %v2342, %v2546
      %v2559 = vadd.f32 %v2343, %v2549
      %2560 = vst.msk [vmem:[#allocation5] sm:$0xff] %vm1243, %v2552
      %2561 = vst.msk [vmem:[#allocation5 + $0x8] sm:$0xff] %vm1243, %v2553
      %2562 = vst.msk [vmem:[#allocation5 + $0x10] sm:$0xff] %vm1243, %v2554
      %2563 = vst.msk [vmem:[#allocation5 + $0x18] sm:$0xff] %vm1243, %v2555
      %2564 = vst.msk [vmem:[#allocation5 + $0x20] sm:$0xff] %vm1243, %v2556
      %2565 = vst.msk [vmem:[#allocation5 + $0x28] sm:$0xff] %vm1243, %v2557
      %2566 = vst.msk [vmem:[#allocation5 + $0x30] sm:$0xff] %vm1243, %v2558
      %2567 = vst.msk [vmem:[#allocation5 + $0x38] sm:$0xff] %vm1243, %v2559
      %v2568 = vld [vmem:[%s1015] sm:$0xf]
      %v2569 = vld [vmem:[%s1015 + $0x4] sm:$0x1]
      %v2570 = vld [vmem:[%s1015 + $0x8] sm:$0xf]
      %v2571 = vld [vmem:[%s1015 + $0xc] sm:$0x1]
      %v2572 = vld [vmem:[%s1015 + $0x10] sm:$0xf]
      %v2573 = vld [vmem:[%s1015 + $0x14] sm:$0x1]
      %v2574 = vld [vmem:[%s1015 + $0x18] sm:$0xf]
      %v2575 = vld [vmem:[%s1015 + $0x1c] sm:$0x1]
      %v2576 = vld [vmem:[%s1015 + $0x20] sm:$0xf]
      %v2577 = vld [vmem:[%s1015 + $0x24] sm:$0x1]
      %v2578 = vld [vmem:[%s1015 + $0x28] sm:$0xf]
      %v2579 = vld [vmem:[%s1015 + $0x2c] sm:$0x1]
      %v2580 = vld [vmem:[%s1015 + $0x30] sm:$0xf]
      %v2581 = vld [vmem:[%s1015 + $0x34] sm:$0x1]
      %v2582 = vld [vmem:[%s1015 + $0x38] sm:$0xf]
      %v2583 = vld [vmem:[%s1015 + $0x3c] sm:$0x1]
      %v2585 = vshrl.u32 %v2568, 16
      %v2587 = vrot.slane %v2585, 4
      %v2588 = vshll.u32 %v2568, 16
      %v2590 = vrot.slane %v2588, 5
      %v2591 = vor.u32 %v2587, %v2590
      %v2592 = vrot.slane %v2591, 4
      %v2594 = vshll.u32 %v2569, 16
      %v2596 = vrot.slane %v2594, 5
      %v2597 = vsel %vm1516, %v2592, %v2596
      %v2599 = vshrl.u32 %v2570, 16
      %v2601 = vrot.slane %v2599, 4
      %v2602 = vshll.u32 %v2570, 16
      %v2604 = vrot.slane %v2602, 5
      %v2605 = vor.u32 %v2601, %v2604
      %v2606 = vrot.slane %v2605, 4
      %v2608 = vshll.u32 %v2571, 16
      %v2610 = vrot.slane %v2608, 5
      %v2611 = vsel %vm1516, %v2606, %v2610
      %v2613 = vshrl.u32 %v2572, 16
      %v2615 = vrot.slane %v2613, 4
      %v2616 = vshll.u32 %v2572, 16
      %v2618 = vrot.slane %v2616, 5
      %v2619 = vor.u32 %v2615, %v2618
      %v2620 = vrot.slane %v2619, 4
      %v2622 = vshll.u32 %v2573, 16
      %v2624 = vrot.slane %v2622, 5
      %v2625 = vsel %vm1516, %v2620, %v2624
      %v2627 = vshrl.u32 %v2574, 16
      %v2629 = vrot.slane %v2627, 4
      %v2630 = vshll.u32 %v2574, 16
      %v2632 = vrot.slane %v2630, 5
      %v2633 = vor.u32 %v2629, %v2632
      %v2634 = vrot.slane %v2633, 4
      %v2636 = vshll.u32 %v2575, 16
      %v2638 = vrot.slane %v2636, 5
      %v2639 = vsel %vm1516, %v2634, %v2638
      %v2641 = vshrl.u32 %v2576, 16
      %v2643 = vrot.slane %v2641, 4
      %v2644 = vshll.u32 %v2576, 16
      %v2646 = vrot.slane %v2644, 5
      %v2647 = vor.u32 %v2643, %v2646
      %v2648 = vrot.slane %v2647, 4
      %v2650 = vshll.u32 %v2577, 16
      %v2652 = vrot.slane %v2650, 5
      %v2653 = vsel %vm1516, %v2648, %v2652
      %v2655 = vshrl.u32 %v2578, 16
      %v2657 = vrot.slane %v2655, 4
      %v2658 = vshll.u32 %v2578, 16
      %v2660 = vrot.slane %v2658, 5
      %v2661 = vor.u32 %v2657, %v2660
      %v2662 = vrot.slane %v2661, 4
      %v2664 = vshll.u32 %v2579, 16
      %v2666 = vrot.slane %v2664, 5
      %v2667 = vsel %vm1516, %v2662, %v2666
      %v2669 = vshrl.u32 %v2580, 16
      %v2671 = vrot.slane %v2669, 4
      %v2672 = vshll.u32 %v2580, 16
      %v2674 = vrot.slane %v2672, 5
      %v2675 = vor.u32 %v2671, %v2674
      %v2676 = vrot.slane %v2675, 4
      %v2678 = vshll.u32 %v2581, 16
      %v2680 = vrot.slane %v2678, 5
      %v2681 = vsel %vm1516, %v2676, %v2680
      %v2683 = vshrl.u32 %v2582, 16
      %v2685 = vrot.slane %v2683, 4
      %v2686 = vshll.u32 %v2582, 16
      %v2688 = vrot.slane %v2686, 5
      %v2689 = vor.u32 %v2685, %v2688
      %v2690 = vrot.slane %v2689, 4
      %v2692 = vshll.u32 %v2583, 16
      %v2694 = vrot.slane %v2692, 5
      %v2695 = vsel %vm1516, %v2690, %v2694
      %v2696 = vld [vmem:[%s1190] sm:$0xf]
      %v2697 = vld [vmem:[%s1190 + $0x4] sm:$0x1]
      %v2698 = vld [vmem:[%s1190 + $0x8] sm:$0xf]
      %v2699 = vld [vmem:[%s1190 + $0xc] sm:$0x1]
      %v2700 = vld [vmem:[%s1190 + $0x10] sm:$0xf]
      %v2701 = vld [vmem:[%s1190 + $0x14] sm:$0x1]
      %v2702 = vld [vmem:[%s1190 + $0x18] sm:$0xf]
      %v2703 = vld [vmem:[%s1190 + $0x1c] sm:$0x1]
      %v2704 = vld [vmem:[%s1190 + $0x20] sm:$0xf]
      %v2705 = vld [vmem:[%s1190 + $0x24] sm:$0x1]
      %v2706 = vld [vmem:[%s1190 + $0x28] sm:$0xf]
      %v2707 = vld [vmem:[%s1190 + $0x2c] sm:$0x1]
      %v2708 = vld [vmem:[%s1190 + $0x30] sm:$0xf]
      %v2709 = vld [vmem:[%s1190 + $0x34] sm:$0x1]
      %v2710 = vld [vmem:[%s1190 + $0x38] sm:$0xf]
      %v2711 = vld [vmem:[%s1190 + $0x3c] sm:$0x1]
      %v2713 = vshrl.u32 %v2696, 16
      %v2715 = vrot.slane %v2713, 4
      %v2716 = vshll.u32 %v2696, 16
      %v2718 = vrot.slane %v2716, 5
      %v2719 = vor.u32 %v2715, %v2718
      %v2720 = vrot.slane %v2719, 4
      %v2722 = vshll.u32 %v2697, 16
      %v2724 = vrot.slane %v2722, 5
      %v2725 = vsel %vm1516, %v2720, %v2724
      %v2727 = vshrl.u32 %v2698, 16
      %v2729 = vrot.slane %v2727, 4
      %v2730 = vshll.u32 %v2698, 16
      %v2732 = vrot.slane %v2730, 5
      %v2733 = vor.u32 %v2729, %v2732
      %v2734 = vrot.slane %v2733, 4
      %v2736 = vshll.u32 %v2699, 16
      %v2738 = vrot.slane %v2736, 5
      %v2739 = vsel %vm1516, %v2734, %v2738
      %v2741 = vshrl.u32 %v2700, 16
      %v2743 = vrot.slane %v2741, 4
      %v2744 = vshll.u32 %v2700, 16
      %v2746 = vrot.slane %v2744, 5
      %v2747 = vor.u32 %v2743, %v2746
      %v2748 = vrot.slane %v2747, 4
      %v2750 = vshll.u32 %v2701, 16
      %v2752 = vrot.slane %v2750, 5
      %v2753 = vsel %vm1516, %v2748, %v2752
      %v2755 = vshrl.u32 %v2702, 16
      %v2757 = vrot.slane %v2755, 4
      %v2758 = vshll.u32 %v2702, 16
      %v2760 = vrot.slane %v2758, 5
      %v2761 = vor.u32 %v2757, %v2760
      %v2762 = vrot.slane %v2761, 4
      %v2764 = vshll.u32 %v2703, 16
      %v2766 = vrot.slane %v2764, 5
      %v2767 = vsel %vm1516, %v2762, %v2766
      %v2769 = vshrl.u32 %v2704, 16
      %v2771 = vrot.slane %v2769, 4
      %v2772 = vshll.u32 %v2704, 16
      %v2774 = vrot.slane %v2772, 5
      %v2775 = vor.u32 %v2771, %v2774
      %v2776 = vrot.slane %v2775, 4
      %v2778 = vshll.u32 %v2705, 16
      %v2780 = vrot.slane %v2778, 5
      %v2781 = vsel %vm1516, %v2776, %v2780
      %v2783 = vshrl.u32 %v2706, 16
      %v2785 = vrot.slane %v2783, 4
      %v2786 = vshll.u32 %v2706, 16
      %v2788 = vrot.slane %v2786, 5
      %v2789 = vor.u32 %v2785, %v2788
      %v2790 = vrot.slane %v2789, 4
      %v2792 = vshll.u32 %v2707, 16
      %v2794 = vrot.slane %v2792, 5
      %v2795 = vsel %vm1516, %v2790, %v2794
      %v2797 = vshrl.u32 %v2708, 16
      %v2799 = vrot.slane %v2797, 4
      %v2800 = vshll.u32 %v2708, 16
      %v2802 = vrot.slane %v2800, 5
      %v2803 = vor.u32 %v2799, %v2802
      %v2804 = vrot.slane %v2803, 4
      %v2806 = vshll.u32 %v2709, 16
      %v2808 = vrot.slane %v2806, 5
      %v2809 = vsel %vm1516, %v2804, %v2808
      %v2811 = vshrl.u32 %v2710, 16
      %v2813 = vrot.slane %v2811, 4
      %v2814 = vshll.u32 %v2710, 16
      %v2816 = vrot.slane %v2814, 5
      %v2817 = vor.u32 %v2813, %v2816
      %v2818 = vrot.slane %v2817, 4
      %v2820 = vshll.u32 %v2711, 16
      %v2822 = vrot.slane %v2820, 5
      %v2823 = vsel %vm1516, %v2818, %v2822
      %v2824 = vld [vmem:[#allocation5] sm:$0xff]
      %v2825 = vld [vmem:[#allocation5 + $0x8] sm:$0xff]
      %v2826 = vld [vmem:[#allocation5 + $0x10] sm:$0xff]
      %v2827 = vld [vmem:[#allocation5 + $0x18] sm:$0xff]
      %v2828 = vld [vmem:[#allocation5 + $0x20] sm:$0xff]
      %v2829 = vld [vmem:[#allocation5 + $0x28] sm:$0xff]
      %v2830 = vld [vmem:[#allocation5 + $0x30] sm:$0xff]
      %v2831 = vld [vmem:[#allocation5 + $0x38] sm:$0xff]
      %s2832 = scalar_lea.vmem %s8, 32
      %v2833 = vld [vmem:[%s2832] sm:$0xf]
      %v2834 = vld [vmem:[%s2832 + $0x4] sm:$0xf]
      %s2835 = scalar_lea.vmem %s9, 16
      %v2836 = vld [vmem:[%s2835] sm:$0xf]
      %v2837 = vunpack.c.l.b16 %v2725
      %v2838 = vunpack.c.l.b16 %v2739
      %v2839 = vunpack.c.l.b16 %v2753
      %v2840 = vunpack.c.l.b16 %v2767
      %v2841 = vunpack.c.l.b16 %v2781
      %v2842 = vunpack.c.l.b16 %v2795
      %v2843 = vunpack.c.l.b16 %v2809
      %v2844 = vunpack.c.l.b16 %v2823
      %v2845 = vpack.c.b16 %v2838, %v2837
      %v2846 = vpack.c.b16 %v2840, %v2839
      %v2847 = vpack.c.b16 %v2842, %v2841
      %v2848 = vpack.c.b16 %v2844, %v2843
      %v2850 = vsel %vm491, %v2845, 0
      %v2853 = vsel %vm491, %v2846, 0
      %v2856 = vsel %vm491, %v2847, 0
      %v2859 = vsel %vm491, %v2848, 0
      %v2862 = vsel %vm504, %v2836, 0
      %2864 = vmatprep.subr.bf16.mxu0 0
      %2865 = vmatpush1.bf16.msra.mxu0 %v2862
      %2866 = vmatprep.subr.bf16.mxu0 0
      %2867 = vmatpush1.bf16.msra.mxu0 0
      %2868 = vmatprep.subr.bf16.mxu0 0
      %2869 = vmatpush1.bf16.msra.mxu0 0
      %2870 = vmatprep.subr.bf16.mxu0 0
      %2871 = vmatpush1.bf16.msra.mxu0 0
      %2872 = vmatprep.subr.bf16.mxu0 0
      %2873 = vmatpush1.bf16.msra.mxu0 0
      %2874 = vmatprep.subr.bf16.mxu0 0
      %2875 = vmatpush1.bf16.msra.mxu0 0
      %2876 = vmatprep.subr.bf16.mxu0 0
      %2877 = vmatpush1.bf16.msra.mxu0 0
      %2878 = vmatprep.subr.bf16.mxu0 0
      %2879 = vmatpush1.bf16.msra.mxu0 0
      %2880 = vmatprep.subr.bf16.mxu0 0
      %2881 = vmatpush1.bf16.msra.mxu0 0
      %2882 = vmatprep.subr.bf16.mxu0 0
      %2883 = vmatpush1.bf16.msra.mxu0 0
      %2884 = vmatprep.subr.bf16.mxu0 0
      %2885 = vmatpush1.bf16.msra.mxu0 0
      %2886 = vmatprep.subr.bf16.mxu0 0
      %2887 = vmatpush1.bf16.msra.mxu0 0
      %2888 = vmatprep.subr.bf16.mxu0 0
      %2889 = vmatpush1.bf16.msra.mxu0 0
      %2890 = vmatprep.subr.bf16.mxu0 0
      %2891 = vmatpush1.bf16.msra.mxu0 0
      %2892 = vmatprep.subr.bf16.mxu0 0
      %2893 = vmatpush1.bf16.msra.mxu0 0
      %2894 = vmatprep.subr.bf16.mxu0 0
      %2895 = vmatpush1.bf16.msra.mxu0 0
      %2896 = vmatprep.mubr.bf16.mxu0 0
      %2897 = vmatmul.mubr.bf16.gmra.mrb[0].mxu0 %v2850
      %v2898 = vpop.f32.mrb[0].mxu0
      %v2899 = vadd.f32 0.0, %v2898
      %v2900 = vpop.f32.mrb[0].mxu0
      %v2901 = vpop.f32.mrb[0].mxu0
      %v2902 = vadd.f32 0.0, %v2901
      %v2903 = vpop.f32.mrb[0].mxu0
      %2904 = vmatprep.mubr.bf16.mxu0 0
      %2905 = vmatmul.mubr.bf16.gmra.mrb[0].mxu0 %v2853
      %v2906 = vpop.f32.mrb[0].mxu0
      %v2907 = vadd.f32 0.0, %v2906
      %v2908 = vpop.f32.mrb[0].mxu0
      %v2909 = vpop.f32.mrb[0].mxu0
      %v2910 = vadd.f32 0.0, %v2909
      %v2911 = vpop.f32.mrb[0].mxu0
      %2912 = vmatprep.mubr.bf16.mxu0 0
      %2913 = vmatmul.mubr.bf16.gmra.mrb[0].mxu0 %v2856
      %v2914 = vpop.f32.mrb[0].mxu0
      %v2915 = vadd.f32 0.0, %v2914
      %v2916 = vpop.f32.mrb[0].mxu0
      %v2917 = vpop.f32.mrb[0].mxu0
      %v2918 = vadd.f32 0.0, %v2917
      %v2919 = vpop.f32.mrb[0].mxu0
      %2920 = vmatprep.mubr.bf16.mxu0 0
      %2921 = vmatmul.mubr.bf16.gmra.mrb[0].mxu0 %v2859
      %v2922 = vpop.f32.mrb[0].mxu0
      %v2923 = vadd.f32 0.0, %v2922
      %v2924 = vpop.f32.mrb[0].mxu0
      %v2925 = vpop.f32.mrb[0].mxu0
      %v2926 = vadd.f32 0.0, %v2925
      %v2927 = vpop.f32.mrb[0].mxu0
      %2928 = vdwg.mxu0
      %v2929 = vunpack.c.l.b16 %v2597
      %v2930 = vunpack.c.l.b16 %v2611
      %v2931 = vunpack.c.l.b16 %v2625
      %v2932 = vunpack.c.l.b16 %v2639
      %v2933 = vunpack.c.l.b16 %v2653
      %v2934 = vunpack.c.l.b16 %v2667
      %v2935 = vunpack.c.l.b16 %v2681
      %v2936 = vunpack.c.l.b16 %v2695
      %v2937 = vpack.c.b16 %v2930, %v2929
      %v2938 = vpack.c.b16 %v2932, %v2931
      %v2939 = vpack.c.b16 %v2934, %v2933
      %v2940 = vpack.c.b16 %v2936, %v2935
      %v2943 = vunpack.c.l.b16 %v2833
      %v2944 = vunpack.c.l.b16 %v2834
      %v2945 = vpack.c.b16 %v2944, %v2943
      %v2948 = vsel %vm573, %v2937, 0
      %v2951 = vsel %vm573, %v2938, 0
      %v2954 = vsel %vm573, %v2939, 0
      %v2957 = vsel %vm573, %v2940, 0
      %2959 = vmatprep.subr.bf16.mxu0 0
      %2960 = vmatpush1.bf16.msra.mxu0 %v2945
      %2961 = vmatprep.subr.bf16.mxu0 0
      %2962 = vmatpush1.bf16.msra.mxu0 0
      %2963 = vmatprep.subr.bf16.mxu0 0
      %2964 = vmatpush1.bf16.msra.mxu0 0
      %2965 = vmatprep.subr.bf16.mxu0 0
      %2966 = vmatpush1.bf16.msra.mxu0 0
      %2967 = vmatprep.subr.bf16.mxu0 0
      %2968 = vmatpush1.bf16.msra.mxu0 0
      %2969 = vmatprep.subr.bf16.mxu0 0
      %2970 = vmatpush1.bf16.msra.mxu0 0
      %2971 = vmatprep.subr.bf16.mxu0 0
      %2972 = vmatpush1.bf16.msra.mxu0 0
      %2973 = vmatprep.subr.bf16.mxu0 0
      %2974 = vmatpush1.bf16.msra.mxu0 0
      %2975 = vmatprep.subr.bf16.mxu0 0
      %2976 = vmatpush1.bf16.msra.mxu0 0
      %2977 = vmatprep.subr.bf16.mxu0 0
      %2978 = vmatpush1.bf16.msra.mxu0 0
      %2979 = vmatprep.subr.bf16.mxu0 0
      %2980 = vmatpush1.bf16.msra.mxu0 0
      %2981 = vmatprep.subr.bf16.mxu0 0
      %2982 = vmatpush1.bf16.msra.mxu0 0
      %2983 = vmatprep.subr.bf16.mxu0 0
      %2984 = vmatpush1.bf16.msra.mxu0 0
      %2985 = vmatprep.subr.bf16.mxu0 0
      %2986 = vmatpush1.bf16.msra.mxu0 0
      %2987 = vmatprep.subr.bf16.mxu0 0
      %2988 = vmatpush1.bf16.msra.mxu0 0
      %2989 = vmatprep.subr.bf16.mxu0 0
      %2990 = vmatpush1.bf16.msra.mxu0 0
      %2991 = vmatprep.mubr.bf16.mxu0 0
      %2992 = vmatmul.mubr.bf16.gmra.mrb[0].mxu0 %v2948
      %v2993 = vpop.f32.mrb[0].mxu0
      %v2994 = vadd.f32 %v2899, %v2993
      %v2995 = vpop.f32.mrb[0].mxu0
      %v2996 = vpop.f32.mrb[0].mxu0
      %v2997 = vadd.f32 %v2902, %v2996
      %v2998 = vpop.f32.mrb[0].mxu0
      %2999 = vmatprep.mubr.bf16.mxu0 0
      %3000 = vmatmul.mubr.bf16.gmra.mrb[0].mxu0 %v2951
      %v3001 = vpop.f32.mrb[0].mxu0
      %v3002 = vadd.f32 %v2907, %v3001
      %v3003 = vpop.f32.mrb[0].mxu0
      %v3004 = vpop.f32.mrb[0].mxu0
      %v3005 = vadd.f32 %v2910, %v3004
      %v3006 = vpop.f32.mrb[0].mxu0
      %3007 = vmatprep.mubr.bf16.mxu0 0
      %3008 = vmatmul.mubr.bf16.gmra.mrb[0].mxu0 %v2954
      %v3009 = vpop.f32.mrb[0].mxu0
      %v3010 = vadd.f32 %v2915, %v3009
      %v3011 = vpop.f32.mrb[0].mxu0
      %v3012 = vpop.f32.mrb[0].mxu0
      %v3013 = vadd.f32 %v2918, %v3012
      %v3014 = vpop.f32.mrb[0].mxu0
      %3015 = vmatprep.mubr.bf16.mxu0 0
      %3016 = vmatmul.mubr.bf16.gmra.mrb[0].mxu0 %v2957
      %v3017 = vpop.f32.mrb[0].mxu0
      %v3018 = vadd.f32 %v2923, %v3017
      %v3019 = vpop.f32.mrb[0].mxu0
      %v3020 = vpop.f32.mrb[0].mxu0
      %v3021 = vadd.f32 %v2926, %v3020
      %v3022 = vpop.f32.mrb[0].mxu0
      %3023 = vdwg.mxu0
      %v3024 = vadd.f32 %v2824, %v2994
      %v3025 = vadd.f32 %v2825, %v2997
      %v3026 = vadd.f32 %v2826, %v3002
      %v3027 = vadd.f32 %v2827, %v3005
      %v3028 = vadd.f32 %v2828, %v3010
      %v3029 = vadd.f32 %v2829, %v3013
      %v3030 = vadd.f32 %v2830, %v3018
      %v3031 = vadd.f32 %v2831, %v3021
      %3032 = vst.msk [vmem:[#allocation5] sm:$0xff] %vm1243, %v3024
      %3033 = vst.msk [vmem:[#allocation5 + $0x8] sm:$0xff] %vm1243, %v3025
      %3034 = vst.msk [vmem:[#allocation5 + $0x10] sm:$0xff] %vm1243, %v3026
      %3035 = vst.msk [vmem:[#allocation5 + $0x18] sm:$0xff] %vm1243, %v3027
      %3036 = vst.msk [vmem:[#allocation5 + $0x20] sm:$0xff] %vm1243, %v3028
      %3037 = vst.msk [vmem:[#allocation5 + $0x28] sm:$0xff] %vm1243, %v3029
      %3038 = vst.msk [vmem:[#allocation5 + $0x30] sm:$0xff] %vm1243, %v3030
      %3039 = vst.msk [vmem:[#allocation5 + $0x38] sm:$0xff] %vm1243, %v3031
      %v3040 = vld [vmem:[%s1015] sm:$0xe]
      %v3041 = vld [vmem:[%s1015 + $0x4] sm:$0x1]
      %v3042 = vld [vmem:[%s1015 + $0x8] sm:$0xe]
      %v3043 = vld [vmem:[%s1015 + $0xc] sm:$0x1]
      %v3044 = vld [vmem:[%s1015 + $0x10] sm:$0xe]
      %v3045 = vld [vmem:[%s1015 + $0x14] sm:$0x1]
      %v3046 = vld [vmem:[%s1015 + $0x18] sm:$0xe]
      %v3047 = vld [vmem:[%s1015 + $0x1c] sm:$0x1]
      %v3048 = vld [vmem:[%s1015 + $0x20] sm:$0xe]
      %v3049 = vld [vmem:[%s1015 + $0x24] sm:$0x1]
      %v3050 = vld [vmem:[%s1015 + $0x28] sm:$0xe]
      %v3051 = vld [vmem:[%s1015 + $0x2c] sm:$0x1]
      %v3052 = vld [vmem:[%s1015 + $0x30] sm:$0xe]
      %v3053 = vld [vmem:[%s1015 + $0x34] sm:$0x1]
      %v3054 = vld [vmem:[%s1015 + $0x38] sm:$0xe]
      %v3055 = vld [vmem:[%s1015 + $0x3c] sm:$0x1]
      %v3072 = vrot.slane %v3040, 5
      %v3073 = vrot.slane %v3072, 4
      %v3074 = vrot.slane %v3041, 5
      %v3075 = vsel %vm2007, %v3073, %v3074
      %v3076 = vrot.slane %v3042, 5
      %v3077 = vrot.slane %v3076, 4
      %v3078 = vrot.slane %v3043, 5
      %v3079 = vsel %vm2007, %v3077, %v3078
      %v3080 = vrot.slane %v3044, 5
      %v3081 = vrot.slane %v3080, 4
      %v3082 = vrot.slane %v3045, 5
      %v3083 = vsel %vm2007, %v3081, %v3082
      %v3084 = vrot.slane %v3046, 5
      %v3085 = vrot.slane %v3084, 4
      %v3086 = vrot.slane %v3047, 5
      %v3087 = vsel %vm2007, %v3085, %v3086
      %v3088 = vrot.slane %v3048, 5
      %v3089 = vrot.slane %v3088, 4
      %v3090 = vrot.slane %v3049, 5
      %v3091 = vsel %vm2007, %v3089, %v3090
      %v3092 = vrot.slane %v3050, 5
      %v3093 = vrot.slane %v3092, 4
      %v3094 = vrot.slane %v3051, 5
      %v3095 = vsel %vm2007, %v3093, %v3094
      %v3096 = vrot.slane %v3052, 5
      %v3097 = vrot.slane %v3096, 4
      %v3098 = vrot.slane %v3053, 5
      %v3099 = vsel %vm2007, %v3097, %v3098
      %v3100 = vrot.slane %v3054, 5
      %v3101 = vrot.slane %v3100, 4
      %v3102 = vrot.slane %v3055, 5
      %v3103 = vsel %vm2007, %v3101, %v3102
      %v3104 = vld [vmem:[%s1190] sm:$0xe]
      %v3105 = vld [vmem:[%s1190 + $0x4] sm:$0x1]
      %v3106 = vld [vmem:[%s1190 + $0x8] sm:$0xe]
      %v3107 = vld [vmem:[%s1190 + $0xc] sm:$0x1]
      %v3108 = vld [vmem:[%s1190 + $0x10] sm:$0xe]
      %v3109 = vld [vmem:[%s1190 + $0x14] sm:$0x1]
      %v3110 = vld [vmem:[%s1190 + $0x18] sm:$0xe]
      %v3111 = vld [vmem:[%s1190 + $0x1c] sm:$0x1]
      %v3112 = vld [vmem:[%s1190 + $0x20] sm:$0xe]
      %v3113 = vld [vmem:[%s1190 + $0x24] sm:$0x1]
      %v3114 = vld [vmem:[%s1190 + $0x28] sm:$0xe]
      %v3115 = vld [vmem:[%s1190 + $0x2c] sm:$0x1]
      %v3116 = vld [vmem:[%s1190 + $0x30] sm:$0xe]
      %v3117 = vld [vmem:[%s1190 + $0x34] sm:$0x1]
      %v3118 = vld [vmem:[%s1190 + $0x38] sm:$0xe]
      %v3119 = vld [vmem:[%s1190 + $0x3c] sm:$0x1]
      %v3136 = vrot.slane %v3104, 5
      %v3137 = vrot.slane %v3136, 4
      %v3138 = vrot.slane %v3105, 5
      %v3139 = vsel %vm2007, %v3137, %v3138
      %v3140 = vrot.slane %v3106, 5
      %v3141 = vrot.slane %v3140, 4
      %v3142 = vrot.slane %v3107, 5
      %v3143 = vsel %vm2007, %v3141, %v3142
      %v3144 = vrot.slane %v3108, 5
      %v3145 = vrot.slane %v3144, 4
      %v3146 = vrot.slane %v3109, 5
      %v3147 = vsel %vm2007, %v3145, %v3146
      %v3148 = vrot.slane %v3110, 5
      %v3149 = vrot.slane %v3148, 4
      %v3150 = vrot.slane %v3111, 5
      %v3151 = vsel %vm2007, %v3149, %v3150
      %v3152 = vrot.slane %v3112, 5
      %v3153 = vrot.slane %v3152, 4
      %v3154 = vrot.slane %v3113, 5
      %v3155 = vsel %vm2007, %v3153, %v3154
      %v3156 = vrot.slane %v3114, 5
      %v3157 = vrot.slane %v3156, 4
      %v3158 = vrot.slane %v3115, 5
      %v3159 = vsel %vm2007, %v3157, %v3158
      %v3160 = vrot.slane %v3116, 5
      %v3161 = vrot.slane %v3160, 4
      %v3162 = vrot.slane %v3117, 5
      %v3163 = vsel %vm2007, %v3161, %v3162
      %v3164 = vrot.slane %v3118, 5
      %v3165 = vrot.slane %v3164, 4
      %v3166 = vrot.slane %v3119, 5
      %v3167 = vsel %vm2007, %v3165, %v3166
      %v3168 = vld [vmem:[#allocation5] sm:$0xff]
      %v3169 = vld [vmem:[#allocation5 + $0x8] sm:$0xff]
      %v3170 = vld [vmem:[#allocation5 + $0x10] sm:$0xff]
      %v3171 = vld [vmem:[#allocation5 + $0x18] sm:$0xff]
      %v3172 = vld [vmem:[#allocation5 + $0x20] sm:$0xff]
      %v3173 = vld [vmem:[#allocation5 + $0x28] sm:$0xff]
      %v3174 = vld [vmem:[#allocation5 + $0x30] sm:$0xff]
      %v3175 = vld [vmem:[#allocation5 + $0x38] sm:$0xff]
      %s3176 = scalar_lea.vmem %s8, 40
      %v3177 = vld [vmem:[%s3176] sm:$0xf]
      %v3178 = vld [vmem:[%s3176 + $0x4] sm:$0xf]
      %s3179 = scalar_lea.vmem %s9, 20
      %v3180 = vld [vmem:[%s3179] sm:$0xf]
      %v3181 = vunpack.c.l.b16 %v3139
      %v3182 = vunpack.c.l.b16 %v3143
      %v3183 = vunpack.c.l.b16 %v3147
      %v3184 = vunpack.c.l.b16 %v3151
      %v3185 = vunpack.c.l.b16 %v3155
      %v3186 = vunpack.c.l.b16 %v3159
      %v3187 = vunpack.c.l.b16 %v3163
      %v3188 = vunpack.c.l.b16 %v3167
      %v3189 = vpack.c.b16 %v3182, %v3181
      %v3190 = vpack.c.b16 %v3184, %v3183
      %v3191 = vpack.c.b16 %v3186, %v3185
      %v3192 = vpack.c.b16 %v3188, %v3187
      %v3194 = vsel %vm491, %v3189, 0
      %v3197 = vsel %vm491, %v3190, 0
      %v3200 = vsel %vm491, %v3191, 0
      %v3203 = vsel %vm491, %v3192, 0
      %v3206 = vsel %vm504, %v3180, 0
      %3208 = vmatprep.subr.bf16.mxu0 0
      %3209 = vmatpush1.bf16.msra.mxu0 %v3206
      %3210 = vmatprep.subr.bf16.mxu0 0
      %3211 = vmatpush1.bf16.msra.mxu0 0
      %3212 = vmatprep.subr.bf16.mxu0 0
      %3213 = vmatpush1.bf16.msra.mxu0 0
      %3214 = vmatprep.subr.bf16.mxu0 0
      %3215 = vmatpush1.bf16.msra.mxu0 0
      %3216 = vmatprep.subr.bf16.mxu0 0
      %3217 = vmatpush1.bf16.msra.mxu0 0
      %3218 = vmatprep.subr.bf16.mxu0 0
      %3219 = vmatpush1.bf16.msra.mxu0 0
      %3220 = vmatprep.subr.bf16.mxu0 0
      %3221 = vmatpush1.bf16.msra.mxu0 0
      %3222 = vmatprep.subr.bf16.mxu0 0
      %3223 = vmatpush1.bf16.msra.mxu0 0
      %3224 = vmatprep.subr.bf16.mxu0 0
      %3225 = vmatpush1.bf16.msra.mxu0 0
      %3226 = vmatprep.subr.bf16.mxu0 0
      %3227 = vmatpush1.bf16.msra.mxu0 0
      %3228 = vmatprep.subr.bf16.mxu0 0
      %3229 = vmatpush1.bf16.msra.mxu0 0
      %3230 = vmatprep.subr.bf16.mxu0 0
      %3231 = vmatpush1.bf16.msra.mxu0 0
      %3232 = vmatprep.subr.bf16.mxu0 0
      %3233 = vmatpush1.bf16.msra.mxu0 0
      %3234 = vmatprep.subr.bf16.mxu0 0
      %3235 = vmatpush1.bf16.msra.mxu0 0
      %3236 = vmatprep.subr.bf16.mxu0 0
      %3237 = vmatpush1.bf16.msra.mxu0 0
      %3238 = vmatprep.subr.bf16.mxu0 0
      %3239 = vmatpush1.bf16.msra.mxu0 0
      %3240 = vmatprep.mubr.bf16.mxu0 0
      %3241 = vmatmul.mubr.bf16.gmra.mrb[0].mxu0 %v3194
      %v3242 = vpop.f32.mrb[0].mxu0
      %v3243 = vadd.f32 0.0, %v3242
      %v3244 = vpop.f32.mrb[0].mxu0
      %v3245 = vpop.f32.mrb[0].mxu0
      %v3246 = vadd.f32 0.0, %v3245
      %v3247 = vpop.f32.mrb[0].mxu0
      %3248 = vmatprep.mubr.bf16.mxu0 0
      %3249 = vmatmul.mubr.bf16.gmra.mrb[0].mxu0 %v3197
      %v3250 = vpop.f32.mrb[0].mxu0
      %v3251 = vadd.f32 0.0, %v3250
      %v3252 = vpop.f32.mrb[0].mxu0
      %v3253 = vpop.f32.mrb[0].mxu0
      %v3254 = vadd.f32 0.0, %v3253
      %v3255 = vpop.f32.mrb[0].mxu0
      %3256 = vmatprep.mubr.bf16.mxu0 0
      %3257 = vmatmul.mubr.bf16.gmra.mrb[0].mxu0 %v3200
      %v3258 = vpop.f32.mrb[0].mxu0
      %v3259 = vadd.f32 0.0, %v3258
      %v3260 = vpop.f32.mrb[0].mxu0
      %v3261 = vpop.f32.mrb[0].mxu0
      %v3262 = vadd.f32 0.0, %v3261
      %v3263 = vpop.f32.mrb[0].mxu0
      %3264 = vmatprep.mubr.bf16.mxu0 0
      %3265 = vmatmul.mubr.bf16.gmra.mrb[0].mxu0 %v3203
      %v3266 = vpop.f32.mrb[0].mxu0
      %v3267 = vadd.f32 0.0, %v3266
      %v3268 = vpop.f32.mrb[0].mxu0
      %v3269 = vpop.f32.mrb[0].mxu0
      %v3270 = vadd.f32 0.0, %v3269
      %v3271 = vpop.f32.mrb[0].mxu0
      %3272 = vdwg.mxu0
      %v3273 = vunpack.c.l.b16 %v3075
      %v3274 = vunpack.c.l.b16 %v3079
      %v3275 = vunpack.c.l.b16 %v3083
      %v3276 = vunpack.c.l.b16 %v3087
      %v3277 = vunpack.c.l.b16 %v3091
      %v3278 = vunpack.c.l.b16 %v3095
      %v3279 = vunpack.c.l.b16 %v3099
      %v3280 = vunpack.c.l.b16 %v3103
      %v3281 = vpack.c.b16 %v3274, %v3273
      %v3282 = vpack.c.b16 %v3276, %v3275
      %v3283 = vpack.c.b16 %v3278, %v3277
      %v3284 = vpack.c.b16 %v3280, %v3279
      %v3287 = vunpack.c.l.b16 %v3177
      %v3288 = vunpack.c.l.b16 %v3178
      %v3289 = vpack.c.b16 %v3288, %v3287
      %v3292 = vsel %vm573, %v3281, 0
      %v3295 = vsel %vm573, %v3282, 0
      %v3298 = vsel %vm573, %v3283, 0
      %v3301 = vsel %vm573, %v3284, 0
      %3303 = vmatprep.subr.bf16.mxu0 0
      %3304 = vmatpush1.bf16.msra.mxu0 %v3289
      %3305 = vmatprep.subr.bf16.mxu0 0
      %3306 = vmatpush1.bf16.msra.mxu0 0
      %3307 = vmatprep.subr.bf16.mxu0 0
      %3308 = vmatpush1.bf16.msra.mxu0 0
      %3309 = vmatprep.subr.bf16.mxu0 0
      %3310 = vmatpush1.bf16.msra.mxu0 0
      %3311 = vmatprep.subr.bf16.mxu0 0
      %3312 = vmatpush1.bf16.msra.mxu0 0
      %3313 = vmatprep.subr.bf16.mxu0 0
      %3314 = vmatpush1.bf16.msra.mxu0 0
      %3315 = vmatprep.subr.bf16.mxu0 0
      %3316 = vmatpush1.bf16.msra.mxu0 0
      %3317 = vmatprep.subr.bf16.mxu0 0
      %3318 = vmatpush1.bf16.msra.mxu0 0
      %3319 = vmatprep.subr.bf16.mxu0 0
      %3320 = vmatpush1.bf16.msra.mxu0 0
      %3321 = vmatprep.subr.bf16.mxu0 0
      %3322 = vmatpush1.bf16.msra.mxu0 0
      %3323 = vmatprep.subr.bf16.mxu0 0
      %3324 = vmatpush1.bf16.msra.mxu0 0
      %3325 = vmatprep.subr.bf16.mxu0 0
      %3326 = vmatpush1.bf16.msra.mxu0 0
      %3327 = vmatprep.subr.bf16.mxu0 0
      %3328 = vmatpush1.bf16.msra.mxu0 0
      %3329 = vmatprep.subr.bf16.mxu0 0
      %3330 = vmatpush1.bf16.msra.mxu0 0
      %3331 = vmatprep.subr.bf16.mxu0 0
      %3332 = vmatpush1.bf16.msra.mxu0 0
      %3333 = vmatprep.subr.bf16.mxu0 0
      %3334 = vmatpush1.bf16.msra.mxu0 0
      %3335 = vmatprep.mubr.bf16.mxu0 0
      %3336 = vmatmul.mubr.bf16.gmra.mrb[0].mxu0 %v3292
      %v3337 = vpop.f32.mrb[0].mxu0
      %v3338 = vadd.f32 %v3243, %v3337
      %v3339 = vpop.f32.mrb[0].mxu0
      %v3340 = vpop.f32.mrb[0].mxu0
      %v3341 = vadd.f32 %v3246, %v3340
      %v3342 = vpop.f32.mrb[0].mxu0
      %3343 = vmatprep.mubr.bf16.mxu0 0
      %3344 = vmatmul.mubr.bf16.gmra.mrb[0].mxu0 %v3295
      %v3345 = vpop.f32.mrb[0].mxu0
      %v3346 = vadd.f32 %v3251, %v3345
      %v3347 = vpop.f32.mrb[0].mxu0
      %v3348 = vpop.f32.mrb[0].mxu0
      %v3349 = vadd.f32 %v3254, %v3348
      %v3350 = vpop.f32.mrb[0].mxu0
      %3351 = vmatprep.mubr.bf16.mxu0 0
      %3352 = vmatmul.mubr.bf16.gmra.mrb[0].mxu0 %v3298
      %v3353 = vpop.f32.mrb[0].mxu0
      %v3354 = vadd.f32 %v3259, %v3353
      %v3355 = vpop.f32.mrb[0].mxu0
      %v3356 = vpop.f32.mrb[0].mxu0
      %v3357 = vadd.f32 %v3262, %v3356
      %v3358 = vpop.f32.mrb[0].mxu0
      %3359 = vmatprep.mubr.bf16.mxu0 0
      %3360 = vmatmul.mubr.bf16.gmra.mrb[0].mxu0 %v3301
      %v3361 = vpop.f32.mrb[0].mxu0
      %v3362 = vadd.f32 %v3267, %v3361
      %v3363 = vpop.f32.mrb[0].mxu0
      %v3364 = vpop.f32.mrb[0].mxu0
      %v3365 = vadd.f32 %v3270, %v3364
      %v3366 = vpop.f32.mrb[0].mxu0
      %3367 = vdwg.mxu0
      %v3368 = vadd.f32 %v3168, %v3338
      %v3369 = vadd.f32 %v3169, %v3341
      %v3370 = vadd.f32 %v3170, %v3346
      %v3371 = vadd.f32 %v3171, %v3349
      %v3372 = vadd.f32 %v3172, %v3354
      %v3373 = vadd.f32 %v3173, %v3357
      %v3374 = vadd.f32 %v3174, %v3362
      %v3375 = vadd.f32 %v3175, %v3365
      %3376 = vst.msk [vmem:[#allocation5] sm:$0xff] %vm1243, %v3368
      %3377 = vst.msk [vmem:[#allocation5 + $0x8] sm:$0xff] %vm1243, %v3369
      %3378 = vst.msk [vmem:[#allocation5 + $0x10] sm:$0xff] %vm1243, %v3370
      %3379 = vst.msk [vmem:[#allocation5 + $0x18] sm:$0xff] %vm1243, %v3371
      %3380 = vst.msk [vmem:[#allocation5 + $0x20] sm:$0xff] %vm1243, %v3372
      %3381 = vst.msk [vmem:[#allocation5 + $0x28] sm:$0xff] %vm1243, %v3373
      %3382 = vst.msk [vmem:[#allocation5 + $0x30] sm:$0xff] %vm1243, %v3374
      %3383 = vst.msk [vmem:[#allocation5 + $0x38] sm:$0xff] %vm1243, %v3375
      %s3384 = scalar_lea.vmem [#allocation3], 16
      %v3385 = vld [vmem:[%s3384] sm:$0xf]
      %v3386 = vld [vmem:[%s3384 + $0x8] sm:$0xf]
      %v3387 = vld [vmem:[%s3384 + $0x10] sm:$0xf]
      %v3388 = vld [vmem:[%s3384 + $0x18] sm:$0xf]
      %v3389 = vld [vmem:[%s3384 + $0x20] sm:$0xf]
      %v3390 = vld [vmem:[%s3384 + $0x28] sm:$0xf]
      %v3391 = vld [vmem:[%s3384 + $0x30] sm:$0xf]
      %v3392 = vld [vmem:[%s3384 + $0x38] sm:$0xf]
      %s3393 = scalar_lea.vmem [#allocation4], 16
      %v3394 = vld [vmem:[%s3393] sm:$0xf]
      %v3395 = vld [vmem:[%s3393 + $0x8] sm:$0xf]
      %v3396 = vld [vmem:[%s3393 + $0x10] sm:$0xf]
      %v3397 = vld [vmem:[%s3393 + $0x18] sm:$0xf]
      %v3398 = vld [vmem:[%s3393 + $0x20] sm:$0xf]
      %v3399 = vld [vmem:[%s3393 + $0x28] sm:$0xf]
      %v3400 = vld [vmem:[%s3393 + $0x30] sm:$0xf]
      %v3401 = vld [vmem:[%s3393 + $0x38] sm:$0xf]
      %v3402 = vld [vmem:[#allocation5] sm:$0xff]
      %v3403 = vld [vmem:[#allocation5 + $0x8] sm:$0xff]
      %v3404 = vld [vmem:[#allocation5 + $0x10] sm:$0xff]
      %v3405 = vld [vmem:[#allocation5 + $0x18] sm:$0xff]
      %v3406 = vld [vmem:[#allocation5 + $0x20] sm:$0xff]
      %v3407 = vld [vmem:[#allocation5 + $0x28] sm:$0xff]
      %v3408 = vld [vmem:[#allocation5 + $0x30] sm:$0xff]
      %v3409 = vld [vmem:[#allocation5 + $0x38] sm:$0xff]
      %s3410 = scalar_lea.vmem %s8, 48
      %v3411 = vld [vmem:[%s3410] sm:$0xf]
      %v3412 = vld [vmem:[%s3410 + $0x4] sm:$0xf]
      %s3413 = scalar_lea.vmem %s9, 24
      %v3414 = vld [vmem:[%s3413] sm:$0xf]
      %v3423 = vunpack.c.l.b16 %v3394
      %v3424 = vunpack.c.l.b16 %v3395
      %v3425 = vunpack.c.l.b16 %v3396
      %v3426 = vunpack.c.l.b16 %v3397
      %v3427 = vunpack.c.l.b16 %v3398
      %v3428 = vunpack.c.l.b16 %v3399
      %v3429 = vunpack.c.l.b16 %v3400
      %v3430 = vunpack.c.l.b16 %v3401
      %v3431 = vpack.c.b16 %v3424, %v3423
      %v3432 = vpack.c.b16 %v3426, %v3425
      %v3433 = vpack.c.b16 %v3428, %v3427
      %v3434 = vpack.c.b16 %v3430, %v3429
      %v3436 = vsel %vm491, %v3431, 0
      %v3439 = vsel %vm491, %v3432, 0
      %v3442 = vsel %vm491, %v3433, 0
      %v3445 = vsel %vm491, %v3434, 0
      %v3448 = vsel %vm504, %v3414, 0
      %3450 = vmatprep.subr.bf16.mxu0 0
      %3451 = vmatpush1.bf16.msra.mxu0 %v3448
      %3452 = vmatprep.subr.bf16.mxu0 0
      %3453 = vmatpush1.bf16.msra.mxu0 0
      %3454 = vmatprep.subr.bf16.mxu0 0
      %3455 = vmatpush1.bf16.msra.mxu0 0
      %3456 = vmatprep.subr.bf16.mxu0 0
      %3457 = vmatpush1.bf16.msra.mxu0 0
      %3458 = vmatprep.subr.bf16.mxu0 0
      %3459 = vmatpush1.bf16.msra.mxu0 0
      %3460 = vmatprep.subr.bf16.mxu0 0
      %3461 = vmatpush1.bf16.msra.mxu0 0
      %3462 = vmatprep.subr.bf16.mxu0 0
      %3463 = vmatpush1.bf16.msra.mxu0 0
      %3464 = vmatprep.subr.bf16.mxu0 0
      %3465 = vmatpush1.bf16.msra.mxu0 0
      %3466 = vmatprep.subr.bf16.mxu0 0
      %3467 = vmatpush1.bf16.msra.mxu0 0
      %3468 = vmatprep.subr.bf16.mxu0 0
      %3469 = vmatpush1.bf16.msra.mxu0 0
      %3470 = vmatprep.subr.bf16.mxu0 0
      %3471 = vmatpush1.bf16.msra.mxu0 0
      %3472 = vmatprep.subr.bf16.mxu0 0
      %3473 = vmatpush1.bf16.msra.mxu0 0
      %3474 = vmatprep.subr.bf16.mxu0 0
      %3475 = vmatpush1.bf16.msra.mxu0 0
      %3476 = vmatprep.subr.bf16.mxu0 0
      %3477 = vmatpush1.bf16.msra.mxu0 0
      %3478 = vmatprep.subr.bf16.mxu0 0
      %3479 = vmatpush1.bf16.msra.mxu0 0
      %3480 = vmatprep.subr.bf16.mxu0 0
      %3481 = vmatpush1.bf16.msra.mxu0 0
      %3482 = vmatprep.mubr.bf16.mxu0 0
      %3483 = vmatmul.mubr.bf16.gmra.mrb[0].mxu0 %v3436
      %v3484 = vpop.f32.mrb[0].mxu0
      %v3485 = vadd.f32 0.0, %v3484
      %v3486 = vpop.f32.mrb[0].mxu0
      %v3487 = vpop.f32.mrb[0].mxu0
      %v3488 = vadd.f32 0.0, %v3487
      %v3489 = vpop.f32.mrb[0].mxu0
      %3490 = vmatprep.mubr.bf16.mxu0 0
      %3491 = vmatmul.mubr.bf16.gmra.mrb[0].mxu0 %v3439
      %v3492 = vpop.f32.mrb[0].mxu0
      %v3493 = vadd.f32 0.0, %v3492
      %v3494 = vpop.f32.mrb[0].mxu0
      %v3495 = vpop.f32.mrb[0].mxu0
      %v3496 = vadd.f32 0.0, %v3495
      %v3497 = vpop.f32.mrb[0].mxu0
      %3498 = vmatprep.mubr.bf16.mxu0 0
      %3499 = vmatmul.mubr.bf16.gmra.mrb[0].mxu0 %v3442
      %v3500 = vpop.f32.mrb[0].mxu0
      %v3501 = vadd.f32 0.0, %v3500
      %v3502 = vpop.f32.mrb[0].mxu0
      %v3503 = vpop.f32.mrb[0].mxu0
      %v3504 = vadd.f32 0.0, %v3503
      %v3505 = vpop.f32.mrb[0].mxu0
      %3506 = vmatprep.mubr.bf16.mxu0 0
      %3507 = vmatmul.mubr.bf16.gmra.mrb[0].mxu0 %v3445
      %v3508 = vpop.f32.mrb[0].mxu0
      %v3509 = vadd.f32 0.0, %v3508
      %v3510 = vpop.f32.mrb[0].mxu0
      %v3511 = vpop.f32.mrb[0].mxu0
      %v3512 = vadd.f32 0.0, %v3511
      %v3513 = vpop.f32.mrb[0].mxu0
      %3514 = vdwg.mxu0
      %v3523 = vunpack.c.l.b16 %v3385
      %v3524 = vunpack.c.l.b16 %v3386
      %v3525 = vunpack.c.l.b16 %v3387
      %v3526 = vunpack.c.l.b16 %v3388
      %v3527 = vunpack.c.l.b16 %v3389
      %v3528 = vunpack.c.l.b16 %v3390
      %v3529 = vunpack.c.l.b16 %v3391
      %v3530 = vunpack.c.l.b16 %v3392
      %v3531 = vpack.c.b16 %v3524, %v3523
      %v3532 = vpack.c.b16 %v3526, %v3525
      %v3533 = vpack.c.b16 %v3528, %v3527
      %v3534 = vpack.c.b16 %v3530, %v3529
      %v3537 = vunpack.c.l.b16 %v3411
      %v3538 = vunpack.c.l.b16 %v3412
      %v3539 = vpack.c.b16 %v3538, %v3537
      %v3542 = vsel %vm573, %v3531, 0
      %v3545 = vsel %vm573, %v3532, 0
      %v3548 = vsel %vm573, %v3533, 0
      %v3551 = vsel %vm573, %v3534, 0
      %3553 = vmatprep.subr.bf16.mxu0 0
      %3554 = vmatpush1.bf16.msra.mxu0 %v3539
      %3555 = vmatprep.subr.bf16.mxu0 0
      %3556 = vmatpush1.bf16.msra.mxu0 0
      %3557 = vmatprep.subr.bf16.mxu0 0
      %3558 = vmatpush1.bf16.msra.mxu0 0
      %3559 = vmatprep.subr.bf16.mxu0 0
      %3560 = vmatpush1.bf16.msra.mxu0 0
      %3561 = vmatprep.subr.bf16.mxu0 0
      %3562 = vmatpush1.bf16.msra.mxu0 0
      %3563 = vmatprep.subr.bf16.mxu0 0
      %3564 = vmatpush1.bf16.msra.mxu0 0
      %3565 = vmatprep.subr.bf16.mxu0 0
      %3566 = vmatpush1.bf16.msra.mxu0 0
      %3567 = vmatprep.subr.bf16.mxu0 0
      %3568 = vmatpush1.bf16.msra.mxu0 0
      %3569 = vmatprep.subr.bf16.mxu0 0
      %3570 = vmatpush1.bf16.msra.mxu0 0
      %3571 = vmatprep.subr.bf16.mxu0 0
      %3572 = vmatpush1.bf16.msra.mxu0 0
      %3573 = vmatprep.subr.bf16.mxu0 0
      %3574 = vmatpush1.bf16.msra.mxu0 0
      %3575 = vmatprep.subr.bf16.mxu0 0
      %3576 = vmatpush1.bf16.msra.mxu0 0
      %3577 = vmatprep.subr.bf16.mxu0 0
      %3578 = vmatpush1.bf16.msra.mxu0 0
      %3579 = vmatprep.subr.bf16.mxu0 0
      %3580 = vmatpush1.bf16.msra.mxu0 0
      %3581 = vmatprep.subr.bf16.mxu0 0
      %3582 = vmatpush1.bf16.msra.mxu0 0
      %3583 = vmatprep.subr.bf16.mxu0 0
      %3584 = vmatpush1.bf16.msra.mxu0 0
      %3585 = vmatprep.mubr.bf16.mxu0 0
      %3586 = vmatmul.mubr.bf16.gmra.mrb[0].mxu0 %v3542
      %v3587 = vpop.f32.mrb[0].mxu0
      %v3588 = vadd.f32 %v3485, %v3587
      %v3589 = vpop.f32.mrb[0].mxu0
      %v3590 = vpop.f32.mrb[0].mxu0
      %v3591 = vadd.f32 %v3488, %v3590
      %v3592 = vpop.f32.mrb[0].mxu0
      %3593 = vmatprep.mubr.bf16.mxu0 0
      %3594 = vmatmul.mubr.bf16.gmra.mrb[0].mxu0 %v3545
      %v3595 = vpop.f32.mrb[0].mxu0
      %v3596 = vadd.f32 %v3493, %v3595
      %v3597 = vpop.f32.mrb[0].mxu0
      %v3598 = vpop.f32.mrb[0].mxu0
      %v3599 = vadd.f32 %v3496, %v3598
      %v3600 = vpop.f32.mrb[0].mxu0
      %3601 = vmatprep.mubr.bf16.mxu0 0
      %3602 = vmatmul.mubr.bf16.gmra.mrb[0].mxu0 %v3548
      %v3603 = vpop.f32.mrb[0].mxu0
      %v3604 = vadd.f32 %v3501, %v3603
      %v3605 = vpop.f32.mrb[0].mxu0
      %v3606 = vpop.f32.mrb[0].mxu0
      %v3607 = vadd.f32 %v3504, %v3606
      %v3608 = vpop.f32.mrb[0].mxu0
      %3609 = vmatprep.mubr.bf16.mxu0 0
      %3610 = vmatmul.mubr.bf16.gmra.mrb[0].mxu0 %v3551
      %v3611 = vpop.f32.mrb[0].mxu0
      %v3612 = vadd.f32 %v3509, %v3611
      %v3613 = vpop.f32.mrb[0].mxu0
      %v3614 = vpop.f32.mrb[0].mxu0
      %v3615 = vadd.f32 %v3512, %v3614
      %v3616 = vpop.f32.mrb[0].mxu0
      %3617 = vdwg.mxu0
      %v3618 = vadd.f32 %v3402, %v3588
      %v3619 = vadd.f32 %v3403, %v3591
      %v3620 = vadd.f32 %v3404, %v3596
      %v3621 = vadd.f32 %v3405, %v3599
      %v3622 = vadd.f32 %v3406, %v3604
      %v3623 = vadd.f32 %v3407, %v3607
      %v3624 = vadd.f32 %v3408, %v3612
      %v3625 = vadd.f32 %v3409, %v3615
      %3626 = vst.msk [vmem:[#allocation5] sm:$0xff] %vm1243, %v3618
      %3627 = vst.msk [vmem:[#allocation5 + $0x8] sm:$0xff] %vm1243, %v3619
      %3628 = vst.msk [vmem:[#allocation5 + $0x10] sm:$0xff] %vm1243, %v3620
      %3629 = vst.msk [vmem:[#allocation5 + $0x18] sm:$0xff] %vm1243, %v3621
      %3630 = vst.msk [vmem:[#allocation5 + $0x20] sm:$0xff] %vm1243, %v3622
      %3631 = vst.msk [vmem:[#allocation5 + $0x28] sm:$0xff] %vm1243, %v3623
      %3632 = vst.msk [vmem:[#allocation5 + $0x30] sm:$0xff] %vm1243, %v3624
      %3633 = vst.msk [vmem:[#allocation5 + $0x38] sm:$0xff] %vm1243, %v3625
      %v3634 = vld [vmem:[%s3384] sm:$0xf]
      %v3635 = vld [vmem:[%s3384 + $0x4] sm:$0x1]
      %v3636 = vld [vmem:[%s3384 + $0x8] sm:$0xf]
      %v3637 = vld [vmem:[%s3384 + $0xc] sm:$0x1]
      %v3638 = vld [vmem:[%s3384 + $0x10] sm:$0xf]
      %v3639 = vld [vmem:[%s3384 + $0x14] sm:$0x1]
      %v3640 = vld [vmem:[%s3384 + $0x18] sm:$0xf]
      %v3641 = vld [vmem:[%s3384 + $0x1c] sm:$0x1]
      %v3642 = vld [vmem:[%s3384 + $0x20] sm:$0xf]
      %v3643 = vld [vmem:[%s3384 + $0x24] sm:$0x1]
      %v3644 = vld [vmem:[%s3384 + $0x28] sm:$0xf]
      %v3645 = vld [vmem:[%s3384 + $0x2c] sm:$0x1]
      %v3646 = vld [vmem:[%s3384 + $0x30] sm:$0xf]
      %v3647 = vld [vmem:[%s3384 + $0x34] sm:$0x1]
      %v3648 = vld [vmem:[%s3384 + $0x38] sm:$0xf]
      %v3649 = vld [vmem:[%s3384 + $0x3c] sm:$0x1]
      %v3651 = vshrl.u32 %v3634, 16
      %v3653 = vrot.slane %v3651, 4
      %v3654 = vshll.u32 %v3634, 16
      %v3656 = vrot.slane %v3654, 5
      %v3657 = vor.u32 %v3653, %v3656
      %v3658 = vrot.slane %v3657, 4
      %v3660 = vshll.u32 %v3635, 16
      %v3662 = vrot.slane %v3660, 5
      %v3663 = vsel %vm1516, %v3658, %v3662
      %v3665 = vshrl.u32 %v3636, 16
      %v3667 = vrot.slane %v3665, 4
      %v3668 = vshll.u32 %v3636, 16
      %v3670 = vrot.slane %v3668, 5
      %v3671 = vor.u32 %v3667, %v3670
      %v3672 = vrot.slane %v3671, 4
      %v3674 = vshll.u32 %v3637, 16
      %v3676 = vrot.slane %v3674, 5
      %v3677 = vsel %vm1516, %v3672, %v3676
      %v3679 = vshrl.u32 %v3638, 16
      %v3681 = vrot.slane %v3679, 4
      %v3682 = vshll.u32 %v3638, 16
      %v3684 = vrot.slane %v3682, 5
      %v3685 = vor.u32 %v3681, %v3684
      %v3686 = vrot.slane %v3685, 4
      %v3688 = vshll.u32 %v3639, 16
      %v3690 = vrot.slane %v3688, 5
      %v3691 = vsel %vm1516, %v3686, %v3690
      %v3693 = vshrl.u32 %v3640, 16
      %v3695 = vrot.slane %v3693, 4
      %v3696 = vshll.u32 %v3640, 16
      %v3698 = vrot.slane %v3696, 5
      %v3699 = vor.u32 %v3695, %v3698
      %v3700 = vrot.slane %v3699, 4
      %v3702 = vshll.u32 %v3641, 16
      %v3704 = vrot.slane %v3702, 5
      %v3705 = vsel %vm1516, %v3700, %v3704
      %v3707 = vshrl.u32 %v3642, 16
      %v3709 = vrot.slane %v3707, 4
      %v3710 = vshll.u32 %v3642, 16
      %v3712 = vrot.slane %v3710, 5
      %v3713 = vor.u32 %v3709, %v3712
      %v3714 = vrot.slane %v3713, 4
      %v3716 = vshll.u32 %v3643, 16
      %v3718 = vrot.slane %v3716, 5
      %v3719 = vsel %vm1516, %v3714, %v3718
      %v3721 = vshrl.u32 %v3644, 16
      %v3723 = vrot.slane %v3721, 4
      %v3724 = vshll.u32 %v3644, 16
      %v3726 = vrot.slane %v3724, 5
      %v3727 = vor.u32 %v3723, %v3726
      %v3728 = vrot.slane %v3727, 4
      %v3730 = vshll.u32 %v3645, 16
      %v3732 = vrot.slane %v3730, 5
      %v3733 = vsel %vm1516, %v3728, %v3732
      %v3735 = vshrl.u32 %v3646, 16
      %v3737 = vrot.slane %v3735, 4
      %v3738 = vshll.u32 %v3646, 16
      %v3740 = vrot.slane %v3738, 5
      %v3741 = vor.u32 %v3737, %v3740
      %v3742 = vrot.slane %v3741, 4
      %v3744 = vshll.u32 %v3647, 16
      %v3746 = vrot.slane %v3744, 5
      %v3747 = vsel %vm1516, %v3742, %v3746
      %v3749 = vshrl.u32 %v3648, 16
      %v3751 = vrot.slane %v3749, 4
      %v3752 = vshll.u32 %v3648, 16
      %v3754 = vrot.slane %v3752, 5
      %v3755 = vor.u32 %v3751, %v3754
      %v3756 = vrot.slane %v3755, 4
      %v3758 = vshll.u32 %v3649, 16
      %v3760 = vrot.slane %v3758, 5
      %v3761 = vsel %vm1516, %v3756, %v3760
      %v3762 = vld [vmem:[%s3393] sm:$0xf]
      %v3763 = vld [vmem:[%s3393 + $0x4] sm:$0x1]
      %v3764 = vld [vmem:[%s3393 + $0x8] sm:$0xf]
      %v3765 = vld [vmem:[%s3393 + $0xc] sm:$0x1]
      %v3766 = vld [vmem:[%s3393 + $0x10] sm:$0xf]
      %v3767 = vld [vmem:[%s3393 + $0x14] sm:$0x1]
      %v3768 = vld [vmem:[%s3393 + $0x18] sm:$0xf]
      %v3769 = vld [vmem:[%s3393 + $0x1c] sm:$0x1]
      %v3770 = vld [vmem:[%s3393 + $0x20] sm:$0xf]
      %v3771 = vld [vmem:[%s3393 + $0x24] sm:$0x1]
      %v3772 = vld [vmem:[%s3393 + $0x28] sm:$0xf]
      %v3773 = vld [vmem:[%s3393 + $0x2c] sm:$0x1]
      %v3774 = vld [vmem:[%s3393 + $0x30] sm:$0xf]
      %v3775 = vld [vmem:[%s3393 + $0x34] sm:$0x1]
      %v3776 = vld [vmem:[%s3393 + $0x38] sm:$0xf]
      %v3777 = vld [vmem:[%s3393 + $0x3c] sm:$0x1]
      %v3779 = vshrl.u32 %v3762, 16
      %v3781 = vrot.slane %v3779, 4
      %v3782 = vshll.u32 %v3762, 16
      %v3784 = vrot.slane %v3782, 5
      %v3785 = vor.u32 %v3781, %v3784
      %v3786 = vrot.slane %v3785, 4
      %v3788 = vshll.u32 %v3763, 16
      %v3790 = vrot.slane %v3788, 5
      %v3791 = vsel %vm1516, %v3786, %v3790
      %v3793 = vshrl.u32 %v3764, 16
      %v3795 = vrot.slane %v3793, 4
      %v3796 = vshll.u32 %v3764, 16
      %v3798 = vrot.slane %v3796, 5
      %v3799 = vor.u32 %v3795, %v3798
      %v3800 = vrot.slane %v3799, 4
      %v3802 = vshll.u32 %v3765, 16
      %v3804 = vrot.slane %v3802, 5
      %v3805 = vsel %vm1516, %v3800, %v3804
      %v3807 = vshrl.u32 %v3766, 16
      %v3809 = vrot.slane %v3807, 4
      %v3810 = vshll.u32 %v3766, 16
      %v3812 = vrot.slane %v3810, 5
      %v3813 = vor.u32 %v3809, %v3812
      %v3814 = vrot.slane %v3813, 4
      %v3816 = vshll.u32 %v3767, 16
      %v3818 = vrot.slane %v3816, 5
      %v3819 = vsel %vm1516, %v3814, %v3818
      %v3821 = vshrl.u32 %v3768, 16
      %v3823 = vrot.slane %v3821, 4
      %v3824 = vshll.u32 %v3768, 16
      %v3826 = vrot.slane %v3824, 5
      %v3827 = vor.u32 %v3823, %v3826
      %v3828 = vrot.slane %v3827, 4
      %v3830 = vshll.u32 %v3769, 16
      %v3832 = vrot.slane %v3830, 5
      %v3833 = vsel %vm1516, %v3828, %v3832
      %v3835 = vshrl.u32 %v3770, 16
      %v3837 = vrot.slane %v3835, 4
      %v3838 = vshll.u32 %v3770, 16
      %v3840 = vrot.slane %v3838, 5
      %v3841 = vor.u32 %v3837, %v3840
      %v3842 = vrot.slane %v3841, 4
      %v3844 = vshll.u32 %v3771, 16
      %v3846 = vrot.slane %v3844, 5
      %v3847 = vsel %vm1516, %v3842, %v3846
      %v3849 = vshrl.u32 %v3772, 16
      %v3851 = vrot.slane %v3849, 4
      %v3852 = vshll.u32 %v3772, 16
      %v3854 = vrot.slane %v3852, 5
      %v3855 = vor.u32 %v3851, %v3854
      %v3856 = vrot.slane %v3855, 4
      %v3858 = vshll.u32 %v3773, 16
      %v3860 = vrot.slane %v3858, 5
      %v3861 = vsel %vm1516, %v3856, %v3860
      %v3863 = vshrl.u32 %v3774, 16
      %v3865 = vrot.slane %v3863, 4
      %v3866 = vshll.u32 %v3774, 16
      %v3868 = vrot.slane %v3866, 5
      %v3869 = vor.u32 %v3865, %v3868
      %v3870 = vrot.slane %v3869, 4
      %v3872 = vshll.u32 %v3775, 16
      %v3874 = vrot.slane %v3872, 5
      %v3875 = vsel %vm1516, %v3870, %v3874
      %v3877 = vshrl.u32 %v3776, 16
      %v3879 = vrot.slane %v3877, 4
      %v3880 = vshll.u32 %v3776, 16
      %v3882 = vrot.slane %v3880, 5
      %v3883 = vor.u32 %v3879, %v3882
      %v3884 = vrot.slane %v3883, 4
      %v3886 = vshll.u32 %v3777, 16
      %v3888 = vrot.slane %v3886, 5
      %v3889 = vsel %vm1516, %v3884, %v3888
      %v3890 = vld [vmem:[#allocation5] sm:$0xff]
      %v3891 = vld [vmem:[#allocation5 + $0x8] sm:$0xff]
      %v3892 = vld [vmem:[#allocation5 + $0x10] sm:$0xff]
      %v3893 = vld [vmem:[#allocation5 + $0x18] sm:$0xff]
      %v3894 = vld [vmem:[#allocation5 + $0x20] sm:$0xff]
      %v3895 = vld [vmem:[#allocation5 + $0x28] sm:$0xff]
      %v3896 = vld [vmem:[#allocation5 + $0x30] sm:$0xff]
      %v3897 = vld [vmem:[#allocation5 + $0x38] sm:$0xff]
      %s3898 = scalar_lea.vmem %s8, 56
      %v3899 = vld [vmem:[%s3898] sm:$0xf]
      %v3900 = vld [vmem:[%s3898 + $0x4] sm:$0xf]
      %s3901 = scalar_lea.vmem %s9, 28
      %v3902 = vld [vmem:[%s3901] sm:$0xf]
      %v3903 = vunpack.c.l.b16 %v3791
      %v3904 = vunpack.c.l.b16 %v3805
      %v3905 = vunpack.c.l.b16 %v3819
      %v3906 = vunpack.c.l.b16 %v3833
      %v3907 = vunpack.c.l.b16 %v3847
      %v3908 = vunpack.c.l.b16 %v3861
      %v3909 = vunpack.c.l.b16 %v3875
      %v3910 = vunpack.c.l.b16 %v3889
      %v3911 = vpack.c.b16 %v3904, %v3903
      %v3912 = vpack.c.b16 %v3906, %v3905
      %v3913 = vpack.c.b16 %v3908, %v3907
      %v3914 = vpack.c.b16 %v3910, %v3909
      %v3916 = vsel %vm491, %v3911, 0
      %v3919 = vsel %vm491, %v3912, 0
      %v3922 = vsel %vm491, %v3913, 0
      %v3925 = vsel %vm491, %v3914, 0
      %v3928 = vsel %vm504, %v3902, 0
      %3930 = vmatprep.subr.bf16.mxu0 0
      %3931 = vmatpush1.bf16.msra.mxu0 %v3928
      %3932 = vmatprep.subr.bf16.mxu0 0
      %3933 = vmatpush1.bf16.msra.mxu0 0
      %3934 = vmatprep.subr.bf16.mxu0 0
      %3935 = vmatpush1.bf16.msra.mxu0 0
      %3936 = vmatprep.subr.bf16.mxu0 0
      %3937 = vmatpush1.bf16.msra.mxu0 0
      %3938 = vmatprep.subr.bf16.mxu0 0
      %3939 = vmatpush1.bf16.msra.mxu0 0
      %3940 = vmatprep.subr.bf16.mxu0 0
      %3941 = vmatpush1.bf16.msra.mxu0 0
      %3942 = vmatprep.subr.bf16.mxu0 0
      %3943 = vmatpush1.bf16.msra.mxu0 0
      %3944 = vmatprep.subr.bf16.mxu0 0
      %3945 = vmatpush1.bf16.msra.mxu0 0
      %3946 = vmatprep.subr.bf16.mxu0 0
      %3947 = vmatpush1.bf16.msra.mxu0 0
      %3948 = vmatprep.subr.bf16.mxu0 0
      %3949 = vmatpush1.bf16.msra.mxu0 0
      %3950 = vmatprep.subr.bf16.mxu0 0
      %3951 = vmatpush1.bf16.msra.mxu0 0
      %3952 = vmatprep.subr.bf16.mxu0 0
      %3953 = vmatpush1.bf16.msra.mxu0 0
      %3954 = vmatprep.subr.bf16.mxu0 0
      %3955 = vmatpush1.bf16.msra.mxu0 0
      %3956 = vmatprep.subr.bf16.mxu0 0
      %3957 = vmatpush1.bf16.msra.mxu0 0
      %3958 = vmatprep.subr.bf16.mxu0 0
      %3959 = vmatpush1.bf16.msra.mxu0 0
      %3960 = vmatprep.subr.bf16.mxu0 0
      %3961 = vmatpush1.bf16.msra.mxu0 0
      %3962 = vmatprep.mubr.bf16.mxu0 0
      %3963 = vmatmul.mubr.bf16.gmra.mrb[0].mxu0 %v3916
      %v3964 = vpop.f32.mrb[0].mxu0
      %v3965 = vadd.f32 0.0, %v3964
      %v3966 = vpop.f32.mrb[0].mxu0
      %v3967 = vpop.f32.mrb[0].mxu0
      %v3968 = vadd.f32 0.0, %v3967
      %v3969 = vpop.f32.mrb[0].mxu0
      %3970 = vmatprep.mubr.bf16.mxu0 0
      %3971 = vmatmul.mubr.bf16.gmra.mrb[0].mxu0 %v3919
      %v3972 = vpop.f32.mrb[0].mxu0
      %v3973 = vadd.f32 0.0, %v3972
      %v3974 = vpop.f32.mrb[0].mxu0
      %v3975 = vpop.f32.mrb[0].mxu0
      %v3976 = vadd.f32 0.0, %v3975
      %v3977 = vpop.f32.mrb[0].mxu0
      %3978 = vmatprep.mubr.bf16.mxu0 0
      %3979 = vmatmul.mubr.bf16.gmra.mrb[0].mxu0 %v3922
      %v3980 = vpop.f32.mrb[0].mxu0
      %v3981 = vadd.f32 0.0, %v3980
      %v3982 = vpop.f32.mrb[0].mxu0
      %v3983 = vpop.f32.mrb[0].mxu0
      %v3984 = vadd.f32 0.0, %v3983
      %v3985 = vpop.f32.mrb[0].mxu0
      %3986 = vmatprep.mubr.bf16.mxu0 0
      %3987 = vmatmul.mubr.bf16.gmra.mrb[0].mxu0 %v3925
      %v3988 = vpop.f32.mrb[0].mxu0
      %v3989 = vadd.f32 0.0, %v3988
      %v3990 = vpop.f32.mrb[0].mxu0
      %v3991 = vpop.f32.mrb[0].mxu0
      %v3992 = vadd.f32 0.0, %v3991
      %v3993 = vpop.f32.mrb[0].mxu0
      %3994 = vdwg.mxu0
      %v3995 = vunpack.c.l.b16 %v3663
      %v3996 = vunpack.c.l.b16 %v3677
      %v3997 = vunpack.c.l.b16 %v3691
      %v3998 = vunpack.c.l.b16 %v3705
      %v3999 = vunpack.c.l.b16 %v3719
      %v4000 = vunpack.c.l.b16 %v3733
      %v4001 = vunpack.c.l.b16 %v3747
      %v4002 = vunpack.c.l.b16 %v3761
      %v4003 = vpack.c.b16 %v3996, %v3995
      %v4004 = vpack.c.b16 %v3998, %v3997
      %v4005 = vpack.c.b16 %v4000, %v3999
      %v4006 = vpack.c.b16 %v4002, %v4001
      %v4009 = vunpack.c.l.b16 %v3899
      %v4010 = vunpack.c.l.b16 %v3900
      %v4011 = vpack.c.b16 %v4010, %v4009
      %v4014 = vsel %vm573, %v4003, 0
      %v4017 = vsel %vm573, %v4004, 0
      %v4020 = vsel %vm573, %v4005, 0
      %v4023 = vsel %vm573, %v4006, 0
      %4025 = vmatprep.subr.bf16.mxu0 0
      %4026 = vmatpush1.bf16.msra.mxu0 %v4011
      %4027 = vmatprep.subr.bf16.mxu0 0
      %4028 = vmatpush1.bf16.msra.mxu0 0
      %4029 = vmatprep.subr.bf16.mxu0 0
      %4030 = vmatpush1.bf16.msra.mxu0 0
      %4031 = vmatprep.subr.bf16.mxu0 0
      %4032 = vmatpush1.bf16.msra.mxu0 0
      %4033 = vmatprep.subr.bf16.mxu0 0
      %4034 = vmatpush1.bf16.msra.mxu0 0
      %4035 = vmatprep.subr.bf16.mxu0 0
      %4036 = vmatpush1.bf16.msra.mxu0 0
      %4037 = vmatprep.subr.bf16.mxu0 0
      %4038 = vmatpush1.bf16.msra.mxu0 0
      %4039 = vmatprep.subr.bf16.mxu0 0
      %4040 = vmatpush1.bf16.msra.mxu0 0
      %4041 = vmatprep.subr.bf16.mxu0 0
      %4042 = vmatpush1.bf16.msra.mxu0 0
      %4043 = vmatprep.subr.bf16.mxu0 0
      %4044 = vmatpush1.bf16.msra.mxu0 0
      %4045 = vmatprep.subr.bf16.mxu0 0
      %4046 = vmatpush1.bf16.msra.mxu0 0
      %4047 = vmatprep.subr.bf16.mxu0 0
      %4048 = vmatpush1.bf16.msra.mxu0 0
      %4049 = vmatprep.subr.bf16.mxu0 0
      %4050 = vmatpush1.bf16.msra.mxu0 0
      %4051 = vmatprep.subr.bf16.mxu0 0
      %4052 = vmatpush1.bf16.msra.mxu0 0
      %4053 = vmatprep.subr.bf16.mxu0 0
      %4054 = vmatpush1.bf16.msra.mxu0 0
      %4055 = vmatprep.subr.bf16.mxu0 0
      %4056 = vmatpush1.bf16.msra.mxu0 0
      %4057 = vmatprep.mubr.bf16.mxu0 0
      %4058 = vmatmul.mubr.bf16.gmra.mrb[0].mxu0 %v4014
      %v4059 = vpop.f32.mrb[0].mxu0
      %v4060 = vadd.f32 %v3965, %v4059
      %v4061 = vpop.f32.mrb[0].mxu0
      %v4062 = vpop.f32.mrb[0].mxu0
      %v4063 = vadd.f32 %v3968, %v4062
      %v4064 = vpop.f32.mrb[0].mxu0
      %4065 = vmatprep.mubr.bf16.mxu0 0
      %4066 = vmatmul.mubr.bf16.gmra.mrb[0].mxu0 %v4017
      %v4067 = vpop.f32.mrb[0].mxu0
      %v4068 = vadd.f32 %v3973, %v4067
      %v4069 = vpop.f32.mrb[0].mxu0
      %v4070 = vpop.f32.mrb[0].mxu0
      %v4071 = vadd.f32 %v3976, %v4070
      %v4072 = vpop.f32.mrb[0].mxu0
      %4073 = vmatprep.mubr.bf16.mxu0 0
      %4074 = vmatmul.mubr.bf16.gmra.mrb[0].mxu0 %v4020
      %v4075 = vpop.f32.mrb[0].mxu0
      %v4076 = vadd.f32 %v3981, %v4075
      %v4077 = vpop.f32.mrb[0].mxu0
      %v4078 = vpop.f32.mrb[0].mxu0
      %v4079 = vadd.f32 %v3984, %v4078
      %v4080 = vpop.f32.mrb[0].mxu0
      %4081 = vmatprep.mubr.bf16.mxu0 0
      %4082 = vmatmul.mubr.bf16.gmra.mrb[0].mxu0 %v4023
      %v4083 = vpop.f32.mrb[0].mxu0
      %v4084 = vadd.f32 %v3989, %v4083
      %v4085 = vpop.f32.mrb[0].mxu0
      %v4086 = vpop.f32.mrb[0].mxu0
      %v4087 = vadd.f32 %v3992, %v4086
      %v4088 = vpop.f32.mrb[0].mxu0
      %4089 = vdwg.mxu0
      %v4090 = vadd.f32 %v3890, %v4060
      %v4091 = vadd.f32 %v3891, %v4063
      %v4092 = vadd.f32 %v3892, %v4068
      %v4093 = vadd.f32 %v3893, %v4071
      %v4094 = vadd.f32 %v3894, %v4076
      %v4095 = vadd.f32 %v3895, %v4079
      %v4096 = vadd.f32 %v3896, %v4084
      %v4097 = vadd.f32 %v3897, %v4087
      %4098 = vst.msk [vmem:[#allocation5] sm:$0xff] %vm1243, %v4090
      %4099 = vst.msk [vmem:[#allocation5 + $0x8] sm:$0xff] %vm1243, %v4091
      %4100 = vst.msk [vmem:[#allocation5 + $0x10] sm:$0xff] %vm1243, %v4092
      %4101 = vst.msk [vmem:[#allocation5 + $0x18] sm:$0xff] %vm1243, %v4093
      %4102 = vst.msk [vmem:[#allocation5 + $0x20] sm:$0xff] %vm1243, %v4094
      %4103 = vst.msk [vmem:[#allocation5 + $0x28] sm:$0xff] %vm1243, %v4095
      %4104 = vst.msk [vmem:[#allocation5 + $0x30] sm:$0xff] %vm1243, %v4096
      %4105 = vst.msk [vmem:[#allocation5 + $0x38] sm:$0xff] %vm1243, %v4097
      %v4106 = vld [vmem:[%s3384] sm:$0xe]
      %v4107 = vld [vmem:[%s3384 + $0x4] sm:$0x1]
      %v4108 = vld [vmem:[%s3384 + $0x8] sm:$0xe]
      %v4109 = vld [vmem:[%s3384 + $0xc] sm:$0x1]
      %v4110 = vld [vmem:[%s3384 + $0x10] sm:$0xe]
      %v4111 = vld [vmem:[%s3384 + $0x14] sm:$0x1]
      %v4112 = vld [vmem:[%s3384 + $0x18] sm:$0xe]
      %v4113 = vld [vmem:[%s3384 + $0x1c] sm:$0x1]
      %v4114 = vld [vmem:[%s3384 + $0x20] sm:$0xe]
      %v4115 = vld [vmem:[%s3384 + $0x24] sm:$0x1]
      %v4116 = vld [vmem:[%s3384 + $0x28] sm:$0xe]
      %v4117 = vld [vmem:[%s3384 + $0x2c] sm:$0x1]
      %v4118 = vld [vmem:[%s3384 + $0x30] sm:$0xe]
      %v4119 = vld [vmem:[%s3384 + $0x34] sm:$0x1]
      %v4120 = vld [vmem:[%s3384 + $0x38] sm:$0xe]
      %v4121 = vld [vmem:[%s3384 + $0x3c] sm:$0x1]
      %v4138 = vrot.slane %v4106, 5
      %v4139 = vrot.slane %v4138, 4
      %v4140 = vrot.slane %v4107, 5
      %v4141 = vsel %vm2007, %v4139, %v4140
      %v4142 = vrot.slane %v4108, 5
      %v4143 = vrot.slane %v4142, 4
      %v4144 = vrot.slane %v4109, 5
      %v4145 = vsel %vm2007, %v4143, %v4144
      %v4146 = vrot.slane %v4110, 5
      %v4147 = vrot.slane %v4146, 4
      %v4148 = vrot.slane %v4111, 5
      %v4149 = vsel %vm2007, %v4147, %v4148
      %v4150 = vrot.slane %v4112, 5
      %v4151 = vrot.slane %v4150, 4
      %v4152 = vrot.slane %v4113, 5
      %v4153 = vsel %vm2007, %v4151, %v4152
      %v4154 = vrot.slane %v4114, 5
      %v4155 = vrot.slane %v4154, 4
      %v4156 = vrot.slane %v4115, 5
      %v4157 = vsel %vm2007, %v4155, %v4156
      %v4158 = vrot.slane %v4116, 5
      %v4159 = vrot.slane %v4158, 4
      %v4160 = vrot.slane %v4117, 5
      %v4161 = vsel %vm2007, %v4159, %v4160
      %v4162 = vrot.slane %v4118, 5
      %v4163 = vrot.slane %v4162, 4
      %v4164 = vrot.slane %v4119, 5
      %v4165 = vsel %vm2007, %v4163, %v4164
      %v4166 = vrot.slane %v4120, 5
      %v4167 = vrot.slane %v4166, 4
      %v4168 = vrot.slane %v4121, 5
      %v4169 = vsel %vm2007, %v4167, %v4168
      %v4170 = vld [vmem:[%s3393] sm:$0xe]
      %v4171 = vld [vmem:[%s3393 + $0x4] sm:$0x1]
      %v4172 = vld [vmem:[%s3393 + $0x8] sm:$0xe]
      %v4173 = vld [vmem:[%s3393 + $0xc] sm:$0x1]
      %v4174 = vld [vmem:[%s3393 + $0x10] sm:$0xe]
      %v4175 = vld [vmem:[%s3393 + $0x14] sm:$0x1]
      %v4176 = vld [vmem:[%s3393 + $0x18] sm:$0xe]
      %v4177 = vld [vmem:[%s3393 + $0x1c] sm:$0x1]
      %v4178 = vld [vmem:[%s3393 + $0x20] sm:$0xe]
      %v4179 = vld [vmem:[%s3393 + $0x24] sm:$0x1]
      %v4180 = vld [vmem:[%s3393 + $0x28] sm:$0xe]
      %v4181 = vld [vmem:[%s3393 + $0x2c] sm:$0x1]
      %v4182 = vld [vmem:[%s3393 + $0x30] sm:$0xe]
      %v4183 = vld [vmem:[%s3393 + $0x34] sm:$0x1]
      %v4184 = vld [vmem:[%s3393 + $0x38] sm:$0xe]
      %v4185 = vld [vmem:[%s3393 + $0x3c] sm:$0x1]
      %v4202 = vrot.slane %v4170, 5
      %v4203 = vrot.slane %v4202, 4
      %v4204 = vrot.slane %v4171, 5
      %v4205 = vsel %vm2007, %v4203, %v4204
      %v4206 = vrot.slane %v4172, 5
      %v4207 = vrot.slane %v4206, 4
      %v4208 = vrot.slane %v4173, 5
      %v4209 = vsel %vm2007, %v4207, %v4208
      %v4210 = vrot.slane %v4174, 5
      %v4211 = vrot.slane %v4210, 4
      %v4212 = vrot.slane %v4175, 5
      %v4213 = vsel %vm2007, %v4211, %v4212
      %v4214 = vrot.slane %v4176, 5
      %v4215 = vrot.slane %v4214, 4
      %v4216 = vrot.slane %v4177, 5
      %v4217 = vsel %vm2007, %v4215, %v4216
      %v4218 = vrot.slane %v4178, 5
      %v4219 = vrot.slane %v4218, 4
      %v4220 = vrot.slane %v4179, 5
      %v4221 = vsel %vm2007, %v4219, %v4220
      %v4222 = vrot.slane %v4180, 5
      %v4223 = vrot.slane %v4222, 4
      %v4224 = vrot.slane %v4181, 5
      %v4225 = vsel %vm2007, %v4223, %v4224
      %v4226 = vrot.slane %v4182, 5
      %v4227 = vrot.slane %v4226, 4
      %v4228 = vrot.slane %v4183, 5
      %v4229 = vsel %vm2007, %v4227, %v4228
      %v4230 = vrot.slane %v4184, 5
      %v4231 = vrot.slane %v4230, 4
      %v4232 = vrot.slane %v4185, 5
      %v4233 = vsel %vm2007, %v4231, %v4232
      %v4234 = vld [vmem:[#allocation5] sm:$0xff]
      %v4235 = vld [vmem:[#allocation5 + $0x8] sm:$0xff]
      %v4236 = vld [vmem:[#allocation5 + $0x10] sm:$0xff]
      %v4237 = vld [vmem:[#allocation5 + $0x18] sm:$0xff]
      %v4238 = vld [vmem:[#allocation5 + $0x20] sm:$0xff]
      %v4239 = vld [vmem:[#allocation5 + $0x28] sm:$0xff]
      %v4240 = vld [vmem:[#allocation5 + $0x30] sm:$0xff]
      %v4241 = vld [vmem:[#allocation5 + $0x38] sm:$0xff]
      %s4242 = scalar_lea.vmem %s8, 64
      %v4243 = vld [vmem:[%s4242] sm:$0xf]
      %v4244 = vld [vmem:[%s4242 + $0x4] sm:$0xf]
      %s4245 = scalar_lea.vmem %s9, 32
      %v4246 = vld [vmem:[%s4245] sm:$0xf]
      %v4247 = vunpack.c.l.b16 %v4205
      %v4248 = vunpack.c.l.b16 %v4209
      %v4249 = vunpack.c.l.b16 %v4213
      %v4250 = vunpack.c.l.b16 %v4217
      %v4251 = vunpack.c.l.b16 %v4221
      %v4252 = vunpack.c.l.b16 %v4225
      %v4253 = vunpack.c.l.b16 %v4229
      %v4254 = vunpack.c.l.b16 %v4233
      %v4255 = vpack.c.b16 %v4248, %v4247
      %v4256 = vpack.c.b16 %v4250, %v4249
      %v4257 = vpack.c.b16 %v4252, %v4251
      %v4258 = vpack.c.b16 %v4254, %v4253
      %v4260 = vsel %vm491, %v4255, 0
      %v4263 = vsel %vm491, %v4256, 0
      %v4266 = vsel %vm491, %v4257, 0
      %v4269 = vsel %vm491, %v4258, 0
      %v4272 = vsel %vm504, %v4246, 0
      %4274 = vmatprep.subr.bf16.mxu0 0
      %4275 = vmatpush1.bf16.msra.mxu0 %v4272
      %4276 = vmatprep.subr.bf16.mxu0 0
      %4277 = vmatpush1.bf16.msra.mxu0 0
      %4278 = vmatprep.subr.bf16.mxu0 0
      %4279 = vmatpush1.bf16.msra.mxu0 0
      %4280 = vmatprep.subr.bf16.mxu0 0
      %4281 = vmatpush1.bf16.msra.mxu0 0
      %4282 = vmatprep.subr.bf16.mxu0 0
      %4283 = vmatpush1.bf16.msra.mxu0 0
      %4284 = vmatprep.subr.bf16.mxu0 0
      %4285 = vmatpush1.bf16.msra.mxu0 0
      %4286 = vmatprep.subr.bf16.mxu0 0
      %4287 = vmatpush1.bf16.msra.mxu0 0
      %4288 = vmatprep.subr.bf16.mxu0 0
      %4289 = vmatpush1.bf16.msra.mxu0 0
      %4290 = vmatprep.subr.bf16.mxu0 0
      %4291 = vmatpush1.bf16.msra.mxu0 0
      %4292 = vmatprep.subr.bf16.mxu0 0
      %4293 = vmatpush1.bf16.msra.mxu0 0
      %4294 = vmatprep.subr.bf16.mxu0 0
      %4295 = vmatpush1.bf16.msra.mxu0 0
      %4296 = vmatprep.subr.bf16.mxu0 0
      %4297 = vmatpush1.bf16.msra.mxu0 0
      %4298 = vmatprep.subr.bf16.mxu0 0
      %4299 = vmatpush1.bf16.msra.mxu0 0
      %4300 = vmatprep.subr.bf16.mxu0 0
      %4301 = vmatpush1.bf16.msra.mxu0 0
      %4302 = vmatprep.subr.bf16.mxu0 0
      %4303 = vmatpush1.bf16.msra.mxu0 0
      %4304 = vmatprep.subr.bf16.mxu0 0
      %4305 = vmatpush1.bf16.msra.mxu0 0
      %4306 = vmatprep.mubr.bf16.mxu0 0
      %4307 = vmatmul.mubr.bf16.gmra.mrb[0].mxu0 %v4260
      %v4308 = vpop.f32.mrb[0].mxu0
      %v4309 = vadd.f32 0.0, %v4308
      %v4310 = vpop.f32.mrb[0].mxu0
      %v4311 = vpop.f32.mrb[0].mxu0
      %v4312 = vadd.f32 0.0, %v4311
      %v4313 = vpop.f32.mrb[0].mxu0
      %4314 = vmatprep.mubr.bf16.mxu0 0
      %4315 = vmatmul.mubr.bf16.gmra.mrb[0].mxu0 %v4263
      %v4316 = vpop.f32.mrb[0].mxu0
      %v4317 = vadd.f32 0.0, %v4316
      %v4318 = vpop.f32.mrb[0].mxu0
      %v4319 = vpop.f32.mrb[0].mxu0
      %v4320 = vadd.f32 0.0, %v4319
      %v4321 = vpop.f32.mrb[0].mxu0
      %4322 = vmatprep.mubr.bf16.mxu0 0
      %4323 = vmatmul.mubr.bf16.gmra.mrb[0].mxu0 %v4266
      %v4324 = vpop.f32.mrb[0].mxu0
      %v4325 = vadd.f32 0.0, %v4324
      %v4326 = vpop.f32.mrb[0].mxu0
      %v4327 = vpop.f32.mrb[0].mxu0
      %v4328 = vadd.f32 0.0, %v4327
      %v4329 = vpop.f32.mrb[0].mxu0
      %4330 = vmatprep.mubr.bf16.mxu0 0
      %4331 = vmatmul.mubr.bf16.gmra.mrb[0].mxu0 %v4269
      %v4332 = vpop.f32.mrb[0].mxu0
      %v4333 = vadd.f32 0.0, %v4332
      %v4334 = vpop.f32.mrb[0].mxu0
      %v4335 = vpop.f32.mrb[0].mxu0
      %v4336 = vadd.f32 0.0, %v4335
      %v4337 = vpop.f32.mrb[0].mxu0
      %4338 = vdwg.mxu0
      %v4339 = vunpack.c.l.b16 %v4141
      %v4340 = vunpack.c.l.b16 %v4145
      %v4341 = vunpack.c.l.b16 %v4149
      %v4342 = vunpack.c.l.b16 %v4153
      %v4343 = vunpack.c.l.b16 %v4157
      %v4344 = vunpack.c.l.b16 %v4161
      %v4345 = vunpack.c.l.b16 %v4165
      %v4346 = vunpack.c.l.b16 %v4169
      %v4347 = vpack.c.b16 %v4340, %v4339
      %v4348 = vpack.c.b16 %v4342, %v4341
      %v4349 = vpack.c.b16 %v4344, %v4343
      %v4350 = vpack.c.b16 %v4346, %v4345
      %v4353 = vunpack.c.l.b16 %v4243
      %v4354 = vunpack.c.l.b16 %v4244
      %v4355 = vpack.c.b16 %v4354, %v4353
      %v4358 = vsel %vm573, %v4347, 0
      %v4361 = vsel %vm573, %v4348, 0
      %v4364 = vsel %vm573, %v4349, 0
      %v4367 = vsel %vm573, %v4350, 0
      %4369 = vmatprep.subr.bf16.mxu0 0
      %4370 = vmatpush1.bf16.msra.mxu0 %v4355
      %4371 = vmatprep.subr.bf16.mxu0 0
      %4372 = vmatpush1.bf16.msra.mxu0 0
      %4373 = vmatprep.subr.bf16.mxu0 0
      %4374 = vmatpush1.bf16.msra.mxu0 0
      %4375 = vmatprep.subr.bf16.mxu0 0
      %4376 = vmatpush1.bf16.msra.mxu0 0
      %4377 = vmatprep.subr.bf16.mxu0 0
      %4378 = vmatpush1.bf16.msra.mxu0 0
      %4379 = vmatprep.subr.bf16.mxu0 0
      %4380 = vmatpush1.bf16.msra.mxu0 0
      %4381 = vmatprep.subr.bf16.mxu0 0
      %4382 = vmatpush1.bf16.msra.mxu0 0
      %4383 = vmatprep.subr.bf16.mxu0 0
      %4384 = vmatpush1.bf16.msra.mxu0 0
      %4385 = vmatprep.subr.bf16.mxu0 0
      %4386 = vmatpush1.bf16.msra.mxu0 0
      %4387 = vmatprep.subr.bf16.mxu0 0
      %4388 = vmatpush1.bf16.msra.mxu0 0
      %4389 = vmatprep.subr.bf16.mxu0 0
      %4390 = vmatpush1.bf16.msra.mxu0 0
      %4391 = vmatprep.subr.bf16.mxu0 0
      %4392 = vmatpush1.bf16.msra.mxu0 0
      %4393 = vmatprep.subr.bf16.mxu0 0
      %4394 = vmatpush1.bf16.msra.mxu0 0
      %4395 = vmatprep.subr.bf16.mxu0 0
      %4396 = vmatpush1.bf16.msra.mxu0 0
      %4397 = vmatprep.subr.bf16.mxu0 0
      %4398 = vmatpush1.bf16.msra.mxu0 0
      %4399 = vmatprep.subr.bf16.mxu0 0
      %4400 = vmatpush1.bf16.msra.mxu0 0
      %4401 = vmatprep.mubr.bf16.mxu0 0
      %4402 = vmatmul.mubr.bf16.gmra.mrb[0].mxu0 %v4358
      %v4403 = vpop.f32.mrb[0].mxu0
      %v4404 = vadd.f32 %v4309, %v4403
      %v4405 = vpop.f32.mrb[0].mxu0
      %v4406 = vpop.f32.mrb[0].mxu0
      %v4407 = vadd.f32 %v4312, %v4406
      %v4408 = vpop.f32.mrb[0].mxu0
      %4409 = vmatprep.mubr.bf16.mxu0 0
      %4410 = vmatmul.mubr.bf16.gmra.mrb[0].mxu0 %v4361
      %v4411 = vpop.f32.mrb[0].mxu0
      %v4412 = vadd.f32 %v4317, %v4411
      %v4413 = vpop.f32.mrb[0].mxu0
      %v4414 = vpop.f32.mrb[0].mxu0
      %v4415 = vadd.f32 %v4320, %v4414
      %v4416 = vpop.f32.mrb[0].mxu0
      %4417 = vmatprep.mubr.bf16.mxu0 0
      %4418 = vmatmul.mubr.bf16.gmra.mrb[0].mxu0 %v4364
      %v4419 = vpop.f32.mrb[0].mxu0
      %v4420 = vadd.f32 %v4325, %v4419
      %v4421 = vpop.f32.mrb[0].mxu0
      %v4422 = vpop.f32.mrb[0].mxu0
      %v4423 = vadd.f32 %v4328, %v4422
      %v4424 = vpop.f32.mrb[0].mxu0
      %4425 = vmatprep.mubr.bf16.mxu0 0
      %4426 = vmatmul.mubr.bf16.gmra.mrb[0].mxu0 %v4367
      %v4427 = vpop.f32.mrb[0].mxu0
      %v4428 = vadd.f32 %v4333, %v4427
      %v4429 = vpop.f32.mrb[0].mxu0
      %v4430 = vpop.f32.mrb[0].mxu0
      %v4431 = vadd.f32 %v4336, %v4430
      %v4432 = vpop.f32.mrb[0].mxu0
      %4433 = vdwg.mxu0
      %v4434 = vadd.f32 %v4234, %v4404
      %v4435 = vadd.f32 %v4235, %v4407
      %v4436 = vadd.f32 %v4236, %v4412
      %v4437 = vadd.f32 %v4237, %v4415
      %v4438 = vadd.f32 %v4238, %v4420
      %v4439 = vadd.f32 %v4239, %v4423
      %v4440 = vadd.f32 %v4240, %v4428
      %v4441 = vadd.f32 %v4241, %v4431
      %4442 = vst.msk [vmem:[#allocation5] sm:$0xff] %vm1243, %v4434
      %4443 = vst.msk [vmem:[#allocation5 + $0x8] sm:$0xff] %vm1243, %v4435
      %4444 = vst.msk [vmem:[#allocation5 + $0x10] sm:$0xff] %vm1243, %v4436
      %4445 = vst.msk [vmem:[#allocation5 + $0x18] sm:$0xff] %vm1243, %v4437
      %4446 = vst.msk [vmem:[#allocation5 + $0x20] sm:$0xff] %vm1243, %v4438
      %4447 = vst.msk [vmem:[#allocation5 + $0x28] sm:$0xff] %vm1243, %v4439
      %4448 = vst.msk [vmem:[#allocation5 + $0x30] sm:$0xff] %vm1243, %v4440
      %4449 = vst.msk [vmem:[#allocation5 + $0x38] sm:$0xff] %vm1243, %v4441
      %v4450 = vld [vmem:[#allocation5] sm:$0xff]
      %v4451 = vld [vmem:[#allocation5 + $0x8] sm:$0xff]
      %v4452 = vld [vmem:[#allocation5 + $0x10] sm:$0xff]
      %v4453 = vld [vmem:[#allocation5 + $0x18] sm:$0xff]
      %v4454 = vld [vmem:[#allocation5 + $0x20] sm:$0xff]
      %v4455 = vld [vmem:[#allocation5 + $0x28] sm:$0xff]
      %v4456 = vld [vmem:[#allocation5 + $0x30] sm:$0xff]
      %v4457 = vld [vmem:[#allocation5 + $0x38] sm:$0xff]
      %v4458 = vld [vmem:[%s10] sm:$0x1]
      %v4460 = vlaneseq
      %v4461 = vshrl.u32 %v4460, 7
      %v4462 = vsub.s32 0, %v4461
      %v4463 = vrot.slane %v4458, %v4462
      %v4465 = vadd.f32 %v4450, %v4463
      %v4466 = vadd.f32 %v4451, %v4463
      %v4467 = vadd.f32 %v4452, %v4463
      %v4468 = vadd.f32 %v4453, %v4463
      %v4469 = vadd.f32 %v4454, %v4463
      %v4470 = vadd.f32 %v4455, %v4463
      %v4471 = vadd.f32 %v4456, %v4463
      %v4472 = vadd.f32 %v4457, %v4463
      %v4473 = vmul.f32 %v4465, 0.5
      %v4474 = vmul.f32 %v4466, 0.5
      %v4475 = vmul.f32 %v4467, 0.5
      %v4476 = vmul.f32 %v4468, 0.5
      %v4477 = vmul.f32 %v4469, 0.5
      %v4478 = vmul.f32 %v4470, 0.5
      %v4479 = vmul.f32 %v4471, 0.5
      %v4480 = vmul.f32 %v4472, 0.5
      %v4481 = vtanh.pop %v4473
      %v4482 = vtanh.pop %v4474
      %v4483 = vtanh.pop %v4475
      %v4484 = vtanh.pop %v4476
      %v4485 = vtanh.pop %v4477
      %v4486 = vtanh.pop %v4478
      %v4487 = vtanh.pop %v4479
      %v4488 = vtanh.pop %v4480
      %v4489 = vadd.f32 %v4481, 1.0
      %v4490 = vadd.f32 %v4482, 1.0
      %v4491 = vadd.f32 %v4483, 1.0
      %v4492 = vadd.f32 %v4484, 1.0
      %v4493 = vadd.f32 %v4485, 1.0
      %v4494 = vadd.f32 %v4486, 1.0
      %v4495 = vadd.f32 %v4487, 1.0
      %v4496 = vadd.f32 %v4488, 1.0
      %v4497 = vmul.f32 %v4489, 0.5
      %v4498 = vmul.f32 %v4490, 0.5
      %v4499 = vmul.f32 %v4491, 0.5
      %v4500 = vmul.f32 %v4492, 0.5
      %v4501 = vmul.f32 %v4493, 0.5
      %v4502 = vmul.f32 %v4494, 0.5
      %v4503 = vmul.f32 %v4495, 0.5
      %v4504 = vmul.f32 %v4496, 0.5
      %v4505 = vtanh.pop %v4465
      %v4506 = vtanh.pop %v4466
      %v4507 = vtanh.pop %v4467
      %v4508 = vtanh.pop %v4468
      %v4509 = vtanh.pop %v4469
      %v4510 = vtanh.pop %v4470
      %v4511 = vtanh.pop %v4471
      %v4512 = vtanh.pop %v4472
      %v4513 = vld [vmem:[%s440] sm:$0xff]
      %v4514 = vld [vmem:[%s440 + $0x8] sm:$0xff]
      %v4515 = vld [vmem:[%s440 + $0x10] sm:$0xff]
      %v4516 = vld [vmem:[%s440 + $0x18] sm:$0xff]
      %v4517 = vld [vmem:[%s440 + $0x20] sm:$0xff]
      %v4518 = vld [vmem:[%s440 + $0x28] sm:$0xff]
      %v4519 = vld [vmem:[%s440 + $0x30] sm:$0xff]
      %v4520 = vld [vmem:[%s440 + $0x38] sm:$0xff]
      %v4521 = vmul.f32 %v4497, %v4513
      %v4522 = vmul.f32 %v4498, %v4514
      %v4523 = vmul.f32 %v4499, %v4515
      %v4524 = vmul.f32 %v4500, %v4516
      %v4525 = vmul.f32 %v4501, %v4517
      %v4526 = vmul.f32 %v4502, %v4518
      %v4527 = vmul.f32 %v4503, %v4519
      %v4528 = vmul.f32 %v4504, %v4520
      %v4529 = vsub.f32 1.0, %v4497
      %v4530 = vsub.f32 1.0, %v4498
      %v4531 = vsub.f32 1.0, %v4499
      %v4532 = vsub.f32 1.0, %v4500
      %v4533 = vsub.f32 1.0, %v4501
      %v4534 = vsub.f32 1.0, %v4502
      %v4535 = vsub.f32 1.0, %v4503
      %v4536 = vsub.f32 1.0, %v4504
      %4545 = vrot.lane.b32.xlu0 %v4529, 120
      %v4546 = vpop.permute.xlu0 %4545
      %4547 = vrot.lane.b32.xlu0 %v4530, 120
      %v4548 = vpop.permute.xlu0 %4547
      %4549 = vrot.lane.b32.xlu0 %v4531, 120
      %v4550 = vpop.permute.xlu0 %4549
      %4551 = vrot.lane.b32.xlu0 %v4532, 120
      %v4552 = vpop.permute.xlu0 %4551
      %4553 = vrot.lane.b32.xlu0 %v4533, 120
      %v4554 = vpop.permute.xlu0 %4553
      %4555 = vrot.lane.b32.xlu0 %v4534, 120
      %v4556 = vpop.permute.xlu0 %4555
      %4557 = vrot.lane.b32.xlu0 %v4535, 120
      %v4558 = vpop.permute.xlu0 %4557
      %4559 = vrot.lane.b32.xlu0 %v4536, 120
      %v4560 = vpop.permute.xlu0 %4559
      %v4569 = vmul.f32 %v4521, %v4546
      %v4570 = vmul.f32 %v4522, %v4548
      %v4571 = vmul.f32 %v4523, %v4550
      %v4572 = vmul.f32 %v4524, %v4552
      %v4573 = vmul.f32 %v4525, %v4554
      %v4574 = vmul.f32 %v4526, %v4556
      %v4575 = vmul.f32 %v4527, %v4558
      %v4576 = vmul.f32 %v4528, %v4560
      %4585 = vrot.lane.b32.xlu0 %v4505, 120
      %v4586 = vpop.permute.xlu0 %4585
      %4587 = vrot.lane.b32.xlu0 %v4506, 120
      %v4588 = vpop.permute.xlu0 %4587
      %4589 = vrot.lane.b32.xlu0 %v4507, 120
      %v4590 = vpop.permute.xlu0 %4589
      %4591 = vrot.lane.b32.xlu0 %v4508, 120
      %v4592 = vpop.permute.xlu0 %4591
      %4593 = vrot.lane.b32.xlu0 %v4509, 120
      %v4594 = vpop.permute.xlu0 %4593
      %4595 = vrot.lane.b32.xlu0 %v4510, 120
      %v4596 = vpop.permute.xlu0 %4595
      %4597 = vrot.lane.b32.xlu0 %v4511, 120
      %v4598 = vpop.permute.xlu0 %4597
      %4599 = vrot.lane.b32.xlu0 %v4512, 120
      %v4600 = vpop.permute.xlu0 %4599
      %v4609 = vmul.f32 %v4497, %v4586
      %v4610 = vmul.f32 %v4498, %v4588
      %v4611 = vmul.f32 %v4499, %v4590
      %v4612 = vmul.f32 %v4500, %v4592
      %v4613 = vmul.f32 %v4501, %v4594
      %v4614 = vmul.f32 %v4502, %v4596
      %v4615 = vmul.f32 %v4503, %v4598
      %v4616 = vmul.f32 %v4504, %v4600
      %4625 = vrot.lane.b32.xlu0 %v4609, 120
      %v4626 = vpop.permute.xlu0 %4625
      %4627 = vrot.lane.b32.xlu0 %v4610, 120
      %v4628 = vpop.permute.xlu0 %4627
      %4629 = vrot.lane.b32.xlu0 %v4611, 120
      %v4630 = vpop.permute.xlu0 %4629
      %4631 = vrot.lane.b32.xlu0 %v4612, 120
      %v4632 = vpop.permute.xlu0 %4631
      %4633 = vrot.lane.b32.xlu0 %v4613, 120
      %v4634 = vpop.permute.xlu0 %4633
      %4635 = vrot.lane.b32.xlu0 %v4614, 120
      %v4636 = vpop.permute.xlu0 %4635
      %4637 = vrot.lane.b32.xlu0 %v4615, 120
      %v4638 = vpop.permute.xlu0 %4637
      %4639 = vrot.lane.b32.xlu0 %v4616, 120
      %v4640 = vpop.permute.xlu0 %4639
      %v4649 = vadd.f32 %v4569, %v4626
      %v4650 = vadd.f32 %v4570, %v4628
      %v4651 = vadd.f32 %v4571, %v4630
      %v4652 = vadd.f32 %v4572, %v4632
      %v4653 = vadd.f32 %v4573, %v4634
      %v4654 = vadd.f32 %v4574, %v4636
      %v4655 = vadd.f32 %v4575, %v4638
      %v4656 = vadd.f32 %v4576, %v4640
      %4657 = vxpose.xlu0.b32.start [1/16] %v4649, 128
      %4658 = vxpose.xlu0.b32.cont [2/16] %v4650, 128
      %4659 = vxpose.xlu0.b32.cont [3/16] %v4651, 128
      %4660 = vxpose.xlu0.b32.cont [4/16] %v4652, 128
      %4661 = vxpose.xlu0.b32.cont [5/16] %v4653, 128
      %4662 = vxpose.xlu0.b32.cont [6/16] %v4654, 128
      %4663 = vxpose.xlu0.b32.cont [7/16] %v4655, 128
      %4664 = vxpose.xlu0.b32.cont [8/16] %v4656, 128
      %4665 = vxpose.xlu0.b32.cont [9/16] 0.0, 128
      %4666 = vxpose.xlu0.b32.cont [10/16] 0.0, 128
      %4667 = vxpose.xlu0.b32.cont [11/16] 0.0, 128
      %4668 = vxpose.xlu0.b32.cont [12/16] 0.0, 128
      %4669 = vxpose.xlu0.b32.cont [13/16] 0.0, 128
      %4670 = vxpose.xlu0.b32.cont [14/16] 0.0, 128
      %4671 = vxpose.xlu0.b32.cont [15/16] 0.0, 128
      %4672 = vxpose.xlu0.b32.end [16/16] 0.0, 128
      %v4673 = vpop.trf.xlu0
      %v4674 = vpop.trf.xlu0
      %v4675 = vpop.trf.xlu0
      %v4676 = vpop.trf.xlu0
      %v4677 = vpop.trf.xlu0
      %v4678 = vpop.trf.xlu0
      %v4679 = vpop.trf.xlu0
      %v4680 = vpop.trf.xlu0
      %v4681 = vpop.trf.xlu0
      %v4682 = vpop.trf.xlu0
      %v4683 = vpop.trf.xlu0
      %v4684 = vpop.trf.xlu0
      %v4685 = vpop.trf.xlu0
      %v4686 = vpop.trf.xlu0
      %v4687 = vpop.trf.xlu0
      %v4688 = vpop.trf.xlu0
      %vm4689 = vcmask 523264
      %4690 = vst.msk [vmem:[%s444] sm:$0xff] %vm4689, %v4673
      %p4691 = scmp.lt.s32.totalorder %s22, 3
      %s4692 = scalar_select %p4691, %s22, 3
      %s4693 = smul.addr %s4692, 8
      %s4694 = scalar_lea.vmem %s11, %s4693
      // Predicated region
      $region65: #{_lambda_.1} parent=63 // pred_check
        %p4695 = pneg %p291
      $region66: #{_lambda_.1} parent=63 // pred_check_branch
        %4697 = sbr.rel (%p4695) target = $region68
      $region67: #{_lambda_.1} parent=63 // pred_region
        _
      $region68: #{_lambda_.1} parent=63 // pred_fallthru
        _
    $region64: #{_lambda_.1} parent=5 // pred_fallthru
      _
    %p4698 = scmp.le.s32.totalorder 2, %s17
    // Predicated region
    $region69: #{_lambda_.1} parent=5 // pred_check
      %p4699 = pneg %p4698
    $region70: #{_lambda_.1} parent=5 // pred_check_branch
      %4701 = sbr.rel (%p4699) target = $region72
    $region71: #{_lambda_.1} parent=5 // pred_region
      %s4702 = ssub.s32 %s17, 2
      // Predicated region
      $region73: #{_lambda_.1} parent=71 // pred_check
        %p4703 = pneg %p297
      $region74: #{_lambda_.1} parent=71 // pred_check_branch
        %4705 = sbr.rel (%p4703) target = $region76
      $region75: #{_lambda_.1} parent=71 // pred_region
        %p4706 = scmp.lt.s32.totalorder %s23, 3
        %s4707 = scalar_select %p4706, %s23, 3
        %s4708 = smul.addr %s4707, 8
        %s4709 = scalar_lea.vmem %s11, %s4708
      $region76: #{_lambda_.1} parent=71 // pred_fallthru
        _
    $region72: #{_lambda_.1} parent=5 // pred_fallthru
      _
  $region6: #{_lambda_.1} parent=0 // loop_footer
    %s21 = sadd.s32 1, %s17
  $region7: #{_lambda_.1} parent=0 // loop_footer_branch
    %16 = sbr.rel target = $region3
  $region8: #{_lambda_.1} parent=0 // loop_exit
    _

</llo_original>
